<compile_context>
chip_gen: v7x
topology: tpu7x:2x2x1
jax: 0.10.0
libtpu: 0.0.40
codegen_flags: <defaults>
</compile_context>

<pallas_src>
import functools

import jax
import jax.numpy as jnp
from jax.experimental import pallas as pl
from jax.experimental.pallas import tpu as pltpu


# ------------------------------ Pallas kernel -------------------------------

def _decoder_fused_kernel(x_ref, ut_ref, masks_ref, w1a_ref, s1a_ref, b1a_ref,
                          w2_ref, s2_ref, b2_ref, f1w_ref, f1b_ref,
                          f2w_ref, f2b_ref, wsp_ref, bsp_ref, o_ref, *, wo):
    """One batch element of the Decoder forward; everything lane-dense in VMEM."""
    HW = ut_ref.shape[1]                      # Ho * Wo (on lanes)
    C = w2_ref.shape[0]                       # decoder output channels
    Cm_p = w1a_ref.shape[0] - C               # conv1 channels (padded to 8k)

    # Per-tap zero-padding masks (each (1, HW), lane-dense), loaded once.
    mrows = [masks_ref[t:t + 1, :] for t in range(9)]

    def taps_3x3(a):
        """a: (c, HW) lane-dense -> (9*c, HW) zero-padded 3x3 tap stack."""
        parts = []
        for t in range(9):
            dy, dx = t // 3 - 1, t % 3 - 1
            shift = (-(dy * wo + dx)) % HW
            rolled = a if shift == 0 else pltpu.roll(a, shift, 1)
            parts.append(rolled * mrows[t])
        return jnp.concatenate(parts, axis=0)

    # --- bilinear x2 upsample (align_corners=True): one K=H*W MXU dot.
    xu = jnp.dot(x_ref[0], ut_ref[...],
                 preferred_element_type=jnp.float32)               # (Cin_p, HW)

    # --- conv1 (3x3 ConvBn + ReLU) fused with the reslink 1x1 ConvBn shortcut
    # (shortcut weight lives in the center tap): one K=9*Cin_p MXU dot.
    y1 = jnp.dot(w1a_ref[...], taps_3x3(xu),
                 preferred_element_type=jnp.float32)               # (Cm_p+C, HW)
    y1 = y1 * s1a_ref[...] + b1a_ref[...]                          # folded BN
    h1 = jnp.maximum(y1[:Cm_p, :], 0.0)                            # (Cm_p, HW)
    sc = y1[Cm_p:, :]                                              # (C, HW)

    # --- conv2 (3x3 ConvBn + ReLU): one K=9*Cm_p MXU dot.
    h2 = jnp.dot(w2_ref[...], taps_3x3(h1),
                 preferred_element_type=jnp.float32)               # (C, HW)
    h2 = jnp.maximum(h2 * s2_ref[...] + b2_ref[...], 0.0)

    # --- CBAM channel attention: lane reductions + shared 2-layer MLP.
    avg = jnp.mean(h2, axis=1, keepdims=True)                      # (C, 1)
    mx = jnp.max(h2, axis=1, keepdims=True)                        # (C, 1)
    pooled = jnp.concatenate([avg, mx], axis=1)                    # (C, 2)
    hdn = jnp.maximum(
        jnp.dot(f1w_ref[...], pooled, preferred_element_type=jnp.float32)
        + f1b_ref[...], 0.0)                                       # (hid, 2)
    fco = (jnp.dot(f2w_ref[...], hdn, preferred_element_type=jnp.float32)
           + f2b_ref[...])                                         # (C, 2)
    cgate = jax.nn.sigmoid(fco[:, 0:1] + fco[:, 1:2])              # (C, 1)
    x1 = h2 * cgate                                                # (C, HW)

    # --- CBAM spatial attention: lane-dense (1, HW) mean/max rows, 3x3
    # (2 -> 1 channel) conv as 9 masked roll + scalar-MAC steps (VPU/XLU).
    smean = jnp.mean(x1, axis=0, keepdims=True)                    # (1, HW)
    smax = jnp.max(x1, axis=0, keepdims=True)                      # (1, HW)
    sacc = jnp.zeros((1, HW), jnp.float32)
    for t in range(9):
        dy, dx = t // 3 - 1, t % 3 - 1
        shift = (-(dy * wo + dx)) % HW
        rm = smean if shift == 0 else pltpu.roll(smean, shift, 1)
        rx = smax if shift == 0 else pltpu.roll(smax, shift, 1)
        sacc = sacc + mrows[t] * (wsp_ref[t, 0] * rm + wsp_ref[t, 1] * rx)
    sgate = jax.nn.sigmoid(sacc + bsp_ref[0])                      # (1, HW)

    # --- reslink: relu(cbam_out * spatial_gate + shortcut).  Result is
    # already lane-dense (C, HW) == NCHW after a wrapper reshape: store as-is.
    o_ref[0] = jnp.maximum(x1 * sgate + sc, 0.0).astype(o_ref.dtype)


def _fused_decoder_call(x_flat, ut, masks, w1a, s1a, b1a, w2, s2, b2,
                        f1w, f1b, f2w, f2b, wsp, bsp, *, Wo):
    B, Cin_p, HWin = x_flat.shape
    HW = ut.shape[1]
    CmC = w1a.shape[0]
    C = w2.shape[0]
    K2 = w2.shape[1]
    hid = f1w.shape[0]
    kernel = functools.partial(_decoder_fused_kernel, wo=Wo)
    # NOTE: on single-TC chips (v5e/v6e) the B-step grid could be collapsed to
    # one step; with B=2 the extra step costs ~0.35us while letting a v7x
    # megacore put one batch element on each TensorCore.
    return pl.pallas_call(
        kernel,
        out_shape=jax.ShapeDtypeStruct((B, C, HW), jnp.float32),
        grid=(B,),
        in_specs=[
            pl.BlockSpec((1, Cin_p, HWin), lambda b: (b, 0, 0)),   # x (flat)
            pl.BlockSpec((HWin, HW), lambda b: (0, 0)),            # upsample mat
            pl.BlockSpec((9, HW), lambda b: (0, 0)),               # tap masks
            pl.BlockSpec((CmC, 9 * Cin_p), lambda b: (0, 0)),      # w1 + shortcut
            pl.BlockSpec((CmC, 1), lambda b: (0, 0)),              # bn1/bnsc scale
            pl.BlockSpec((CmC, 1), lambda b: (0, 0)),              # bn1/bnsc bias
            pl.BlockSpec((C, K2), lambda b: (0, 0)),               # w2
            pl.BlockSpec((C, 1), lambda b: (0, 0)),                # bn2 scale
            pl.BlockSpec((C, 1), lambda b: (0, 0)),                # bn2 bias
            pl.BlockSpec((hid, C), lambda b: (0, 0)),              # fc1_w
            pl.BlockSpec((hid, 1), lambda b: (0, 0)),              # fc1_b
            pl.BlockSpec((C, hid), lambda b: (0, 0)),              # fc2_w
            pl.BlockSpec((C, 1), lambda b: (0, 0)),                # fc2_b
            pl.BlockSpec(memory_space=pltpu.MemorySpace.SMEM),     # wsp (9, 2)
            pl.BlockSpec(memory_space=pltpu.MemorySpace.SMEM),     # bsp (1,)
        ],
        out_specs=pl.BlockSpec((1, C, HW), lambda b: (b, 0, 0)),
        compiler_params=pltpu.CompilerParams(
            dimension_semantics=("parallel",)),
    )(x_flat, ut, masks, w1a, s1a, b1a, w2, s2, b2,
      f1w, f1b, f2w, f2b, wsp, bsp)


# -------------------------------- JAX glue -----------------------------------

def _interp_matrix(n_in, n_out):
    """1-D linear interpolation matrix (align_corners=True), shape (n_out, n_in)."""
    src = jnp.linspace(0.0, n_in - 1, n_out)
    i0 = jnp.floor(src).astype(jnp.int32)
    i1 = jnp.minimum(i0 + 1, n_in - 1)
    frac = (src - i0.astype(jnp.float32))[:, None]
    return (jax.nn.one_hot(i0, n_in, dtype=jnp.float32) * (1.0 - frac)
            + jax.nn.one_hot(i1, n_in, dtype=jnp.float32) * frac)


def decoder_forward(x_nchw, p, channels, out_channels):
    """Decoder.forward (up_sample=True, cbam attention, reslink), NCHW in/out."""
    x = x_nchw.astype(jnp.float32)
    B, Cin, H, W = x.shape
    Cm, C = channels, out_channels
    Ho, Wo = 2 * H, 2 * W
    HW, HWin = Ho * Wo, H * W

    # Pad channel counts to multiples of 8 so all in-kernel sublane slices /
    # tap-stack concatenations are tile-aligned (padded rows are exact zeros).
    pad_in = (-Cin) % 8
    Cin_p = Cin + pad_in
    pad_mid = (-Cm) % 8
    Cm_p = Cm + pad_mid

    # F.upsample(scale_factor=2, bilinear, align_corners=True) as a single
    # (H*W, Ho*Wo) operator so the upsample runs in-kernel as one MXU dot.
    wy = _interp_matrix(H, Ho)                                    # (Ho, H)
    wx = _interp_matrix(W, Wo)                                    # (Wo, W)
    ut = jnp.einsum("uh,vw->hwuv", wy, wx).reshape(HWin, HW)      # (H*W, HW)

    # Zero-padding masks for the flattened-HW roll trick (one per 3x3 tap).
    yy = jnp.arange(HW, dtype=jnp.int32) // Wo
    xx = jnp.arange(HW, dtype=jnp.int32) % Wo
    masks = jnp.stack([
        ((yy + (t // 3 - 1) >= 0) & (yy + (t // 3 - 1) < Ho)
         & (xx + (t % 3 - 1) >= 0) & (xx + (t % 3 - 1) < Wo)).astype(jnp.float32)
        for t in range(9)])                                       # (9, HW)

    # conv1 packed as (Cm, 9*Cin_p) with the reslink 1x1 shortcut embedded in
    # the center tap; rows Cm..Cm_p-1 are zero padding (scale/bias = 0).
    w1_p = jnp.pad(p["w1"], ((0, 0), (0, 0), (0, pad_in), (0, 0)))
    w1_mat = jnp.transpose(w1_p.reshape(9, Cin_p, Cm), (2, 0, 1)).reshape(Cm, 9 * Cin_p)
    wsc_p = jnp.pad(p["wsc"], ((0, pad_in), (0, 0)))              # (Cin_p, C)
    wsc_mat = (jnp.zeros((C, 9, Cin_p), jnp.float32)
               .at[:, 4, :].set(wsc_p.T).reshape(C, 9 * Cin_p))
    w1a = jnp.concatenate(
        [w1_mat, jnp.zeros((pad_mid, 9 * Cin_p), jnp.float32), wsc_mat], axis=0)
    s1a = jnp.concatenate([p["bn1_scale"], jnp.zeros((pad_mid,), jnp.float32),
                           p["bnsc_scale"]]).reshape(Cm_p + C, 1)
    b1a = jnp.concatenate([p["bn1_bias"], jnp.zeros((pad_mid,), jnp.float32),
                           p["bnsc_bias"]]).reshape(Cm_p + C, 1)

    # conv2 packed as (C, 9*Cm_p); padded input rows get zero weight columns.
    w2_p = jnp.pad(p["w2"], ((0, 0), (0, 0), (0, pad_mid), (0, 0)))
    w2_mat = jnp.transpose(w2_p.reshape(9, Cm_p, C), (2, 0, 1)).reshape(C, 9 * Cm_p)

    x_flat = jnp.pad(x.reshape(B, Cin, HWin), ((0, 0), (0, pad_in), (0, 0)))

    out_flat = _fused_decoder_call(
        x_flat, ut, masks, w1a, s1a, b1a,
        w2_mat, p["bn2_scale"].reshape(C, 1), p["bn2_bias"].reshape(C, 1),
        p["fc1_w"], p["fc1_b"].reshape(-1, 1),
        p["fc2_w"], p["fc2_b"].reshape(C, 1),
        p["wsp"].reshape(9, 2), p["bsp"],
        Wo=Wo)

    # Kernel writes lane-dense (B, C, H*W) == NCHW after a reshape.
    return out_flat.reshape(B, C, Ho, Wo)


def _bn_fold(key, c):
    """Deterministic eval-mode BatchNorm2d folded into (scale, bias)."""
    k1, k2, k3, k4 = jax.random.split(key, 4)
    gamma = 1.0 + 0.1 * jax.random.normal(k1, (c,), jnp.float32)
    beta = 0.1 * jax.random.normal(k2, (c,), jnp.float32)
    mean = 0.1 * jax.random.normal(k3, (c,), jnp.float32)
    var = 1.0 + 0.1 * jnp.abs(jax.random.normal(k4, (c,), jnp.float32))
    scale = gamma * jax.lax.rsqrt(var + 1e-5)
    bias = beta - mean * scale
    return scale, bias


def init_decoder_params(key, in_channels, channels, out_channels, reduction):
    ks = jax.random.split(key, 12)
    hid = out_channels // reduction
    p = {}
    # conv1 = ConvBn2d(in_channels, channels, 3x3, bias=False); weight (3,3,Cin,Cm)
    p["w1"] = 0.1 * jax.random.normal(ks[0], (3, 3, in_channels, channels), jnp.float32)
    p["bn1_scale"], p["bn1_bias"] = _bn_fold(ks[1], channels)
    # conv2 = ConvBn2d(channels, out_channels, 3x3, bias=False); weight (3,3,Cm,C)
    p["w2"] = 0.1 * jax.random.normal(ks[2], (3, 3, channels, out_channels), jnp.float32)
    p["bn2_scale"], p["bn2_bias"] = _bn_fold(ks[3], out_channels)
    # reslink shortcut = ConvBn2d(in_channels, out_channels, 1x1); weight (Cin, C)
    p["wsc"] = 0.1 * jax.random.normal(ks[4], (in_channels, out_channels), jnp.float32)
    p["bnsc_scale"], p["bnsc_bias"] = _bn_fold(ks[5], out_channels)
    # CBAM channel MLP: fc1/fc2 are 1x1 convs with bias
    p["fc1_w"] = 0.1 * jax.random.normal(ks[6], (hid, out_channels), jnp.float32)
    p["fc1_b"] = 0.1 * jax.random.normal(ks[7], (hid,), jnp.float32)
    p["fc2_w"] = 0.1 * jax.random.normal(ks[8], (out_channels, hid), jnp.float32)
    p["fc2_b"] = 0.1 * jax.random.normal(ks[9], (out_channels,), jnp.float32)
    # CBAM spatial conv: Conv2d(2, 1, 3x3, padding=1, bias=True); weight (3,3,2,1)
    p["wsp"] = 0.1 * jax.random.normal(ks[10], (3, 3, 2, 1), jnp.float32)
    p["bsp"] = 0.1 * jax.random.normal(ks[11], (1,), jnp.float32)
    return p


if __name__ == "__main__":
    key = jax.random.PRNGKey(0)
    kx, kp = jax.random.split(key)

    B, in_channels, channels, out_channels, reduction = 2, 4, 8, 16, 4
    H = W = 16

    x = jax.random.normal(kx, (B, in_channels, H, W), jnp.float32)
    params = init_decoder_params(kp, in_channels, channels, out_channels, reduction)

    fwd = jax.jit(functools.partial(decoder_forward,
                                    channels=channels, out_channels=out_channels))
    y = fwd(x, params)
    jax.block_until_ready(y)
    assert y.shape == (B, out_channels, 2 * H, 2 * W), y.shape
    assert bool(jnp.all(jnp.isfinite(y)))
    print("KERNEL_OK")
</pallas_src>

<mosaic_0001>
module attributes {stable_mosaic.version = 11 : i64} {
  func.func @_decoder_fused_kernel(%arg0: i32, %arg1: memref<1x8x256xf32, #tpu.memory_space<vmem>>, %arg2: memref<256x1024xf32, #tpu.memory_space<vmem>>, %arg3: memref<9x1024xf32, #tpu.memory_space<vmem>>, %arg4: memref<24x72xf32, #tpu.memory_space<vmem>>, %arg5: memref<24x1xf32, #tpu.memory_space<vmem>>, %arg6: memref<24x1xf32, #tpu.memory_space<vmem>>, %arg7: memref<16x72xf32, #tpu.memory_space<vmem>>, %arg8: memref<16x1xf32, #tpu.memory_space<vmem>>, %arg9: memref<16x1xf32, #tpu.memory_space<vmem>>, %arg10: memref<4x16xf32, #tpu.memory_space<vmem>>, %arg11: memref<4x1xf32, #tpu.memory_space<vmem>>, %arg12: memref<16x4xf32, #tpu.memory_space<vmem>>, %arg13: memref<16x1xf32, #tpu.memory_space<vmem>>, %arg14: memref<9x2xf32, #tpu.memory_space<smem>>, %arg15: memref<1xf32, #tpu.memory_space<smem>>, %arg16: memref<1x16x1024xf32, #tpu.memory_space<vmem>>) attributes {dimension_semantics = [#tpu.dimension_semantics<parallel>], iteration_bounds = array<i64: 2>, scalar_prefetch = 0 : i64, scratch_operands = 0 : i64, tpu.core_type = #tpu.core_type<tc>, window_params = [{transform_indices = @transform_0, window_bounds = array<i64: 1, 8, 256>}, {pipeline_mode = #tpu.pipeline_mode<synchronous>, transform_indices = @transform_1, window_bounds = array<i64: 256, 1024>}, {pipeline_mode = #tpu.pipeline_mode<synchronous>, transform_indices = @transform_2, window_bounds = array<i64: 9, 1024>}, {pipeline_mode = #tpu.pipeline_mode<synchronous>, transform_indices = @transform_3, window_bounds = array<i64: 24, 72>}, {pipeline_mode = #tpu.pipeline_mode<synchronous>, transform_indices = @transform_4, window_bounds = array<i64: 24, 1>}, {pipeline_mode = #tpu.pipeline_mode<synchronous>, transform_indices = @transform_5, window_bounds = array<i64: 24, 1>}, {pipeline_mode = #tpu.pipeline_mode<synchronous>, transform_indices = @transform_6, window_bounds = array<i64: 16, 72>}, {pipeline_mode = #tpu.pipeline_mode<synchronous>, transform_indices = @transform_7, window_bounds = array<i64: 16, 1>}, {pipeline_mode = #tpu.pipeline_mode<synchronous>, transform_indices = @transform_8, window_bounds = array<i64: 16, 1>}, {pipeline_mode = #tpu.pipeline_mode<synchronous>, transform_indices = @transform_9, window_bounds = array<i64: 4, 16>}, {pipeline_mode = #tpu.pipeline_mode<synchronous>, transform_indices = @transform_10, window_bounds = array<i64: 4, 1>}, {pipeline_mode = #tpu.pipeline_mode<synchronous>, transform_indices = @transform_11, window_bounds = array<i64: 16, 4>}, {pipeline_mode = #tpu.pipeline_mode<synchronous>, transform_indices = @transform_12, window_bounds = array<i64: 16, 1>}, {transform_indices = @transform_13, window_bounds = array<i64: 9, 2>}, {transform_indices = @transform_14, window_bounds = array<i64: 1>}, {transform_indices = @transform_15, window_bounds = array<i64: 1, 16, 1024>}]} {
    %c0 = arith.constant 0 : index
    %c0_0 = arith.constant 0 : index
    %0 = vector.load %arg3[%c0, %c0_0] : memref<9x1024xf32, #tpu.memory_space<vmem>>, vector<1x1024xf32>
    %c1 = arith.constant 1 : index
    %c0_1 = arith.constant 0 : index
    %1 = vector.load %arg3[%c1, %c0_1] : memref<9x1024xf32, #tpu.memory_space<vmem>>, vector<1x1024xf32>
    %c2 = arith.constant 2 : index
    %c0_2 = arith.constant 0 : index
    %2 = vector.load %arg3[%c2, %c0_2] : memref<9x1024xf32, #tpu.memory_space<vmem>>, vector<1x1024xf32>
    %c3 = arith.constant 3 : index
    %c0_3 = arith.constant 0 : index
    %3 = vector.load %arg3[%c3, %c0_3] : memref<9x1024xf32, #tpu.memory_space<vmem>>, vector<1x1024xf32>
    %c4 = arith.constant 4 : index
    %c0_4 = arith.constant 0 : index
    %4 = vector.load %arg3[%c4, %c0_4] : memref<9x1024xf32, #tpu.memory_space<vmem>>, vector<1x1024xf32>
    %c5 = arith.constant 5 : index
    %c0_5 = arith.constant 0 : index
    %5 = vector.load %arg3[%c5, %c0_5] : memref<9x1024xf32, #tpu.memory_space<vmem>>, vector<1x1024xf32>
    %c6 = arith.constant 6 : index
    %c0_6 = arith.constant 0 : index
    %6 = vector.load %arg3[%c6, %c0_6] : memref<9x1024xf32, #tpu.memory_space<vmem>>, vector<1x1024xf32>
    %c7 = arith.constant 7 : index
    %c0_7 = arith.constant 0 : index
    %7 = vector.load %arg3[%c7, %c0_7] : memref<9x1024xf32, #tpu.memory_space<vmem>>, vector<1x1024xf32>
    %c8 = arith.constant 8 : index
    %c0_8 = arith.constant 0 : index
    %8 = vector.load %arg3[%c8, %c0_8] : memref<9x1024xf32, #tpu.memory_space<vmem>>, vector<1x1024xf32>
    %c0_9 = arith.constant 0 : index
    %c0_10 = arith.constant 0 : index
    %c0_11 = arith.constant 0 : index
    %9 = vector.load %arg1[%c0_9, %c0_10, %c0_11] : memref<1x8x256xf32, #tpu.memory_space<vmem>>, vector<1x8x256xf32>
    %10 = vector.shape_cast %9 : vector<1x8x256xf32> to vector<8x256xf32>
    %c0_12 = arith.constant 0 : index
    %c0_13 = arith.constant 0 : index
    %11 = vector.load %arg2[%c0_12, %c0_13] : memref<256x1024xf32, #tpu.memory_space<vmem>>, vector<256x1024xf32>
    %cst = arith.constant dense<0.000000e+00> : vector<8x1024xf32>
    %12 = tpu.matmul %10, %11, %cst {dimension_numbers = #tpu.dot_dimension_numbers<[1], [0], [0], [1], [0, 0, 1, 1], [], []>} : vector<8x256xf32>, vector<256x1024xf32>, vector<8x1024xf32> -> vector<8x1024xf32>
    %c0_14 = arith.constant 0 : index
    %c0_15 = arith.constant 0 : index
    %13 = vector.load %arg4[%c0_14, %c0_15] : memref<24x72xf32, #tpu.memory_space<vmem>>, vector<24x72xf32>
    %c33_i32 = arith.constant 33 : i32
    %14 = tpu.dynamic_rotate %12 by %c33_i32 dim 1 : vector<8x1024xf32>, i32 -> vector<8x1024xf32>
    %15 = vector.broadcast %0 : vector<1x1024xf32> to vector<8x1024xf32>
    %16 = arith.mulf %14, %15 : vector<8x1024xf32>
    %c32_i32 = arith.constant 32 : i32
    %17 = tpu.dynamic_rotate %12 by %c32_i32 dim 1 : vector<8x1024xf32>, i32 -> vector<8x1024xf32>
    %18 = vector.broadcast %1 : vector<1x1024xf32> to vector<8x1024xf32>
    %19 = arith.mulf %17, %18 : vector<8x1024xf32>
    %c31_i32 = arith.constant 31 : i32
    %20 = tpu.dynamic_rotate %12 by %c31_i32 dim 1 : vector<8x1024xf32>, i32 -> vector<8x1024xf32>
    %21 = vector.broadcast %2 : vector<1x1024xf32> to vector<8x1024xf32>
    %22 = arith.mulf %20, %21 : vector<8x1024xf32>
    %c1_i32 = arith.constant 1 : i32
    %23 = tpu.dynamic_rotate %12 by %c1_i32 dim 1 : vector<8x1024xf32>, i32 -> vector<8x1024xf32>
    %24 = vector.broadcast %3 : vector<1x1024xf32> to vector<8x1024xf32>
    %25 = arith.mulf %23, %24 : vector<8x1024xf32>
    %26 = vector.broadcast %4 : vector<1x1024xf32> to vector<8x1024xf32>
    %27 = arith.mulf %12, %26 : vector<8x1024xf32>
    %c1023_i32 = arith.constant 1023 : i32
    %28 = tpu.dynamic_rotate %12 by %c1023_i32 dim 1 : vector<8x1024xf32>, i32 -> vector<8x1024xf32>
    %29 = vector.broadcast %5 : vector<1x1024xf32> to vector<8x1024xf32>
    %30 = arith.mulf %28, %29 : vector<8x1024xf32>
    %c993_i32 = arith.constant 993 : i32
    %31 = tpu.dynamic_rotate %12 by %c993_i32 dim 1 : vector<8x1024xf32>, i32 -> vector<8x1024xf32>
    %32 = vector.broadcast %6 : vector<1x1024xf32> to vector<8x1024xf32>
    %33 = arith.mulf %31, %32 : vector<8x1024xf32>
    %c992_i32 = arith.constant 992 : i32
    %34 = tpu.dynamic_rotate %12 by %c992_i32 dim 1 : vector<8x1024xf32>, i32 -> vector<8x1024xf32>
    %35 = vector.broadcast %7 : vector<1x1024xf32> to vector<8x1024xf32>
    %36 = arith.mulf %34, %35 : vector<8x1024xf32>
    %c991_i32 = arith.constant 991 : i32
    %37 = tpu.dynamic_rotate %12 by %c991_i32 dim 1 : vector<8x1024xf32>, i32 -> vector<8x1024xf32>
    %38 = vector.broadcast %8 : vector<1x1024xf32> to vector<8x1024xf32>
    %39 = arith.mulf %37, %38 : vector<8x1024xf32>
    %40 = tpu.concatenate %16, %19, %22, %25, %27, %30, %33, %36, %39 in 0 : vector<8x1024xf32>, vector<8x1024xf32>, vector<8x1024xf32>, vector<8x1024xf32>, vector<8x1024xf32>, vector<8x1024xf32>, vector<8x1024xf32>, vector<8x1024xf32>, vector<8x1024xf32> -> vector<72x1024xf32>
    %cst_16 = arith.constant dense<0.000000e+00> : vector<24x1024xf32>
    %41 = tpu.matmul %13, %40, %cst_16 {dimension_numbers = #tpu.dot_dimension_numbers<[1], [0], [0], [1], [0, 0, 1, 1], [], []>} : vector<24x72xf32>, vector<72x1024xf32>, vector<24x1024xf32> -> vector<24x1024xf32>
    %c0_17 = arith.constant 0 : index
    %c0_18 = arith.constant 0 : index
    %42 = vector.load %arg5[%c0_17, %c0_18] : memref<24x1xf32, #tpu.memory_space<vmem>>, vector<24x1xf32>
    %43 = vector.broadcast %42 : vector<24x1xf32> to vector<24x1024xf32>
    %44 = arith.mulf %41, %43 : vector<24x1024xf32>
    %c0_19 = arith.constant 0 : index
    %c0_20 = arith.constant 0 : index
    %45 = vector.load %arg6[%c0_19, %c0_20] : memref<24x1xf32, #tpu.memory_space<vmem>>, vector<24x1xf32>
    %46 = vector.broadcast %45 : vector<24x1xf32> to vector<24x1024xf32>
    %47 = arith.addf %44, %46 : vector<24x1024xf32>
    %48 = vector.extract_strided_slice %47 {offsets = [0, 0], sizes = [8, 1024], strides = [1, 1]} : vector<24x1024xf32> to vector<8x1024xf32>
    %cst_21 = arith.constant 0.000000e+00 : f32
    %49 = vector.broadcast %cst_21 : f32 to vector<8x1024xf32>
    %50 = arith.maximumf %48, %49 : vector<8x1024xf32>
    %51 = vector.extract_strided_slice %47 {offsets = [8, 0], sizes = [16, 1024], strides = [1, 1]} : vector<24x1024xf32> to vector<16x1024xf32>
    %c0_22 = arith.constant 0 : index
    %c0_23 = arith.constant 0 : index
    %52 = vector.load %arg7[%c0_22, %c0_23] : memref<16x72xf32, #tpu.memory_space<vmem>>, vector<16x72xf32>
    %c33_i32_24 = arith.constant 33 : i32
    %53 = tpu.dynamic_rotate %50 by %c33_i32_24 dim 1 : vector<8x1024xf32>, i32 -> vector<8x1024xf32>
    %54 = vector.broadcast %0 : vector<1x1024xf32> to vector<8x1024xf32>
    %55 = arith.mulf %53, %54 : vector<8x1024xf32>
    %c32_i32_25 = arith.constant 32 : i32
    %56 = tpu.dynamic_rotate %50 by %c32_i32_25 dim 1 : vector<8x1024xf32>, i32 -> vector<8x1024xf32>
    %57 = vector.broadcast %1 : vector<1x1024xf32> to vector<8x1024xf32>
    %58 = arith.mulf %56, %57 : vector<8x1024xf32>
    %c31_i32_26 = arith.constant 31 : i32
    %59 = tpu.dynamic_rotate %50 by %c31_i32_26 dim 1 : vector<8x1024xf32>, i32 -> vector<8x1024xf32>
    %60 = vector.broadcast %2 : vector<1x1024xf32> to vector<8x1024xf32>
    %61 = arith.mulf %59, %60 : vector<8x1024xf32>
    %c1_i32_27 = arith.constant 1 : i32
    %62 = tpu.dynamic_rotate %50 by %c1_i32_27 dim 1 : vector<8x1024xf32>, i32 -> vector<8x1024xf32>
    %63 = vector.broadcast %3 : vector<1x1024xf32> to vector<8x1024xf32>
    %64 = arith.mulf %62, %63 : vector<8x1024xf32>
    %65 = vector.broadcast %4 : vector<1x1024xf32> to vector<8x1024xf32>
    %66 = arith.mulf %50, %65 : vector<8x1024xf32>
    %c1023_i32_28 = arith.constant 1023 : i32
    %67 = tpu.dynamic_rotate %50 by %c1023_i32_28 dim 1 : vector<8x1024xf32>, i32 -> vector<8x1024xf32>
    %68 = vector.broadcast %5 : vector<1x1024xf32> to vector<8x1024xf32>
    %69 = arith.mulf %67, %68 : vector<8x1024xf32>
    %c993_i32_29 = arith.constant 993 : i32
    %70 = tpu.dynamic_rotate %50 by %c993_i32_29 dim 1 : vector<8x1024xf32>, i32 -> vector<8x1024xf32>
    %71 = vector.broadcast %6 : vector<1x1024xf32> to vector<8x1024xf32>
    %72 = arith.mulf %70, %71 : vector<8x1024xf32>
    %c992_i32_30 = arith.constant 992 : i32
    %73 = tpu.dynamic_rotate %50 by %c992_i32_30 dim 1 : vector<8x1024xf32>, i32 -> vector<8x1024xf32>
    %74 = vector.broadcast %7 : vector<1x1024xf32> to vector<8x1024xf32>
    %75 = arith.mulf %73, %74 : vector<8x1024xf32>
    %c991_i32_31 = arith.constant 991 : i32
    %76 = tpu.dynamic_rotate %50 by %c991_i32_31 dim 1 : vector<8x1024xf32>, i32 -> vector<8x1024xf32>
    %77 = vector.broadcast %8 : vector<1x1024xf32> to vector<8x1024xf32>
    %78 = arith.mulf %76, %77 : vector<8x1024xf32>
    %79 = tpu.concatenate %55, %58, %61, %64, %66, %69, %72, %75, %78 in 0 : vector<8x1024xf32>, vector<8x1024xf32>, vector<8x1024xf32>, vector<8x1024xf32>, vector<8x1024xf32>, vector<8x1024xf32>, vector<8x1024xf32>, vector<8x1024xf32>, vector<8x1024xf32> -> vector<72x1024xf32>
    %cst_32 = arith.constant dense<0.000000e+00> : vector<16x1024xf32>
    %80 = tpu.matmul %52, %79, %cst_32 {dimension_numbers = #tpu.dot_dimension_numbers<[1], [0], [0], [1], [0, 0, 1, 1], [], []>} : vector<16x72xf32>, vector<72x1024xf32>, vector<16x1024xf32> -> vector<16x1024xf32>
    %c0_33 = arith.constant 0 : index
    %c0_34 = arith.constant 0 : index
    %81 = vector.load %arg8[%c0_33, %c0_34] : memref<16x1xf32, #tpu.memory_space<vmem>>, vector<16x1xf32>
    %82 = vector.broadcast %81 : vector<16x1xf32> to vector<16x1024xf32>
    %83 = arith.mulf %80, %82 : vector<16x1024xf32>
    %c0_35 = arith.constant 0 : index
    %c0_36 = arith.constant 0 : index
    %84 = vector.load %arg9[%c0_35, %c0_36] : memref<16x1xf32, #tpu.memory_space<vmem>>, vector<16x1xf32>
    %85 = vector.broadcast %84 : vector<16x1xf32> to vector<16x1024xf32>
    %86 = arith.addf %83, %85 : vector<16x1024xf32>
    %cst_37 = arith.constant 0.000000e+00 : f32
    %87 = vector.broadcast %cst_37 : f32 to vector<16x1024xf32>
    %88 = arith.maximumf %86, %87 : vector<16x1024xf32>
    %cst_38 = arith.constant dense<0.000000e+00> : vector<16xf32>
    %89 = vector.multi_reduction <add>, %88, %cst_38 [1] : vector<16x1024xf32> to vector<16xf32>
    %90 = vector.shape_cast %89 : vector<16xf32> to vector<16x1xf32>
    %cst_39 = arith.constant 1.024000e+03 : f32
    %91 = vector.broadcast %cst_39 : f32 to vector<16x1xf32>
    %92 = arith.divf %90, %91 : vector<16x1xf32>
    %cst_40 = arith.constant dense<0xFF800000> : vector<16xf32>
    %93 = vector.multi_reduction <maximumf>, %88, %cst_40 [1] : vector<16x1024xf32> to vector<16xf32>
    %94 = vector.shape_cast %93 : vector<16xf32> to vector<16x1xf32>
    %95 = tpu.concatenate %92, %94 in 1 : vector<16x1xf32>, vector<16x1xf32> -> vector<16x2xf32>
    %c0_41 = arith.constant 0 : index
    %c0_42 = arith.constant 0 : index
    %96 = vector.load %arg10[%c0_41, %c0_42] : memref<4x16xf32, #tpu.memory_space<vmem>>, vector<4x16xf32>
    %cst_43 = arith.constant dense<0.000000e+00> : vector<4x2xf32>
    %97 = tpu.matmul %96, %95, %cst_43 {dimension_numbers = #tpu.dot_dimension_numbers<[1], [0], [0], [1], [0, 0, 1, 1], [], []>} : vector<4x16xf32>, vector<16x2xf32>, vector<4x2xf32> -> vector<4x2xf32>
    %c0_44 = arith.constant 0 : index
    %c0_45 = arith.constant 0 : index
    %98 = vector.load %arg11[%c0_44, %c0_45] : memref<4x1xf32, #tpu.memory_space<vmem>>, vector<4x1xf32>
    %99 = vector.broadcast %98 : vector<4x1xf32> to vector<4x2xf32>
    %100 = arith.addf %97, %99 : vector<4x2xf32>
    %cst_46 = arith.constant 0.000000e+00 : f32
    %101 = vector.broadcast %cst_46 : f32 to vector<4x2xf32>
    %102 = arith.maximumf %100, %101 : vector<4x2xf32>
    %c0_47 = arith.constant 0 : index
    %c0_48 = arith.constant 0 : index
    %103 = vector.load %arg12[%c0_47, %c0_48] : memref<16x4xf32, #tpu.memory_space<vmem>>, vector<16x4xf32>
    %cst_49 = arith.constant dense<0.000000e+00> : vector<16x2xf32>
    %104 = tpu.matmul %103, %102, %cst_49 {dimension_numbers = #tpu.dot_dimension_numbers<[1], [0], [0], [1], [0, 0, 1, 1], [], []>} : vector<16x4xf32>, vector<4x2xf32>, vector<16x2xf32> -> vector<16x2xf32>
    %c0_50 = arith.constant 0 : index
    %c0_51 = arith.constant 0 : index
    %105 = vector.load %arg13[%c0_50, %c0_51] : memref<16x1xf32, #tpu.memory_space<vmem>>, vector<16x1xf32>
    %106 = vector.broadcast %105 : vector<16x1xf32> to vector<16x2xf32>
    %107 = arith.addf %104, %106 : vector<16x2xf32>
    %108 = vector.extract_strided_slice %107 {offsets = [0, 0], sizes = [16, 1], strides = [1, 1]} : vector<16x2xf32> to vector<16x1xf32>
    %109 = vector.extract_strided_slice %107 {offsets = [0, 1], sizes = [16, 1], strides = [1, 1]} : vector<16x2xf32> to vector<16x1xf32>
    %110 = arith.addf %108, %109 : vector<16x1xf32>
    %111 = arith.negf %110 : vector<16x1xf32>
    %112 = math.exp %111 : vector<16x1xf32>
    %cst_52 = arith.constant 1.000000e+00 : f32
    %113 = vector.broadcast %cst_52 : f32 to vector<16x1xf32>
    %114 = arith.addf %113, %112 : vector<16x1xf32>
    %115 = arith.divf %113, %114 : vector<16x1xf32>
    %116 = vector.broadcast %115 : vector<16x1xf32> to vector<16x1024xf32>
    %117 = arith.mulf %88, %116 : vector<16x1024xf32>
    %cst_53 = arith.constant dense<0.000000e+00> : vector<1024xf32>
    %118 = vector.multi_reduction <add>, %117, %cst_53 [0] : vector<16x1024xf32> to vector<1024xf32>
    %119 = vector.shape_cast %118 : vector<1024xf32> to vector<1x1024xf32>
    %cst_54 = arith.constant 1.600000e+01 : f32
    %120 = vector.broadcast %cst_54 : f32 to vector<1x1024xf32>
    %121 = arith.divf %119, %120 : vector<1x1024xf32>
    %cst_55 = arith.constant dense<0xFF800000> : vector<1024xf32>
    %122 = vector.multi_reduction <maximumf>, %117, %cst_55 [0] : vector<16x1024xf32> to vector<1024xf32>
    %123 = vector.shape_cast %122 : vector<1024xf32> to vector<1x1024xf32>
    %cst_56 = arith.constant 0.000000e+00 : f32
    %124 = vector.broadcast %cst_56 : f32 to vector<1x1024xf32>
    %c33_i32_57 = arith.constant 33 : i32
    %125 = tpu.dynamic_rotate %121 by %c33_i32_57 dim 1 : vector<1x1024xf32>, i32 -> vector<1x1024xf32>
    %c33_i32_58 = arith.constant 33 : i32
    %126 = tpu.dynamic_rotate %123 by %c33_i32_58 dim 1 : vector<1x1024xf32>, i32 -> vector<1x1024xf32>
    %c0_59 = arith.constant 0 : index
    %c0_60 = arith.constant 0 : index
    %127 = memref.load %arg14[%c0_59, %c0_60] : memref<9x2xf32, #tpu.memory_space<smem>>
    %128 = vector.broadcast %127 : f32 to vector<1x1024xf32>
    %129 = arith.mulf %128, %125 : vector<1x1024xf32>
    %c0_61 = arith.constant 0 : index
    %c1_62 = arith.constant 1 : index
    %130 = memref.load %arg14[%c0_61, %c1_62] : memref<9x2xf32, #tpu.memory_space<smem>>
    %131 = vector.broadcast %130 : f32 to vector<1x1024xf32>
    %132 = arith.mulf %131, %126 : vector<1x1024xf32>
    %133 = arith.addf %129, %132 : vector<1x1024xf32>
    %134 = arith.mulf %0, %133 : vector<1x1024xf32>
    %135 = arith.addf %124, %134 : vector<1x1024xf32>
    %c32_i32_63 = arith.constant 32 : i32
    %136 = tpu.dynamic_rotate %121 by %c32_i32_63 dim 1 : vector<1x1024xf32>, i32 -> vector<1x1024xf32>
    %c32_i32_64 = arith.constant 32 : i32
    %137 = tpu.dynamic_rotate %123 by %c32_i32_64 dim 1 : vector<1x1024xf32>, i32 -> vector<1x1024xf32>
    %c1_65 = arith.constant 1 : index
    %c0_66 = arith.constant 0 : index
    %138 = memref.load %arg14[%c1_65, %c0_66] : memref<9x2xf32, #tpu.memory_space<smem>>
    %139 = vector.broadcast %138 : f32 to vector<1x1024xf32>
    %140 = arith.mulf %139, %136 : vector<1x1024xf32>
    %c1_67 = arith.constant 1 : index
    %c1_68 = arith.constant 1 : index
    %141 = memref.load %arg14[%c1_67, %c1_68] : memref<9x2xf32, #tpu.memory_space<smem>>
    %142 = vector.broadcast %141 : f32 to vector<1x1024xf32>
    %143 = arith.mulf %142, %137 : vector<1x1024xf32>
    %144 = arith.addf %140, %143 : vector<1x1024xf32>
    %145 = arith.mulf %1, %144 : vector<1x1024xf32>
    %146 = arith.addf %135, %145 : vector<1x1024xf32>
    %c31_i32_69 = arith.constant 31 : i32
    %147 = tpu.dynamic_rotate %121 by %c31_i32_69 dim 1 : vector<1x1024xf32>, i32 -> vector<1x1024xf32>
    %c31_i32_70 = arith.constant 31 : i32
    %148 = tpu.dynamic_rotate %123 by %c31_i32_70 dim 1 : vector<1x1024xf32>, i32 -> vector<1x1024xf32>
    %c2_71 = arith.constant 2 : index
    %c0_72 = arith.constant 0 : index
    %149 = memref.load %arg14[%c2_71, %c0_72] : memref<9x2xf32, #tpu.memory_space<smem>>
    %150 = vector.broadcast %149 : f32 to vector<1x1024xf32>
    %151 = arith.mulf %150, %147 : vector<1x1024xf32>
    %c2_73 = arith.constant 2 : index
    %c1_74 = arith.constant 1 : index
    %152 = memref.load %arg14[%c2_73, %c1_74] : memref<9x2xf32, #tpu.memory_space<smem>>
    %153 = vector.broadcast %152 : f32 to vector<1x1024xf32>
    %154 = arith.mulf %153, %148 : vector<1x1024xf32>
    %155 = arith.addf %151, %154 : vector<1x1024xf32>
    %156 = arith.mulf %2, %155 : vector<1x1024xf32>
    %157 = arith.addf %146, %156 : vector<1x1024xf32>
    %c1_i32_75 = arith.constant 1 : i32
    %158 = tpu.dynamic_rotate %121 by %c1_i32_75 dim 1 : vector<1x1024xf32>, i32 -> vector<1x1024xf32>
    %c1_i32_76 = arith.constant 1 : i32
    %159 = tpu.dynamic_rotate %123 by %c1_i32_76 dim 1 : vector<1x1024xf32>, i32 -> vector<1x1024xf32>
    %c3_77 = arith.constant 3 : index
    %c0_78 = arith.constant 0 : index
    %160 = memref.load %arg14[%c3_77, %c0_78] : memref<9x2xf32, #tpu.memory_space<smem>>
    %161 = vector.broadcast %160 : f32 to vector<1x1024xf32>
    %162 = arith.mulf %161, %158 : vector<1x1024xf32>
    %c3_79 = arith.constant 3 : index
    %c1_80 = arith.constant 1 : index
    %163 = memref.load %arg14[%c3_79, %c1_80] : memref<9x2xf32, #tpu.memory_space<smem>>
    %164 = vector.broadcast %163 : f32 to vector<1x1024xf32>
    %165 = arith.mulf %164, %159 : vector<1x1024xf32>
    %166 = arith.addf %162, %165 : vector<1x1024xf32>
    %167 = arith.mulf %3, %166 : vector<1x1024xf32>
    %168 = arith.addf %157, %167 : vector<1x1024xf32>
    %c4_81 = arith.constant 4 : index
    %c0_82 = arith.constant 0 : index
    %169 = memref.load %arg14[%c4_81, %c0_82] : memref<9x2xf32, #tpu.memory_space<smem>>
    %170 = vector.broadcast %169 : f32 to vector<1x1024xf32>
    %171 = arith.mulf %170, %121 : vector<1x1024xf32>
    %c4_83 = arith.constant 4 : index
    %c1_84 = arith.constant 1 : index
    %172 = memref.load %arg14[%c4_83, %c1_84] : memref<9x2xf32, #tpu.memory_space<smem>>
    %173 = vector.broadcast %172 : f32 to vector<1x1024xf32>
    %174 = arith.mulf %173, %123 : vector<1x1024xf32>
    %175 = arith.addf %171, %174 : vector<1x1024xf32>
    %176 = arith.mulf %4, %175 : vector<1x1024xf32>
    %177 = arith.addf %168, %176 : vector<1x1024xf32>
    %c1023_i32_85 = arith.constant 1023 : i32
    %178 = tpu.dynamic_rotate %121 by %c1023_i32_85 dim 1 : vector<1x1024xf32>, i32 -> vector<1x1024xf32>
    %c1023_i32_86 = arith.constant 1023 : i32
    %179 = tpu.dynamic_rotate %123 by %c1023_i32_86 dim 1 : vector<1x1024xf32>, i32 -> vector<1x1024xf32>
    %c5_87 = arith.constant 5 : index
    %c0_88 = arith.constant 0 : index
    %180 = memref.load %arg14[%c5_87, %c0_88] : memref<9x2xf32, #tpu.memory_space<smem>>
    %181 = vector.broadcast %180 : f32 to vector<1x1024xf32>
    %182 = arith.mulf %181, %178 : vector<1x1024xf32>
    %c5_89 = arith.constant 5 : index
    %c1_90 = arith.constant 1 : index
    %183 = memref.load %arg14[%c5_89, %c1_90] : memref<9x2xf32, #tpu.memory_space<smem>>
    %184 = vector.broadcast %183 : f32 to vector<1x1024xf32>
    %185 = arith.mulf %184, %179 : vector<1x1024xf32>
    %186 = arith.addf %182, %185 : vector<1x1024xf32>
    %187 = arith.mulf %5, %186 : vector<1x1024xf32>
    %188 = arith.addf %177, %187 : vector<1x1024xf32>
    %c993_i32_91 = arith.constant 993 : i32
    %189 = tpu.dynamic_rotate %121 by %c993_i32_91 dim 1 : vector<1x1024xf32>, i32 -> vector<1x1024xf32>
    %c993_i32_92 = arith.constant 993 : i32
    %190 = tpu.dynamic_rotate %123 by %c993_i32_92 dim 1 : vector<1x1024xf32>, i32 -> vector<1x1024xf32>
    %c6_93 = arith.constant 6 : index
    %c0_94 = arith.constant 0 : index
    %191 = memref.load %arg14[%c6_93, %c0_94] : memref<9x2xf32, #tpu.memory_space<smem>>
    %192 = vector.broadcast %191 : f32 to vector<1x1024xf32>
    %193 = arith.mulf %192, %189 : vector<1x1024xf32>
    %c6_95 = arith.constant 6 : index
    %c1_96 = arith.constant 1 : index
    %194 = memref.load %arg14[%c6_95, %c1_96] : memref<9x2xf32, #tpu.memory_space<smem>>
    %195 = vector.broadcast %194 : f32 to vector<1x1024xf32>
    %196 = arith.mulf %195, %190 : vector<1x1024xf32>
    %197 = arith.addf %193, %196 : vector<1x1024xf32>
    %198 = arith.mulf %6, %197 : vector<1x1024xf32>
    %199 = arith.addf %188, %198 : vector<1x1024xf32>
    %c992_i32_97 = arith.constant 992 : i32
    %200 = tpu.dynamic_rotate %121 by %c992_i32_97 dim 1 : vector<1x1024xf32>, i32 -> vector<1x1024xf32>
    %c992_i32_98 = arith.constant 992 : i32
    %201 = tpu.dynamic_rotate %123 by %c992_i32_98 dim 1 : vector<1x1024xf32>, i32 -> vector<1x1024xf32>
    %c7_99 = arith.constant 7 : index
    %c0_100 = arith.constant 0 : index
    %202 = memref.load %arg14[%c7_99, %c0_100] : memref<9x2xf32, #tpu.memory_space<smem>>
    %203 = vector.broadcast %202 : f32 to vector<1x1024xf32>
    %204 = arith.mulf %203, %200 : vector<1x1024xf32>
    %c7_101 = arith.constant 7 : index
    %c1_102 = arith.constant 1 : index
    %205 = memref.load %arg14[%c7_101, %c1_102] : memref<9x2xf32, #tpu.memory_space<smem>>
    %206 = vector.broadcast %205 : f32 to vector<1x1024xf32>
    %207 = arith.mulf %206, %201 : vector<1x1024xf32>
    %208 = arith.addf %204, %207 : vector<1x1024xf32>
    %209 = arith.mulf %7, %208 : vector<1x1024xf32>
    %210 = arith.addf %199, %209 : vector<1x1024xf32>
    %c991_i32_103 = arith.constant 991 : i32
    %211 = tpu.dynamic_rotate %121 by %c991_i32_103 dim 1 : vector<1x1024xf32>, i32 -> vector<1x1024xf32>
    %c991_i32_104 = arith.constant 991 : i32
    %212 = tpu.dynamic_rotate %123 by %c991_i32_104 dim 1 : vector<1x1024xf32>, i32 -> vector<1x1024xf32>
    %c8_105 = arith.constant 8 : index
    %c0_106 = arith.constant 0 : index
    %213 = memref.load %arg14[%c8_105, %c0_106] : memref<9x2xf32, #tpu.memory_space<smem>>
    %214 = vector.broadcast %213 : f32 to vector<1x1024xf32>
    %215 = arith.mulf %214, %211 : vector<1x1024xf32>
    %c8_107 = arith.constant 8 : index
    %c1_108 = arith.constant 1 : index
    %216 = memref.load %arg14[%c8_107, %c1_108] : memref<9x2xf32, #tpu.memory_space<smem>>
    %217 = vector.broadcast %216 : f32 to vector<1x1024xf32>
    %218 = arith.mulf %217, %212 : vector<1x1024xf32>
    %219 = arith.addf %215, %218 : vector<1x1024xf32>
    %220 = arith.mulf %8, %219 : vector<1x1024xf32>
    %221 = arith.addf %210, %220 : vector<1x1024xf32>
    %c0_109 = arith.constant 0 : index
    %222 = memref.load %arg15[%c0_109] : memref<1xf32, #tpu.memory_space<smem>>
    %223 = vector.broadcast %222 : f32 to vector<1x1024xf32>
    %224 = arith.addf %221, %223 : vector<1x1024xf32>
    %225 = arith.negf %224 : vector<1x1024xf32>
    %226 = math.exp %225 : vector<1x1024xf32>
    %cst_110 = arith.constant 1.000000e+00 : f32
    %227 = vector.broadcast %cst_110 : f32 to vector<1x1024xf32>
    %228 = arith.addf %227, %226 : vector<1x1024xf32>
    %229 = arith.divf %227, %228 : vector<1x1024xf32>
    %230 = vector.broadcast %229 : vector<1x1024xf32> to vector<16x1024xf32>
    %231 = arith.mulf %117, %230 : vector<16x1024xf32>
    %232 = arith.addf %231, %51 : vector<16x1024xf32>
    %cst_111 = arith.constant 0.000000e+00 : f32
    %233 = vector.broadcast %cst_111 : f32 to vector<16x1024xf32>
    %234 = arith.maximumf %232, %233 : vector<16x1024xf32>
    %c0_112 = arith.constant 0 : index
    %c0_113 = arith.constant 0 : index
    %c0_114 = arith.constant 0 : index
    %235 = vector.load %arg16[%c0_112, %c0_113, %c0_114] : memref<1x16x1024xf32, #tpu.memory_space<vmem>>, vector<1x16x1024xf32>
    %236 = vector.shape_cast %235 : vector<1x16x1024xf32> to vector<16x1024xf32>
    %237 = vector.shape_cast %234 : vector<16x1024xf32> to vector<1x16x1024xf32>
    tpu.vector_store %arg16[%c0_112, %c0_113, %c0_114], %237 {strides = array<i32>} : memref<1x16x1024xf32, #tpu.memory_space<vmem>>, vector<1x16x1024xf32>,
    return
  }
  func.func @transform_0(%arg0: i32) -> (i32, i32, i32) {
    %c0_i32 = arith.constant 0 : i32
    %c0_i32_0 = arith.constant 0 : i32
    %c0_i32_1 = arith.constant 0 : i32
    return %arg0, %c0_i32, %c0_i32_0 : i32, i32, i32
  }
  func.func @transform_1(%arg0: i32) -> (i32, i32) {
    %c0_i32 = arith.constant 0 : i32
    %c0_i32_0 = arith.constant 0 : i32
    %c0_i32_1 = arith.constant 0 : i32
    return %c0_i32, %c0_i32_0 : i32, i32
  }
  func.func @transform_2(%arg0: i32) -> (i32, i32) {
    %c0_i32 = arith.constant 0 : i32
    %c0_i32_0 = arith.constant 0 : i32
    %c0_i32_1 = arith.constant 0 : i32
    return %c0_i32, %c0_i32_0 : i32, i32
  }
  func.func @transform_3(%arg0: i32) -> (i32, i32) {
    %c0_i32 = arith.constant 0 : i32
    %c0_i32_0 = arith.constant 0 : i32
    %c0_i32_1 = arith.constant 0 : i32
    return %c0_i32, %c0_i32_0 : i32, i32
  }
  func.func @transform_4(%arg0: i32) -> (i32, i32) {
    %c0_i32 = arith.constant 0 : i32
    %c0_i32_0 = arith.constant 0 : i32
    %c0_i32_1 = arith.constant 0 : i32
    return %c0_i32, %c0_i32_0 : i32, i32
  }
  func.func @transform_5(%arg0: i32) -> (i32, i32) {
    %c0_i32 = arith.constant 0 : i32
    %c0_i32_0 = arith.constant 0 : i32
    %c0_i32_1 = arith.constant 0 : i32
    return %c0_i32, %c0_i32_0 : i32, i32
  }
  func.func @transform_6(%arg0: i32) -> (i32, i32) {
    %c0_i32 = arith.constant 0 : i32
    %c0_i32_0 = arith.constant 0 : i32
    %c0_i32_1 = arith.constant 0 : i32
    return %c0_i32, %c0_i32_0 : i32, i32
  }
  func.func @transform_7(%arg0: i32) -> (i32, i32) {
    %c0_i32 = arith.constant 0 : i32
    %c0_i32_0 = arith.constant 0 : i32
    %c0_i32_1 = arith.constant 0 : i32
    return %c0_i32, %c0_i32_0 : i32, i32
  }
  func.func @transform_8(%arg0: i32) -> (i32, i32) {
    %c0_i32 = arith.constant 0 : i32
    %c0_i32_0 = arith.constant 0 : i32
    %c0_i32_1 = arith.constant 0 : i32
    return %c0_i32, %c0_i32_0 : i32, i32
  }
  func.func @transform_9(%arg0: i32) -> (i32, i32) {
    %c0_i32 = arith.constant 0 : i32
    %c0_i32_0 = arith.constant 0 : i32
    %c0_i32_1 = arith.constant 0 : i32
    return %c0_i32, %c0_i32_0 : i32, i32
  }
  func.func @transform_10(%arg0: i32) -> (i32, i32) {
    %c0_i32 = arith.constant 0 : i32
    %c0_i32_0 = arith.constant 0 : i32
    %c0_i32_1 = arith.constant 0 : i32
    return %c0_i32, %c0_i32_0 : i32, i32
  }
  func.func @transform_11(%arg0: i32) -> (i32, i32) {
    %c0_i32 = arith.constant 0 : i32
    %c0_i32_0 = arith.constant 0 : i32
    %c0_i32_1 = arith.constant 0 : i32
    return %c0_i32, %c0_i32_0 : i32, i32
  }
  func.func @transform_12(%arg0: i32) -> (i32, i32) {
    %c0_i32 = arith.constant 0 : i32
    %c0_i32_0 = arith.constant 0 : i32
    %c0_i32_1 = arith.constant 0 : i32
    return %c0_i32, %c0_i32_0 : i32, i32
  }
  func.func @transform_13(%arg0: i32) -> (i32, i32) {
    %c0_i32 = arith.constant 0 : i32
    %c0_i32_0 = arith.constant 0 : i32
    %c0_i32_1 = arith.constant 0 : i32
    return %c0_i32, %c0_i32_0 : i32, i32
  }
  func.func @transform_14(%arg0: i32) -> i32 {
    %c0_i32 = arith.constant 0 : i32
    %c0_i32_0 = arith.constant 0 : i32
    return %c0_i32 : i32
  }
  func.func @transform_15(%arg0: i32) -> (i32, i32, i32) {
    %c0_i32 = arith.constant 0 : i32
    %c0_i32_0 = arith.constant 0 : i32
    %c0_i32_1 = arith.constant 0 : i32
    return %arg0, %c0_i32, %c0_i32_0 : i32, i32, i32
  }
}

</mosaic_0001>

<llo_original>
// kernel: decoder_forward.1
$region0: #{decoder_forward.1}
  #allocation0 [shape = 'u32[]', space=smem, size = 0x4, offset = 0x4, fixed_abs, tag = 'smem constant byte address 0x4 - core index']
  #allocation1 [shape = 'u32[144,128]{1,0:T(1,128)}', space=vmem, size = 0x12000, scoped, tag = 'internal scratch']
  #allocation2 [shape = 'f32[1]{0:T(128)S(6)}', space=smem, size = 0x200, scoped, tag = 'scoped memory for decoder_forward.1']
  %s0 = inlined_call_operand.vmem [shape: f32[2,8,256], index: 0, kind: input, shape index: {}]
  %s1 = inlined_call_operand.vmem [shape: f32[256,1024], index: 1, kind: input, shape index: {}]
  %s2 = inlined_call_operand.vmem [shape: f32[9,1024], index: 2, kind: input, shape index: {}]
  %s3 = inlined_call_operand.vmem [shape: f32[24,72], index: 3, kind: input, shape index: {}]
  %s4 = inlined_call_operand.vmem [shape: f32[24,1], index: 4, kind: input, shape index: {}]
  %s5 = inlined_call_operand.vmem [shape: f32[24,1], index: 5, kind: input, shape index: {}]
  %s6 = inlined_call_operand.vmem [shape: f32[16,72], index: 6, kind: input, shape index: {}]
  %s7 = inlined_call_operand.vmem [shape: f32[16,1], index: 7, kind: input, shape index: {}]
  %s8 = inlined_call_operand.vmem [shape: f32[16,1], index: 8, kind: input, shape index: {}]
  %s9 = inlined_call_operand.vmem [shape: f32[4,16], index: 9, kind: input, shape index: {}]
  %s10 = inlined_call_operand.vmem [shape: f32[4,1], index: 10, kind: input, shape index: {}]
  %s11 = inlined_call_operand.vmem [shape: f32[16,4], index: 11, kind: input, shape index: {}]
  %s12 = inlined_call_operand.vmem [shape: f32[16,1], index: 12, kind: input, shape index: {}]
  %s13 = inlined_call_operand.vmem [shape: f32[9,2], index: 13, kind: input, shape index: {}]
  %s14 = inlined_call_operand.<no memory space> [shape: f32[1], index: 14, kind: input, shape index: {}]
  %s15 = inlined_call_operand.vmem [shape: f32[2,16,1024], index: 15, kind: output, shape index: {}]
  %s16 = sld [smem:[#allocation0]]
  $region97: #{decoder_forward.1} parent=0
    _
  %s18 = ssub.s32 1, %s16
  %s19 = scalar_select 0, %s18, %s16
  %20 = sst [smem:[#allocation2]] %s14
  $region1: #{decoder_forward.1} parent=0
    #allocation3 [shape = 'u8[8192]{0}', space=smem, size = 0x2000, scoped, tag = 'input window, operand 13, single buffered']
    #allocation4 [shape = 's32[2]{0}', space=sflag, size = 0x8, scoped, tag = 'scoped memory for decoder_forward.1']
    %21 = vsyncpa [#allocation4], 0
    loop: start=0, step=1, limit=4
    $region2: #{decoder_forward.1} parent=1 // loop_pre_header
      _
    $region3: #{decoder_forward.1} parent=1 // loop_header
      %s23 = sphi 0, %s27
      %p24 = scmp.ge.s32.totalorder %s23, 4
      %s33 = sphi 0, %s35
      %s36 = sphi 0, %s33
      %s37 = sphi 0, %s36
      %s53 = sphi 0, %s37
      %s57 = sphi 0, %s57
      %s59 = sphi 0, %s57
      %s60 = sphi 0, %s59
      %s74 = sphi 0, %s60
      %s78 = sphi 0, %s78
      %s80 = sphi 0, %s78
      %s81 = sphi 0, %s80
      %s95 = sphi 0, %s81
      %s99 = sphi 0, %s99
      %s101 = sphi 0, %s99
      %s102 = sphi 0, %s101
      %s116 = sphi 0, %s102
      %s120 = sphi 0, %s120
      %s122 = sphi 0, %s120
      %s123 = sphi 0, %s122
      %s137 = sphi 0, %s123
      %s141 = sphi 0, %s141
      %s143 = sphi 0, %s141
      %s144 = sphi 0, %s143
      %s158 = sphi 0, %s144
      %s162 = sphi 0, %s162
      %s164 = sphi 0, %s162
      %s165 = sphi 0, %s164
      %s179 = sphi 0, %s165
      %s183 = sphi 0, %s183
      %s185 = sphi 0, %s183
      %s186 = sphi 0, %s185
      %s200 = sphi 0, %s186
      %s204 = sphi 0, %s204
      %s206 = sphi 0, %s204
      %s207 = sphi 0, %s206
      %s221 = sphi 0, %s207
      %s225 = sphi 0, %s225
      %s227 = sphi 0, %s225
      %s228 = sphi 0, %s227
      %s242 = sphi 0, %s228
      %s246 = sphi 0, %s246
      %s248 = sphi 0, %s246
      %s249 = sphi 0, %s248
      %s263 = sphi 0, %s249
      %s267 = sphi 0, %s267
      %s269 = sphi 0, %s267
      %s270 = sphi 0, %s269
      %s284 = sphi 0, %s270
      %s288 = sphi 0, %s288
      %s290 = sphi 0, %s288
      %s291 = sphi 0, %s290
      %s305 = sphi 0, %s291
      %s309 = sphi 0, %s309
      %s311 = sphi 0, %s309
      %s312 = sphi 0, %s311
      %s326 = sphi 0, %s312
      %s330 = sphi 0, %s330
      %s332 = sphi 0, %s330
      %s333 = sphi 0, %s332
      %s347 = sphi 0, %s333
      %s353 = sphi 0, %s355
      %s356 = sphi 0, %s353
      %s357 = sphi 0, %s356
      %s373 = sphi 0, %s357
    $region4: #{decoder_forward.1} parent=1 // loop_header_branch
      %26 = sbr.rel (%p24) target = $region8
    $region5: #{decoder_forward.1} parent=1 // loop_body
      %s28 = ssub.s32 %s23, 1
      %s29 = ssub.s32 %s23, 2
      %s30 = sadd.s32 %s23, 1
      %s31 = ssub.s32 %s23, %s30
      %p32 = scmp.eq.s32.totalorder %s31, 0
      %s34 = sadd.s32 %s33, 1
      %s35 = scalar_select %p32, %s33, %s34
      %p38 = pneg %p32
      %p39 = scmp.eq.s32.totalorder %s23, 1
      %p40 = por %p38, %p39
      %p41 = scmp.ne.s32.totalorder %s33, %s36
      %p42 = scmp.eq.s32.totalorder %s23, 0
      %p43 = por %p41, %p42
      %p44 = scmp.ne.s32.totalorder %s33, %s36
      %p45 = scmp.eq.s32.totalorder %s28, 1
      %p46 = por %p44, %p45
      %p47 = scmp.ne.s32.totalorder %s36, %s37
      %p48 = scmp.eq.s32.totalorder %s28, 0
      %p49 = por %p47, %p48
      %p50 = scmp.ne.s32.totalorder %s36, %s37
      %p51 = scmp.eq.s32.totalorder %s29, 1
      %p52 = por %p50, %p51
      %p54 = scmp.ne.s32.totalorder %s37, %s53
      %p55 = scmp.eq.s32.totalorder %s29, 0
      %p56 = por %p54, %p55
      %s58 = sadd.s32 %s57, 1
      %p61 = scmp.eq.s32.totalorder %s23, 1
      %p62 = scmp.ne.s32.totalorder %s57, %s59
      %p63 = scmp.eq.s32.totalorder %s23, 0
      %p64 = por %p62, %p63
      %p65 = scmp.ne.s32.totalorder %s57, %s59
      %p66 = scmp.eq.s32.totalorder %s28, 1
      %p67 = por %p65, %p66
      %p68 = scmp.ne.s32.totalorder %s59, %s60
      %p69 = scmp.eq.s32.totalorder %s28, 0
      %p70 = por %p68, %p69
      %p71 = scmp.ne.s32.totalorder %s59, %s60
      %p72 = scmp.eq.s32.totalorder %s29, 1
      %p73 = por %p71, %p72
      %p75 = scmp.ne.s32.totalorder %s60, %s74
      %p76 = scmp.eq.s32.totalorder %s29, 0
      %p77 = por %p75, %p76
      %s79 = sadd.s32 %s78, 1
      %p82 = scmp.eq.s32.totalorder %s23, 1
      %p83 = scmp.ne.s32.totalorder %s78, %s80
      %p84 = scmp.eq.s32.totalorder %s23, 0
      %p85 = por %p83, %p84
      %p86 = scmp.ne.s32.totalorder %s78, %s80
      %p87 = scmp.eq.s32.totalorder %s28, 1
      %p88 = por %p86, %p87
      %p89 = scmp.ne.s32.totalorder %s80, %s81
      %p90 = scmp.eq.s32.totalorder %s28, 0
      %p91 = por %p89, %p90
      %p92 = scmp.ne.s32.totalorder %s80, %s81
      %p93 = scmp.eq.s32.totalorder %s29, 1
      %p94 = por %p92, %p93
      %p96 = scmp.ne.s32.totalorder %s81, %s95
      %p97 = scmp.eq.s32.totalorder %s29, 0
      %p98 = por %p96, %p97
      %s100 = sadd.s32 %s99, 1
      %p103 = scmp.eq.s32.totalorder %s23, 1
      %p104 = scmp.ne.s32.totalorder %s99, %s101
      %p105 = scmp.eq.s32.totalorder %s23, 0
      %p106 = por %p104, %p105
      %p107 = scmp.ne.s32.totalorder %s99, %s101
      %p108 = scmp.eq.s32.totalorder %s28, 1
      %p109 = por %p107, %p108
      %p110 = scmp.ne.s32.totalorder %s101, %s102
      %p111 = scmp.eq.s32.totalorder %s28, 0
      %p112 = por %p110, %p111
      %p113 = scmp.ne.s32.totalorder %s101, %s102
      %p114 = scmp.eq.s32.totalorder %s29, 1
      %p115 = por %p113, %p114
      %p117 = scmp.ne.s32.totalorder %s102, %s116
      %p118 = scmp.eq.s32.totalorder %s29, 0
      %p119 = por %p117, %p118
      %s121 = sadd.s32 %s120, 1
      %p124 = scmp.eq.s32.totalorder %s23, 1
      %p125 = scmp.ne.s32.totalorder %s120, %s122
      %p126 = scmp.eq.s32.totalorder %s23, 0
      %p127 = por %p125, %p126
      %p128 = scmp.ne.s32.totalorder %s120, %s122
      %p129 = scmp.eq.s32.totalorder %s28, 1
      %p130 = por %p128, %p129
      %p131 = scmp.ne.s32.totalorder %s122, %s123
      %p132 = scmp.eq.s32.totalorder %s28, 0
      %p133 = por %p131, %p132
      %p134 = scmp.ne.s32.totalorder %s122, %s123
      %p135 = scmp.eq.s32.totalorder %s29, 1
      %p136 = por %p134, %p135
      %p138 = scmp.ne.s32.totalorder %s123, %s137
      %p139 = scmp.eq.s32.totalorder %s29, 0
      %p140 = por %p138, %p139
      %s142 = sadd.s32 %s141, 1
      %p145 = scmp.eq.s32.totalorder %s23, 1
      %p146 = scmp.ne.s32.totalorder %s141, %s143
      %p147 = scmp.eq.s32.totalorder %s23, 0
      %p148 = por %p146, %p147
      %p149 = scmp.ne.s32.totalorder %s141, %s143
      %p150 = scmp.eq.s32.totalorder %s28, 1
      %p151 = por %p149, %p150
      %p152 = scmp.ne.s32.totalorder %s143, %s144
      %p153 = scmp.eq.s32.totalorder %s28, 0
      %p154 = por %p152, %p153
      %p155 = scmp.ne.s32.totalorder %s143, %s144
      %p156 = scmp.eq.s32.totalorder %s29, 1
      %p157 = por %p155, %p156
      %p159 = scmp.ne.s32.totalorder %s144, %s158
      %p160 = scmp.eq.s32.totalorder %s29, 0
      %p161 = por %p159, %p160
      %s163 = sadd.s32 %s162, 1
      %p166 = scmp.eq.s32.totalorder %s23, 1
      %p167 = scmp.ne.s32.totalorder %s162, %s164
      %p168 = scmp.eq.s32.totalorder %s23, 0
      %p169 = por %p167, %p168
      %p170 = scmp.ne.s32.totalorder %s162, %s164
      %p171 = scmp.eq.s32.totalorder %s28, 1
      %p172 = por %p170, %p171
      %p173 = scmp.ne.s32.totalorder %s164, %s165
      %p174 = scmp.eq.s32.totalorder %s28, 0
      %p175 = por %p173, %p174
      %p176 = scmp.ne.s32.totalorder %s164, %s165
      %p177 = scmp.eq.s32.totalorder %s29, 1
      %p178 = por %p176, %p177
      %p180 = scmp.ne.s32.totalorder %s165, %s179
      %p181 = scmp.eq.s32.totalorder %s29, 0
      %p182 = por %p180, %p181
      %s184 = sadd.s32 %s183, 1
      %p187 = scmp.eq.s32.totalorder %s23, 1
      %p188 = scmp.ne.s32.totalorder %s183, %s185
      %p189 = scmp.eq.s32.totalorder %s23, 0
      %p190 = por %p188, %p189
      %p191 = scmp.ne.s32.totalorder %s183, %s185
      %p192 = scmp.eq.s32.totalorder %s28, 1
      %p193 = por %p191, %p192
      %p194 = scmp.ne.s32.totalorder %s185, %s186
      %p195 = scmp.eq.s32.totalorder %s28, 0
      %p196 = por %p194, %p195
      %p197 = scmp.ne.s32.totalorder %s185, %s186
      %p198 = scmp.eq.s32.totalorder %s29, 1
      %p199 = por %p197, %p198
      %p201 = scmp.ne.s32.totalorder %s186, %s200
      %p202 = scmp.eq.s32.totalorder %s29, 0
      %p203 = por %p201, %p202
      %s205 = sadd.s32 %s204, 1
      %p208 = scmp.eq.s32.totalorder %s23, 1
      %p209 = scmp.ne.s32.totalorder %s204, %s206
      %p210 = scmp.eq.s32.totalorder %s23, 0
      %p211 = por %p209, %p210
      %p212 = scmp.ne.s32.totalorder %s204, %s206
      %p213 = scmp.eq.s32.totalorder %s28, 1
      %p214 = por %p212, %p213
      %p215 = scmp.ne.s32.totalorder %s206, %s207
      %p216 = scmp.eq.s32.totalorder %s28, 0
      %p217 = por %p215, %p216
      %p218 = scmp.ne.s32.totalorder %s206, %s207
      %p219 = scmp.eq.s32.totalorder %s29, 1
      %p220 = por %p218, %p219
      %p222 = scmp.ne.s32.totalorder %s207, %s221
      %p223 = scmp.eq.s32.totalorder %s29, 0
      %p224 = por %p222, %p223
      %s226 = sadd.s32 %s225, 1
      %p229 = scmp.eq.s32.totalorder %s23, 1
      %p230 = scmp.ne.s32.totalorder %s225, %s227
      %p231 = scmp.eq.s32.totalorder %s23, 0
      %p232 = por %p230, %p231
      %p233 = scmp.ne.s32.totalorder %s225, %s227
      %p234 = scmp.eq.s32.totalorder %s28, 1
      %p235 = por %p233, %p234
      %p236 = scmp.ne.s32.totalorder %s227, %s228
      %p237 = scmp.eq.s32.totalorder %s28, 0
      %p238 = por %p236, %p237
      %p239 = scmp.ne.s32.totalorder %s227, %s228
      %p240 = scmp.eq.s32.totalorder %s29, 1
      %p241 = por %p239, %p240
      %p243 = scmp.ne.s32.totalorder %s228, %s242
      %p244 = scmp.eq.s32.totalorder %s29, 0
      %p245 = por %p243, %p244
      %s247 = sadd.s32 %s246, 1
      %p250 = scmp.eq.s32.totalorder %s23, 1
      %p251 = scmp.ne.s32.totalorder %s246, %s248
      %p252 = scmp.eq.s32.totalorder %s23, 0
      %p253 = por %p251, %p252
      %p254 = scmp.ne.s32.totalorder %s246, %s248
      %p255 = scmp.eq.s32.totalorder %s28, 1
      %p256 = por %p254, %p255
      %p257 = scmp.ne.s32.totalorder %s248, %s249
      %p258 = scmp.eq.s32.totalorder %s28, 0
      %p259 = por %p257, %p258
      %p260 = scmp.ne.s32.totalorder %s248, %s249
      %p261 = scmp.eq.s32.totalorder %s29, 1
      %p262 = por %p260, %p261
      %p264 = scmp.ne.s32.totalorder %s249, %s263
      %p265 = scmp.eq.s32.totalorder %s29, 0
      %p266 = por %p264, %p265
      %s268 = sadd.s32 %s267, 1
      %p271 = scmp.eq.s32.totalorder %s23, 1
      %p272 = scmp.ne.s32.totalorder %s267, %s269
      %p273 = scmp.eq.s32.totalorder %s23, 0
      %p274 = por %p272, %p273
      %p275 = scmp.ne.s32.totalorder %s267, %s269
      %p276 = scmp.eq.s32.totalorder %s28, 1
      %p277 = por %p275, %p276
      %p278 = scmp.ne.s32.totalorder %s269, %s270
      %p279 = scmp.eq.s32.totalorder %s28, 0
      %p280 = por %p278, %p279
      %p281 = scmp.ne.s32.totalorder %s269, %s270
      %p282 = scmp.eq.s32.totalorder %s29, 1
      %p283 = por %p281, %p282
      %p285 = scmp.ne.s32.totalorder %s270, %s284
      %p286 = scmp.eq.s32.totalorder %s29, 0
      %p287 = por %p285, %p286
      %s289 = sadd.s32 %s288, 1
      %p292 = scmp.eq.s32.totalorder %s23, 1
      %p293 = scmp.ne.s32.totalorder %s288, %s290
      %p294 = scmp.eq.s32.totalorder %s23, 0
      %p295 = por %p293, %p294
      %p296 = scmp.ne.s32.totalorder %s288, %s290
      %p297 = scmp.eq.s32.totalorder %s28, 1
      %p298 = por %p296, %p297
      %p299 = scmp.ne.s32.totalorder %s290, %s291
      %p300 = scmp.eq.s32.totalorder %s28, 0
      %p301 = por %p299, %p300
      %p302 = scmp.ne.s32.totalorder %s290, %s291
      %p303 = scmp.eq.s32.totalorder %s29, 1
      %p304 = por %p302, %p303
      %p306 = scmp.ne.s32.totalorder %s291, %s305
      %p307 = scmp.eq.s32.totalorder %s29, 0
      %p308 = por %p306, %p307
      %s310 = sadd.s32 %s309, 1
      %p313 = scmp.eq.s32.totalorder %s23, 1
      %p314 = scmp.ne.s32.totalorder %s309, %s311
      %p315 = scmp.eq.s32.totalorder %s23, 0
      %p316 = por %p314, %p315
      %p317 = scmp.ne.s32.totalorder %s309, %s311
      %p318 = scmp.eq.s32.totalorder %s28, 1
      %p319 = por %p317, %p318
      %p320 = scmp.ne.s32.totalorder %s311, %s312
      %p321 = scmp.eq.s32.totalorder %s28, 0
      %p322 = por %p320, %p321
      %p323 = scmp.ne.s32.totalorder %s311, %s312
      %p324 = scmp.eq.s32.totalorder %s29, 1
      %p325 = por %p323, %p324
      %p327 = scmp.ne.s32.totalorder %s312, %s326
      %p328 = scmp.eq.s32.totalorder %s29, 0
      %p329 = por %p327, %p328
      %s331 = sadd.s32 %s330, 1
      %p334 = scmp.eq.s32.totalorder %s23, 1
      %p335 = scmp.ne.s32.totalorder %s330, %s332
      %p336 = scmp.eq.s32.totalorder %s23, 0
      %p337 = por %p335, %p336
      %p338 = scmp.ne.s32.totalorder %s330, %s332
      %p339 = scmp.eq.s32.totalorder %s28, 1
      %p340 = por %p338, %p339
      %p341 = scmp.ne.s32.totalorder %s332, %s333
      %p342 = scmp.eq.s32.totalorder %s28, 0
      %p343 = por %p341, %p342
      %p344 = scmp.ne.s32.totalorder %s332, %s333
      %p345 = scmp.eq.s32.totalorder %s29, 1
      %p346 = por %p344, %p345
      %p348 = scmp.ne.s32.totalorder %s333, %s347
      %p349 = scmp.eq.s32.totalorder %s29, 0
      %p350 = por %p348, %p349
      %s351 = ssub.s32 %s23, %s30
      %p352 = scmp.eq.s32.totalorder %s351, 0
      %s354 = sadd.s32 %s353, 1
      %s355 = scalar_select %p352, %s353, %s354
      %p358 = pneg %p352
      %p359 = scmp.eq.s32.totalorder %s23, 1
      %p360 = por %p358, %p359
      %p361 = scmp.ne.s32.totalorder %s353, %s356
      %p362 = scmp.eq.s32.totalorder %s23, 0
      %p363 = por %p361, %p362
      %p364 = scmp.ne.s32.totalorder %s353, %s356
      %p365 = scmp.eq.s32.totalorder %s28, 1
      %p366 = por %p364, %p365
      %p367 = scmp.ne.s32.totalorder %s356, %s357
      %p368 = scmp.eq.s32.totalorder %s28, 0
      %p369 = por %p367, %p368
      %p370 = scmp.ne.s32.totalorder %s356, %s357
      %p371 = scmp.eq.s32.totalorder %s29, 1
      %p372 = por %p370, %p371
      %p374 = scmp.ne.s32.totalorder %s357, %s373
      %p375 = scmp.eq.s32.totalorder %s29, 0
      %p376 = por %p374, %p375
      %p377 = scmp.le.s32.totalorder 1, %s23
      %p378 = scmp.lt.s32.totalorder %s23, 3
      %p379 = pnand %p377, %p378
      %p380 = pneg %p379
      // Predicated region
      $region9: #{decoder_forward.1} parent=5 // pred_check
        _
      $region10: #{decoder_forward.1} parent=5 // pred_check_branch
        %382 = sbr.rel (%p379) target = $region12
      $region11: #{decoder_forward.1} parent=5 // pred_region
        %s383 = ssub.s32 %s23, 1
        // Predicated region
        $region13: #{decoder_forward.1} parent=11 // pred_check
          %p384 = pneg %p70
        $region14: #{decoder_forward.1} parent=11 // pred_check_branch
          %386 = sbr.rel (%p384) target = $region16
        $region15: #{decoder_forward.1} parent=11 // pred_region
          _
        $region16: #{decoder_forward.1} parent=11 // pred_fallthru
          _
        // Predicated region
        $region17: #{decoder_forward.1} parent=11 // pred_check
          %p387 = pneg %p91
        $region18: #{decoder_forward.1} parent=11 // pred_check_branch
          %389 = sbr.rel (%p387) target = $region20
        $region19: #{decoder_forward.1} parent=11 // pred_region
          _
        $region20: #{decoder_forward.1} parent=11 // pred_fallthru
          _
        // Predicated region
        $region21: #{decoder_forward.1} parent=11 // pred_check
          %p390 = pneg %p112
        $region22: #{decoder_forward.1} parent=11 // pred_check_branch
          %392 = sbr.rel (%p390) target = $region24
        $region23: #{decoder_forward.1} parent=11 // pred_region
          _
        $region24: #{decoder_forward.1} parent=11 // pred_fallthru
          _
        // Predicated region
        $region25: #{decoder_forward.1} parent=11 // pred_check
          %p393 = pneg %p133
        $region26: #{decoder_forward.1} parent=11 // pred_check_branch
          %395 = sbr.rel (%p393) target = $region28
        $region27: #{decoder_forward.1} parent=11 // pred_region
          _
        $region28: #{decoder_forward.1} parent=11 // pred_fallthru
          _
        // Predicated region
        $region29: #{decoder_forward.1} parent=11 // pred_check
          %p396 = pneg %p154
        $region30: #{decoder_forward.1} parent=11 // pred_check_branch
          %398 = sbr.rel (%p396) target = $region32
        $region31: #{decoder_forward.1} parent=11 // pred_region
          _
        $region32: #{decoder_forward.1} parent=11 // pred_fallthru
          _
        // Predicated region
        $region33: #{decoder_forward.1} parent=11 // pred_check
          %p399 = pneg %p175
        $region34: #{decoder_forward.1} parent=11 // pred_check_branch
          %401 = sbr.rel (%p399) target = $region36
        $region35: #{decoder_forward.1} parent=11 // pred_region
          _
        $region36: #{decoder_forward.1} parent=11 // pred_fallthru
          _
        // Predicated region
        $region37: #{decoder_forward.1} parent=11 // pred_check
          %p402 = pneg %p196
        $region38: #{decoder_forward.1} parent=11 // pred_check_branch
          %404 = sbr.rel (%p402) target = $region40
        $region39: #{decoder_forward.1} parent=11 // pred_region
          _
        $region40: #{decoder_forward.1} parent=11 // pred_fallthru
          _
        // Predicated region
        $region41: #{decoder_forward.1} parent=11 // pred_check
          %p405 = pneg %p217
        $region42: #{decoder_forward.1} parent=11 // pred_check_branch
          %407 = sbr.rel (%p405) target = $region44
        $region43: #{decoder_forward.1} parent=11 // pred_region
          _
        $region44: #{decoder_forward.1} parent=11 // pred_fallthru
          _
        // Predicated region
        $region45: #{decoder_forward.1} parent=11 // pred_check
          %p408 = pneg %p238
        $region46: #{decoder_forward.1} parent=11 // pred_check_branch
          %410 = sbr.rel (%p408) target = $region48
        $region47: #{decoder_forward.1} parent=11 // pred_region
          _
        $region48: #{decoder_forward.1} parent=11 // pred_fallthru
          _
        // Predicated region
        $region49: #{decoder_forward.1} parent=11 // pred_check
          %p411 = pneg %p259
        $region50: #{decoder_forward.1} parent=11 // pred_check_branch
          %413 = sbr.rel (%p411) target = $region52
        $region51: #{decoder_forward.1} parent=11 // pred_region
          _
        $region52: #{decoder_forward.1} parent=11 // pred_fallthru
          _
        // Predicated region
        $region53: #{decoder_forward.1} parent=11 // pred_check
          %p414 = pneg %p280
        $region54: #{decoder_forward.1} parent=11 // pred_check_branch
          %416 = sbr.rel (%p414) target = $region56
        $region55: #{decoder_forward.1} parent=11 // pred_region
          _
        $region56: #{decoder_forward.1} parent=11 // pred_fallthru
          _
        // Predicated region
        $region57: #{decoder_forward.1} parent=11 // pred_check
          %p417 = pneg %p301
        $region58: #{decoder_forward.1} parent=11 // pred_check_branch
          %419 = sbr.rel (%p417) target = $region60
        $region59: #{decoder_forward.1} parent=11 // pred_region
          _
        $region60: #{decoder_forward.1} parent=11 // pred_fallthru
          _
        // Predicated region
        $region61: #{decoder_forward.1} parent=11 // pred_check
          %p420 = pneg %p322
        $region62: #{decoder_forward.1} parent=11 // pred_check_branch
          %422 = sbr.rel (%p420) target = $region64
        $region63: #{decoder_forward.1} parent=11 // pred_region
          %s424 = ssub.s32 256, 256
          %425 = vsyncadd [#allocation4], %s424
          %s426 = sshll.u32 %s13, 4
          %s427 = int_to_ptr.vmem [resolvable:$true] %s426
          %432 = dma.vmem_to_smem %s427, 256, [#allocation3], [#allocation4], 128, 128, 8
        $region64: #{decoder_forward.1} parent=11 // pred_fallthru
          _
        // Predicated region
        $region65: #{decoder_forward.1} parent=11 // pred_check
          %p433 = pneg %p343
        $region66: #{decoder_forward.1} parent=11 // pred_check_branch
          %435 = sbr.rel (%p433) target = $region68
        $region67: #{decoder_forward.1} parent=11 // pred_region
          _
        $region68: #{decoder_forward.1} parent=11 // pred_fallthru
          _
      $region12: #{decoder_forward.1} parent=5 // pred_fallthru
        _
      %p436 = scmp.lt.s32.totalorder %s23, 2
      // Predicated region
      $region69: #{decoder_forward.1} parent=5 // pred_check
        %p437 = pneg %p436
      $region70: #{decoder_forward.1} parent=5 // pred_check_branch
        %439 = sbr.rel (%p437) target = $region72
      $region71: #{decoder_forward.1} parent=5 // pred_region
        // Predicated region
        $region73: #{decoder_forward.1} parent=71 // pred_check
          %p440 = pneg %p43
        $region74: #{decoder_forward.1} parent=71 // pred_check_branch
          %442 = sbr.rel (%p440) target = $region76
        $region75: #{decoder_forward.1} parent=71 // pred_region
          %p443 = scmp.lt.s32.totalorder %s23, 1
          %s444 = scalar_select %p443, %s23, 1
          %s445 = smul.addr %s444, 2
          %s446 = smul.addr %s445, 8
          %s447 = scalar_lea.vmem %s0, %s446
        $region76: #{decoder_forward.1} parent=71 // pred_fallthru
          _
      $region72: #{decoder_forward.1} parent=5 // pred_fallthru
        _
      %p448 = scmp.le.s32.totalorder 1, %s23
      %p449 = scmp.lt.s32.totalorder %s23, 3
      %p450 = pnand %p448, %p449
      %p451 = pneg %p450
      // Predicated region
      $region77: #{decoder_forward.1} parent=5 // pred_check
        _
      $region78: #{decoder_forward.1} parent=5 // pred_check_branch
        %453 = sbr.rel (%p450) target = $region80
      $region79: #{decoder_forward.1} parent=5 // pred_region
        %s454 = ssub.s32 %s23, 1
        // Predicated region
        $region81: #{decoder_forward.1} parent=79 // pred_check
          %p455 = pneg %p322
        $region82: #{decoder_forward.1} parent=79 // pred_check_branch
          %457 = sbr.rel (%p455) target = $region84
        $region83: #{decoder_forward.1} parent=79 // pred_region
          %458 = dma.done [#allocation4], 256
        $region84: #{decoder_forward.1} parent=79 // pred_fallthru
          _
        %459 = sfence
        %p460 = scmp.lt.s32.totalorder %s28, 1
        %s461 = scalar_select %p460, %s28, 1
        %s462 = smul.addr %s461, 2
        %s463 = smul.addr %s462, 8
        %s464 = scalar_lea.vmem %s0, %s463
        %p465 = pneg %p49
        %p466 = pneg %p46
        %p467 = pneg %p70
        %p468 = pneg %p67
        %p469 = pneg %p91
        %p470 = pneg %p88
        %p471 = pneg %p112
        %p472 = pneg %p109
        %p473 = pneg %p133
        %p474 = pneg %p130
        %p475 = pneg %p154
        %p476 = pneg %p151
        %p477 = pneg %p175
        %p478 = pneg %p172
        %p479 = pneg %p196
        %p480 = pneg %p193
        %p481 = pneg %p217
        %p482 = pneg %p214
        %p483 = pneg %p238
        %p484 = pneg %p235
        %p485 = pneg %p259
        %p486 = pneg %p256
        %p487 = pneg %p280
        %p488 = pneg %p277
        %p489 = pneg %p301
        %p490 = pneg %p298
        %p491 = pneg %p322
        %p492 = pneg %p319
        %p493 = pneg %p343
        %p494 = pneg %p340
        %p495 = pneg %p369
        %p496 = pneg %p366
        %p497 = scmp.lt.s32.totalorder %s28, 1
        %s498 = scalar_select %p497, %s28, 1
        %s499 = smul.addr %s498, 16
        %s500 = smul.addr %s499, 8
        %s501 = scalar_lea.vmem %s15, %s500
        %p502 = scmp.lt.s32.totalorder %s28, 1
        %s503 = scalar_select %p502, %s28, 1
        %s504 = smul.addr %s503, 2
        %s505 = smul.addr %s504, 8
        %s506 = scalar_lea.vmem %s0, %s505
        %p507 = scmp.lt.s32.totalorder %s28, 1
        %s508 = scalar_select %p507, %s28, 1
        %s509 = smul.addr %s508, 16
        %s510 = smul.addr %s509, 8
        %s511 = scalar_lea.vmem %s15, %s510
        %v512 = vld [vmem:[%s2] ss:$8 sm:$0xf]
        %v513 = vld [vmem:[%s2] ss:$8 sm:$0xf0]
        %v514 = vor.u32 %v512, %v513
        %s515 = scalar_lea.vmem %s2, 1
        %v516 = vld [vmem:[%s515] ss:$8 sm:$0xf]
        %v517 = vld [vmem:[%s515] ss:$8 sm:$0xf0]
        %v518 = vor.u32 %v516, %v517
        %s519 = scalar_lea.vmem %s2, 2
        %v520 = vld [vmem:[%s519] ss:$8 sm:$0xf]
        %v521 = vld [vmem:[%s519] ss:$8 sm:$0xf0]
        %v522 = vor.u32 %v520, %v521
        %s523 = scalar_lea.vmem %s2, 3
        %v524 = vld [vmem:[%s523] ss:$8 sm:$0xf]
        %v525 = vld [vmem:[%s523] ss:$8 sm:$0xf0]
        %v526 = vor.u32 %v524, %v525
        %s527 = scalar_lea.vmem %s2, 4
        %v528 = vld [vmem:[%s527] ss:$8 sm:$0xf]
        %v529 = vld [vmem:[%s527] ss:$8 sm:$0xf0]
        %v530 = vor.u32 %v528, %v529
        %s531 = scalar_lea.vmem %s2, 5
        %v532 = vld [vmem:[%s531] ss:$8 sm:$0xf]
        %v533 = vld [vmem:[%s531] ss:$8 sm:$0xf0]
        %v534 = vor.u32 %v532, %v533
        %s535 = scalar_lea.vmem %s2, 6
        %v536 = vld [vmem:[%s535] ss:$8 sm:$0xf]
        %v537 = vld [vmem:[%s535] ss:$8 sm:$0xf0]
        %v538 = vor.u32 %v536, %v537
        %s539 = scalar_lea.vmem %s2, 7
        %v540 = vld [vmem:[%s539] ss:$8 sm:$0xf]
        %v541 = vld [vmem:[%s539] ss:$8 sm:$0xf0]
        %v542 = vor.u32 %v540, %v541
        %s543 = scalar_lea.vmem %s2, 64
        %v544 = vld [vmem:[%s543] ss:$8 sm:$0xf]
        %v545 = vld [vmem:[%s543] ss:$8 sm:$0xf0]
        %v546 = vor.u32 %v544, %v545
        %v547 = vld [vmem:[%s506] sm:$0xff]
        %v548 = vld [vmem:[%s506 + $0x8] sm:$0xff]
        %v549 = vld [vmem:[%s1] sm:$0xff]
        %v550 = vld [vmem:[%s1 + $0x8] sm:$0xff]
        %v551 = vld [vmem:[%s1 + $0x10] sm:$0xff]
        %v552 = vld [vmem:[%s1 + $0x18] sm:$0xff]
        %v553 = vld [vmem:[%s1 + $0x20] sm:$0xff]
        %v554 = vld [vmem:[%s1 + $0x28] sm:$0xff]
        %v555 = vld [vmem:[%s1 + $0x30] sm:$0xff]
        %v556 = vld [vmem:[%s1 + $0x38] sm:$0xff]
        %v557 = vld [vmem:[%s1 + $0x40] sm:$0xff]
        %v558 = vld [vmem:[%s1 + $0x48] sm:$0xff]
        %v559 = vld [vmem:[%s1 + $0x50] sm:$0xff]
        %v560 = vld [vmem:[%s1 + $0x58] sm:$0xff]
        %v561 = vld [vmem:[%s1 + $0x60] sm:$0xff]
        %v562 = vld [vmem:[%s1 + $0x68] sm:$0xff]
        %v563 = vld [vmem:[%s1 + $0x70] sm:$0xff]
        %v564 = vld [vmem:[%s1 + $0x78] sm:$0xff]
        %v565 = vld [vmem:[%s1 + $0x80] sm:$0xff]
        %v566 = vld [vmem:[%s1 + $0x88] sm:$0xff]
        %v567 = vld [vmem:[%s1 + $0x90] sm:$0xff]
        %v568 = vld [vmem:[%s1 + $0x98] sm:$0xff]
        %v569 = vld [vmem:[%s1 + $0xa0] sm:$0xff]
        %v570 = vld [vmem:[%s1 + $0xa8] sm:$0xff]
        %v571 = vld [vmem:[%s1 + $0xb0] sm:$0xff]
        %v572 = vld [vmem:[%s1 + $0xb8] sm:$0xff]
        %v573 = vld [vmem:[%s1 + $0xc0] sm:$0xff]
        %v574 = vld [vmem:[%s1 + $0xc8] sm:$0xff]
        %v575 = vld [vmem:[%s1 + $0xd0] sm:$0xff]
        %v576 = vld [vmem:[%s1 + $0xd8] sm:$0xff]
        %v577 = vld [vmem:[%s1 + $0xe0] sm:$0xff]
        %v578 = vld [vmem:[%s1 + $0xe8] sm:$0xff]
        %v579 = vld [vmem:[%s1 + $0xf0] sm:$0xff]
        %v580 = vld [vmem:[%s1 + $0xf8] sm:$0xff]
        %v581 = vld [vmem:[%s1 + $0x100] sm:$0xff]
        %v582 = vld [vmem:[%s1 + $0x108] sm:$0xff]
        %v583 = vld [vmem:[%s1 + $0x110] sm:$0xff]
        %v584 = vld [vmem:[%s1 + $0x118] sm:$0xff]
        %v585 = vld [vmem:[%s1 + $0x120] sm:$0xff]
        %v586 = vld [vmem:[%s1 + $0x128] sm:$0xff]
        %v587 = vld [vmem:[%s1 + $0x130] sm:$0xff]
        %v588 = vld [vmem:[%s1 + $0x138] sm:$0xff]
        %v589 = vld [vmem:[%s1 + $0x140] sm:$0xff]
        %v590 = vld [vmem:[%s1 + $0x148] sm:$0xff]
        %v591 = vld [vmem:[%s1 + $0x150] sm:$0xff]
        %v592 = vld [vmem:[%s1 + $0x158] sm:$0xff]
        %v593 = vld [vmem:[%s1 + $0x160] sm:$0xff]
        %v594 = vld [vmem:[%s1 + $0x168] sm:$0xff]
        %v595 = vld [vmem:[%s1 + $0x170] sm:$0xff]
        %v596 = vld [vmem:[%s1 + $0x178] sm:$0xff]
        %v597 = vld [vmem:[%s1 + $0x180] sm:$0xff]
        %v598 = vld [vmem:[%s1 + $0x188] sm:$0xff]
        %v599 = vld [vmem:[%s1 + $0x190] sm:$0xff]
        %v600 = vld [vmem:[%s1 + $0x198] sm:$0xff]
        %v601 = vld [vmem:[%s1 + $0x1a0] sm:$0xff]
        %v602 = vld [vmem:[%s1 + $0x1a8] sm:$0xff]
        %v603 = vld [vmem:[%s1 + $0x1b0] sm:$0xff]
        %v604 = vld [vmem:[%s1 + $0x1b8] sm:$0xff]
        %v605 = vld [vmem:[%s1 + $0x1c0] sm:$0xff]
        %v606 = vld [vmem:[%s1 + $0x1c8] sm:$0xff]
        %v607 = vld [vmem:[%s1 + $0x1d0] sm:$0xff]
        %v608 = vld [vmem:[%s1 + $0x1d8] sm:$0xff]
        %v609 = vld [vmem:[%s1 + $0x1e0] sm:$0xff]
        %v610 = vld [vmem:[%s1 + $0x1e8] sm:$0xff]
        %v611 = vld [vmem:[%s1 + $0x1f0] sm:$0xff]
        %v612 = vld [vmem:[%s1 + $0x1f8] sm:$0xff]
        %v613 = vld [vmem:[%s1 + $0x200] sm:$0xff]
        %v614 = vld [vmem:[%s1 + $0x208] sm:$0xff]
        %v615 = vld [vmem:[%s1 + $0x210] sm:$0xff]
        %v616 = vld [vmem:[%s1 + $0x218] sm:$0xff]
        %v617 = vld [vmem:[%s1 + $0x220] sm:$0xff]
        %v618 = vld [vmem:[%s1 + $0x228] sm:$0xff]
        %v619 = vld [vmem:[%s1 + $0x230] sm:$0xff]
        %v620 = vld [vmem:[%s1 + $0x238] sm:$0xff]
        %v621 = vld [vmem:[%s1 + $0x240] sm:$0xff]
        %v622 = vld [vmem:[%s1 + $0x248] sm:$0xff]
        %v623 = vld [vmem:[%s1 + $0x250] sm:$0xff]
        %v624 = vld [vmem:[%s1 + $0x258] sm:$0xff]
        %v625 = vld [vmem:[%s1 + $0x260] sm:$0xff]
        %v626 = vld [vmem:[%s1 + $0x268] sm:$0xff]
        %v627 = vld [vmem:[%s1 + $0x270] sm:$0xff]
        %v628 = vld [vmem:[%s1 + $0x278] sm:$0xff]
        %v629 = vld [vmem:[%s1 + $0x280] sm:$0xff]
        %v630 = vld [vmem:[%s1 + $0x288] sm:$0xff]
        %v631 = vld [vmem:[%s1 + $0x290] sm:$0xff]
        %v632 = vld [vmem:[%s1 + $0x298] sm:$0xff]
        %v633 = vld [vmem:[%s1 + $0x2a0] sm:$0xff]
        %v634 = vld [vmem:[%s1 + $0x2a8] sm:$0xff]
        %v635 = vld [vmem:[%s1 + $0x2b0] sm:$0xff]
        %v636 = vld [vmem:[%s1 + $0x2b8] sm:$0xff]
        %v637 = vld [vmem:[%s1 + $0x2c0] sm:$0xff]
        %v638 = vld [vmem:[%s1 + $0x2c8] sm:$0xff]
        %v639 = vld [vmem:[%s1 + $0x2d0] sm:$0xff]
        %v640 = vld [vmem:[%s1 + $0x2d8] sm:$0xff]
        %v641 = vld [vmem:[%s1 + $0x2e0] sm:$0xff]
        %v642 = vld [vmem:[%s1 + $0x2e8] sm:$0xff]
        %v643 = vld [vmem:[%s1 + $0x2f0] sm:$0xff]
        %v644 = vld [vmem:[%s1 + $0x2f8] sm:$0xff]
        %v645 = vld [vmem:[%s1 + $0x300] sm:$0xff]
        %v646 = vld [vmem:[%s1 + $0x308] sm:$0xff]
        %v647 = vld [vmem:[%s1 + $0x310] sm:$0xff]
        %v648 = vld [vmem:[%s1 + $0x318] sm:$0xff]
        %v649 = vld [vmem:[%s1 + $0x320] sm:$0xff]
        %v650 = vld [vmem:[%s1 + $0x328] sm:$0xff]
        %v651 = vld [vmem:[%s1 + $0x330] sm:$0xff]
        %v652 = vld [vmem:[%s1 + $0x338] sm:$0xff]
        %v653 = vld [vmem:[%s1 + $0x340] sm:$0xff]
        %v654 = vld [vmem:[%s1 + $0x348] sm:$0xff]
        %v655 = vld [vmem:[%s1 + $0x350] sm:$0xff]
        %v656 = vld [vmem:[%s1 + $0x358] sm:$0xff]
        %v657 = vld [vmem:[%s1 + $0x360] sm:$0xff]
        %v658 = vld [vmem:[%s1 + $0x368] sm:$0xff]
        %v659 = vld [vmem:[%s1 + $0x370] sm:$0xff]
        %v660 = vld [vmem:[%s1 + $0x378] sm:$0xff]
        %v661 = vld [vmem:[%s1 + $0x380] sm:$0xff]
        %v662 = vld [vmem:[%s1 + $0x388] sm:$0xff]
        %v663 = vld [vmem:[%s1 + $0x390] sm:$0xff]
        %v664 = vld [vmem:[%s1 + $0x398] sm:$0xff]
        %v665 = vld [vmem:[%s1 + $0x3a0] sm:$0xff]
        %v666 = vld [vmem:[%s1 + $0x3a8] sm:$0xff]
        %v667 = vld [vmem:[%s1 + $0x3b0] sm:$0xff]
        %v668 = vld [vmem:[%s1 + $0x3b8] sm:$0xff]
        %v669 = vld [vmem:[%s1 + $0x3c0] sm:$0xff]
        %v670 = vld [vmem:[%s1 + $0x3c8] sm:$0xff]
        %v671 = vld [vmem:[%s1 + $0x3d0] sm:$0xff]
        %v672 = vld [vmem:[%s1 + $0x3d8] sm:$0xff]
        %v673 = vld [vmem:[%s1 + $0x3e0] sm:$0xff]
        %v674 = vld [vmem:[%s1 + $0x3e8] sm:$0xff]
        %v675 = vld [vmem:[%s1 + $0x3f0] sm:$0xff]
        %v676 = vld [vmem:[%s1 + $0x3f8] sm:$0xff]
        %v677 = vld [vmem:[%s1 + $0x400] sm:$0xff]
        %v678 = vld [vmem:[%s1 + $0x408] sm:$0xff]
        %v679 = vld [vmem:[%s1 + $0x410] sm:$0xff]
        %v680 = vld [vmem:[%s1 + $0x418] sm:$0xff]
        %v681 = vld [vmem:[%s1 + $0x420] sm:$0xff]
        %v682 = vld [vmem:[%s1 + $0x428] sm:$0xff]
        %v683 = vld [vmem:[%s1 + $0x430] sm:$0xff]
        %v684 = vld [vmem:[%s1 + $0x438] sm:$0xff]
        %v685 = vld [vmem:[%s1 + $0x440] sm:$0xff]
        %v686 = vld [vmem:[%s1 + $0x448] sm:$0xff]
        %v687 = vld [vmem:[%s1 + $0x450] sm:$0xff]
        %v688 = vld [vmem:[%s1 + $0x458] sm:$0xff]
        %v689 = vld [vmem:[%s1 + $0x460] sm:$0xff]
        %v690 = vld [vmem:[%s1 + $0x468] sm:$0xff]
        %v691 = vld [vmem:[%s1 + $0x470] sm:$0xff]
        %v692 = vld [vmem:[%s1 + $0x478] sm:$0xff]
        %v693 = vld [vmem:[%s1 + $0x480] sm:$0xff]
        %v694 = vld [vmem:[%s1 + $0x488] sm:$0xff]
        %v695 = vld [vmem:[%s1 + $0x490] sm:$0xff]
        %v696 = vld [vmem:[%s1 + $0x498] sm:$0xff]
        %v697 = vld [vmem:[%s1 + $0x4a0] sm:$0xff]
        %v698 = vld [vmem:[%s1 + $0x4a8] sm:$0xff]
        %v699 = vld [vmem:[%s1 + $0x4b0] sm:$0xff]
        %v700 = vld [vmem:[%s1 + $0x4b8] sm:$0xff]
        %v701 = vld [vmem:[%s1 + $0x4c0] sm:$0xff]
        %v702 = vld [vmem:[%s1 + $0x4c8] sm:$0xff]
        %v703 = vld [vmem:[%s1 + $0x4d0] sm:$0xff]
        %v704 = vld [vmem:[%s1 + $0x4d8] sm:$0xff]
        %v705 = vld [vmem:[%s1 + $0x4e0] sm:$0xff]
        %v706 = vld [vmem:[%s1 + $0x4e8] sm:$0xff]
        %v707 = vld [vmem:[%s1 + $0x4f0] sm:$0xff]
        %v708 = vld [vmem:[%s1 + $0x4f8] sm:$0xff]
        %v709 = vld [vmem:[%s1 + $0x500] sm:$0xff]
        %v710 = vld [vmem:[%s1 + $0x508] sm:$0xff]
        %v711 = vld [vmem:[%s1 + $0x510] sm:$0xff]
        %v712 = vld [vmem:[%s1 + $0x518] sm:$0xff]
        %v713 = vld [vmem:[%s1 + $0x520] sm:$0xff]
        %v714 = vld [vmem:[%s1 + $0x528] sm:$0xff]
        %v715 = vld [vmem:[%s1 + $0x530] sm:$0xff]
        %v716 = vld [vmem:[%s1 + $0x538] sm:$0xff]
        %v717 = vld [vmem:[%s1 + $0x540] sm:$0xff]
        %v718 = vld [vmem:[%s1 + $0x548] sm:$0xff]
        %v719 = vld [vmem:[%s1 + $0x550] sm:$0xff]
        %v720 = vld [vmem:[%s1 + $0x558] sm:$0xff]
        %v721 = vld [vmem:[%s1 + $0x560] sm:$0xff]
        %v722 = vld [vmem:[%s1 + $0x568] sm:$0xff]
        %v723 = vld [vmem:[%s1 + $0x570] sm:$0xff]
        %v724 = vld [vmem:[%s1 + $0x578] sm:$0xff]
        %v725 = vld [vmem:[%s1 + $0x580] sm:$0xff]
        %v726 = vld [vmem:[%s1 + $0x588] sm:$0xff]
        %v727 = vld [vmem:[%s1 + $0x590] sm:$0xff]
        %v728 = vld [vmem:[%s1 + $0x598] sm:$0xff]
        %v729 = vld [vmem:[%s1 + $0x5a0] sm:$0xff]
        %v730 = vld [vmem:[%s1 + $0x5a8] sm:$0xff]
        %v731 = vld [vmem:[%s1 + $0x5b0] sm:$0xff]
        %v732 = vld [vmem:[%s1 + $0x5b8] sm:$0xff]
        %v733 = vld [vmem:[%s1 + $0x5c0] sm:$0xff]
        %v734 = vld [vmem:[%s1 + $0x5c8] sm:$0xff]
        %v735 = vld [vmem:[%s1 + $0x5d0] sm:$0xff]
        %v736 = vld [vmem:[%s1 + $0x5d8] sm:$0xff]
        %v737 = vld [vmem:[%s1 + $0x5e0] sm:$0xff]
        %v738 = vld [vmem:[%s1 + $0x5e8] sm:$0xff]
        %v739 = vld [vmem:[%s1 + $0x5f0] sm:$0xff]
        %v740 = vld [vmem:[%s1 + $0x5f8] sm:$0xff]
        %v741 = vld [vmem:[%s1 + $0x600] sm:$0xff]
        %v742 = vld [vmem:[%s1 + $0x608] sm:$0xff]
        %v743 = vld [vmem:[%s1 + $0x610] sm:$0xff]
        %v744 = vld [vmem:[%s1 + $0x618] sm:$0xff]
        %v745 = vld [vmem:[%s1 + $0x620] sm:$0xff]
        %v746 = vld [vmem:[%s1 + $0x628] sm:$0xff]
        %v747 = vld [vmem:[%s1 + $0x630] sm:$0xff]
        %v748 = vld [vmem:[%s1 + $0x638] sm:$0xff]
        %v749 = vld [vmem:[%s1 + $0x640] sm:$0xff]
        %v750 = vld [vmem:[%s1 + $0x648] sm:$0xff]
        %v751 = vld [vmem:[%s1 + $0x650] sm:$0xff]
        %v752 = vld [vmem:[%s1 + $0x658] sm:$0xff]
        %v753 = vld [vmem:[%s1 + $0x660] sm:$0xff]
        %v754 = vld [vmem:[%s1 + $0x668] sm:$0xff]
        %v755 = vld [vmem:[%s1 + $0x670] sm:$0xff]
        %v756 = vld [vmem:[%s1 + $0x678] sm:$0xff]
        %v757 = vld [vmem:[%s1 + $0x680] sm:$0xff]
        %v758 = vld [vmem:[%s1 + $0x688] sm:$0xff]
        %v759 = vld [vmem:[%s1 + $0x690] sm:$0xff]
        %v760 = vld [vmem:[%s1 + $0x698] sm:$0xff]
        %v761 = vld [vmem:[%s1 + $0x6a0] sm:$0xff]
        %v762 = vld [vmem:[%s1 + $0x6a8] sm:$0xff]
        %v763 = vld [vmem:[%s1 + $0x6b0] sm:$0xff]
        %v764 = vld [vmem:[%s1 + $0x6b8] sm:$0xff]
        %v765 = vld [vmem:[%s1 + $0x6c0] sm:$0xff]
        %v766 = vld [vmem:[%s1 + $0x6c8] sm:$0xff]
        %v767 = vld [vmem:[%s1 + $0x6d0] sm:$0xff]
        %v768 = vld [vmem:[%s1 + $0x6d8] sm:$0xff]
        %v769 = vld [vmem:[%s1 + $0x6e0] sm:$0xff]
        %v770 = vld [vmem:[%s1 + $0x6e8] sm:$0xff]
        %v771 = vld [vmem:[%s1 + $0x6f0] sm:$0xff]
        %v772 = vld [vmem:[%s1 + $0x6f8] sm:$0xff]
        %v773 = vld [vmem:[%s1 + $0x700] sm:$0xff]
        %v774 = vld [vmem:[%s1 + $0x708] sm:$0xff]
        %v775 = vld [vmem:[%s1 + $0x710] sm:$0xff]
        %v776 = vld [vmem:[%s1 + $0x718] sm:$0xff]
        %v777 = vld [vmem:[%s1 + $0x720] sm:$0xff]
        %v778 = vld [vmem:[%s1 + $0x728] sm:$0xff]
        %v779 = vld [vmem:[%s1 + $0x730] sm:$0xff]
        %v780 = vld [vmem:[%s1 + $0x738] sm:$0xff]
        %v781 = vld [vmem:[%s1 + $0x740] sm:$0xff]
        %v782 = vld [vmem:[%s1 + $0x748] sm:$0xff]
        %v783 = vld [vmem:[%s1 + $0x750] sm:$0xff]
        %v784 = vld [vmem:[%s1 + $0x758] sm:$0xff]
        %v785 = vld [vmem:[%s1 + $0x760] sm:$0xff]
        %v786 = vld [vmem:[%s1 + $0x768] sm:$0xff]
        %v787 = vld [vmem:[%s1 + $0x770] sm:$0xff]
        %v788 = vld [vmem:[%s1 + $0x778] sm:$0xff]
        %v789 = vld [vmem:[%s1 + $0x780] sm:$0xff]
        %v790 = vld [vmem:[%s1 + $0x788] sm:$0xff]
        %v791 = vld [vmem:[%s1 + $0x790] sm:$0xff]
        %v792 = vld [vmem:[%s1 + $0x798] sm:$0xff]
        %v793 = vld [vmem:[%s1 + $0x7a0] sm:$0xff]
        %v794 = vld [vmem:[%s1 + $0x7a8] sm:$0xff]
        %v795 = vld [vmem:[%s1 + $0x7b0] sm:$0xff]
        %v796 = vld [vmem:[%s1 + $0x7b8] sm:$0xff]
        %v797 = vld [vmem:[%s1 + $0x7c0] sm:$0xff]
        %v798 = vld [vmem:[%s1 + $0x7c8] sm:$0xff]
        %v799 = vld [vmem:[%s1 + $0x7d0] sm:$0xff]
        %v800 = vld [vmem:[%s1 + $0x7d8] sm:$0xff]
        %v801 = vld [vmem:[%s1 + $0x7e0] sm:$0xff]
        %v802 = vld [vmem:[%s1 + $0x7e8] sm:$0xff]
        %v803 = vld [vmem:[%s1 + $0x7f0] sm:$0xff]
        %v804 = vld [vmem:[%s1 + $0x7f8] sm:$0xff]
        %805 = vmatprep.subr.mxu0 %v550
        %806 = vmatpush1.msra.mxu0 %v549
        %807 = vmatprep.subr.mxu0 %v558
        %808 = vmatpush1.msra.mxu0 %v557
        %809 = vmatprep.subr.mxu0 %v566
        %810 = vmatpush1.msra.mxu0 %v565
        %811 = vmatprep.subr.mxu0 %v574
        %812 = vmatpush1.msra.mxu0 %v573
        %813 = vmatprep.subr.mxu0 %v582
        %814 = vmatpush1.msra.mxu0 %v581
        %815 = vmatprep.subr.mxu0 %v590
        %816 = vmatpush1.msra.mxu0 %v589
        %817 = vmatprep.subr.mxu0 %v598
        %818 = vmatpush1.msra.mxu0 %v597
        %819 = vmatprep.subr.mxu0 %v606
        %820 = vmatpush1.msra.mxu0 %v605
        %821 = vmatprep.subr.mxu0 %v614
        %822 = vmatpush1.msra.mxu0 %v613
        %823 = vmatprep.subr.mxu0 %v622
        %824 = vmatpush1.msra.mxu0 %v621
        %825 = vmatprep.subr.mxu0 %v630
        %826 = vmatpush1.msra.mxu0 %v629
        %827 = vmatprep.subr.mxu0 %v638
        %828 = vmatpush1.msra.mxu0 %v637
        %829 = vmatprep.subr.mxu0 %v646
        %830 = vmatpush1.msra.mxu0 %v645
        %831 = vmatprep.subr.mxu0 %v654
        %832 = vmatpush1.msra.mxu0 %v653
        %833 = vmatprep.subr.mxu0 %v662
        %834 = vmatpush1.msra.mxu0 %v661
        %835 = vmatprep.subr.mxu0 %v670
        %836 = vmatpush1.msra.mxu0 %v669
        %837 = vmatprep.subr.mxu0 %v678
        %838 = vmatpush1.msra.mxu0 %v677
        %839 = vmatprep.subr.mxu0 %v686
        %840 = vmatpush1.msra.mxu0 %v685
        %841 = vmatprep.subr.mxu0 %v694
        %842 = vmatpush1.msra.mxu0 %v693
        %843 = vmatprep.subr.mxu0 %v702
        %844 = vmatpush1.msra.mxu0 %v701
        %845 = vmatprep.subr.mxu0 %v710
        %846 = vmatpush1.msra.mxu0 %v709
        %847 = vmatprep.subr.mxu0 %v718
        %848 = vmatpush1.msra.mxu0 %v717
        %849 = vmatprep.subr.mxu0 %v726
        %850 = vmatpush1.msra.mxu0 %v725
        %851 = vmatprep.subr.mxu0 %v734
        %852 = vmatpush1.msra.mxu0 %v733
        %853 = vmatprep.subr.mxu0 %v742
        %854 = vmatpush1.msra.mxu0 %v741
        %855 = vmatprep.subr.mxu0 %v750
        %856 = vmatpush1.msra.mxu0 %v749
        %857 = vmatprep.subr.mxu0 %v758
        %858 = vmatpush1.msra.mxu0 %v757
        %859 = vmatprep.subr.mxu0 %v766
        %860 = vmatpush1.msra.mxu0 %v765
        %861 = vmatprep.subr.mxu0 %v774
        %862 = vmatpush1.msra.mxu0 %v773
        %863 = vmatprep.subr.mxu0 %v782
        %864 = vmatpush1.msra.mxu0 %v781
        %865 = vmatprep.subr.mxu0 %v790
        %866 = vmatpush1.msra.mxu0 %v789
        %867 = vmatprep.subr.mxu0 %v798
        %868 = vmatpush1.msra.mxu0 %v797
        %869 = vmatprep.mubr.f32.mxu0 %v548
        %870 = vmatmul.mubr.f32.gmra.mrb[0].mxu0 %v547
        %v871 = vpop.f32.mrb[0].mxu0
        %v872 = vadd.f32 0.0, %v871
        %v873 = vpop.f32.mrb[0].mxu0
        %v874 = vadd.f32 0.0, %v873
        %875 = vdwg.mxu0
        %876 = vmatprep.subr.mxu0 %v552
        %877 = vmatpush1.msra.mxu0 %v551
        %878 = vmatprep.subr.mxu0 %v560
        %879 = vmatpush1.msra.mxu0 %v559
        %880 = vmatprep.subr.mxu0 %v568
        %881 = vmatpush1.msra.mxu0 %v567
        %882 = vmatprep.subr.mxu0 %v576
        %883 = vmatpush1.msra.mxu0 %v575
        %884 = vmatprep.subr.mxu0 %v584
        %885 = vmatpush1.msra.mxu0 %v583
        %886 = vmatprep.subr.mxu0 %v592
        %887 = vmatpush1.msra.mxu0 %v591
        %888 = vmatprep.subr.mxu0 %v600
        %889 = vmatpush1.msra.mxu0 %v599
        %890 = vmatprep.subr.mxu0 %v608
        %891 = vmatpush1.msra.mxu0 %v607
        %892 = vmatprep.subr.mxu0 %v616
        %893 = vmatpush1.msra.mxu0 %v615
        %894 = vmatprep.subr.mxu0 %v624
        %895 = vmatpush1.msra.mxu0 %v623
        %896 = vmatprep.subr.mxu0 %v632
        %897 = vmatpush1.msra.mxu0 %v631
        %898 = vmatprep.subr.mxu0 %v640
        %899 = vmatpush1.msra.mxu0 %v639
        %900 = vmatprep.subr.mxu0 %v648
        %901 = vmatpush1.msra.mxu0 %v647
        %902 = vmatprep.subr.mxu0 %v656
        %903 = vmatpush1.msra.mxu0 %v655
        %904 = vmatprep.subr.mxu0 %v664
        %905 = vmatpush1.msra.mxu0 %v663
        %906 = vmatprep.subr.mxu0 %v672
        %907 = vmatpush1.msra.mxu0 %v671
        %908 = vmatprep.subr.mxu0 %v680
        %909 = vmatpush1.msra.mxu0 %v679
        %910 = vmatprep.subr.mxu0 %v688
        %911 = vmatpush1.msra.mxu0 %v687
        %912 = vmatprep.subr.mxu0 %v696
        %913 = vmatpush1.msra.mxu0 %v695
        %914 = vmatprep.subr.mxu0 %v704
        %915 = vmatpush1.msra.mxu0 %v703
        %916 = vmatprep.subr.mxu0 %v712
        %917 = vmatpush1.msra.mxu0 %v711
        %918 = vmatprep.subr.mxu0 %v720
        %919 = vmatpush1.msra.mxu0 %v719
        %920 = vmatprep.subr.mxu0 %v728
        %921 = vmatpush1.msra.mxu0 %v727
        %922 = vmatprep.subr.mxu0 %v736
        %923 = vmatpush1.msra.mxu0 %v735
        %924 = vmatprep.subr.mxu0 %v744
        %925 = vmatpush1.msra.mxu0 %v743
        %926 = vmatprep.subr.mxu0 %v752
        %927 = vmatpush1.msra.mxu0 %v751
        %928 = vmatprep.subr.mxu0 %v760
        %929 = vmatpush1.msra.mxu0 %v759
        %930 = vmatprep.subr.mxu0 %v768
        %931 = vmatpush1.msra.mxu0 %v767
        %932 = vmatprep.subr.mxu0 %v776
        %933 = vmatpush1.msra.mxu0 %v775
        %934 = vmatprep.subr.mxu0 %v784
        %935 = vmatpush1.msra.mxu0 %v783
        %936 = vmatprep.subr.mxu0 %v792
        %937 = vmatpush1.msra.mxu0 %v791
        %938 = vmatprep.subr.mxu0 %v800
        %939 = vmatpush1.msra.mxu0 %v799
        %940 = vmatprep.mubr.f32.mxu0 %v548
        %941 = vmatmul.mubr.f32.gmra.mrb[0].mxu0 %v547
        %v942 = vpop.f32.mrb[0].mxu0
        %v943 = vadd.f32 0.0, %v942
        %v944 = vpop.f32.mrb[0].mxu0
        %v945 = vadd.f32 0.0, %v944
        %946 = vdwg.mxu0
        %947 = vmatprep.subr.mxu0 %v554
        %948 = vmatpush1.msra.mxu0 %v553
        %949 = vmatprep.subr.mxu0 %v562
        %950 = vmatpush1.msra.mxu0 %v561
        %951 = vmatprep.subr.mxu0 %v570
        %952 = vmatpush1.msra.mxu0 %v569
        %953 = vmatprep.subr.mxu0 %v578
        %954 = vmatpush1.msra.mxu0 %v577
        %955 = vmatprep.subr.mxu0 %v586
        %956 = vmatpush1.msra.mxu0 %v585
        %957 = vmatprep.subr.mxu0 %v594
        %958 = vmatpush1.msra.mxu0 %v593
        %959 = vmatprep.subr.mxu0 %v602
        %960 = vmatpush1.msra.mxu0 %v601
        %961 = vmatprep.subr.mxu0 %v610
        %962 = vmatpush1.msra.mxu0 %v609
        %963 = vmatprep.subr.mxu0 %v618
        %964 = vmatpush1.msra.mxu0 %v617
        %965 = vmatprep.subr.mxu0 %v626
        %966 = vmatpush1.msra.mxu0 %v625
        %967 = vmatprep.subr.mxu0 %v634
        %968 = vmatpush1.msra.mxu0 %v633
        %969 = vmatprep.subr.mxu0 %v642
        %970 = vmatpush1.msra.mxu0 %v641
        %971 = vmatprep.subr.mxu0 %v650
        %972 = vmatpush1.msra.mxu0 %v649
        %973 = vmatprep.subr.mxu0 %v658
        %974 = vmatpush1.msra.mxu0 %v657
        %975 = vmatprep.subr.mxu0 %v666
        %976 = vmatpush1.msra.mxu0 %v665
        %977 = vmatprep.subr.mxu0 %v674
        %978 = vmatpush1.msra.mxu0 %v673
        %979 = vmatprep.subr.mxu0 %v682
        %980 = vmatpush1.msra.mxu0 %v681
        %981 = vmatprep.subr.mxu0 %v690
        %982 = vmatpush1.msra.mxu0 %v689
        %983 = vmatprep.subr.mxu0 %v698
        %984 = vmatpush1.msra.mxu0 %v697
        %985 = vmatprep.subr.mxu0 %v706
        %986 = vmatpush1.msra.mxu0 %v705
        %987 = vmatprep.subr.mxu0 %v714
        %988 = vmatpush1.msra.mxu0 %v713
        %989 = vmatprep.subr.mxu0 %v722
        %990 = vmatpush1.msra.mxu0 %v721
        %991 = vmatprep.subr.mxu0 %v730
        %992 = vmatpush1.msra.mxu0 %v729
        %993 = vmatprep.subr.mxu0 %v738
        %994 = vmatpush1.msra.mxu0 %v737
        %995 = vmatprep.subr.mxu0 %v746
        %996 = vmatpush1.msra.mxu0 %v745
        %997 = vmatprep.subr.mxu0 %v754
        %998 = vmatpush1.msra.mxu0 %v753
        %999 = vmatprep.subr.mxu0 %v762
        %1000 = vmatpush1.msra.mxu0 %v761
        %1001 = vmatprep.subr.mxu0 %v770
        %1002 = vmatpush1.msra.mxu0 %v769
        %1003 = vmatprep.subr.mxu0 %v778
        %1004 = vmatpush1.msra.mxu0 %v777
        %1005 = vmatprep.subr.mxu0 %v786
        %1006 = vmatpush1.msra.mxu0 %v785
        %1007 = vmatprep.subr.mxu0 %v794
        %1008 = vmatpush1.msra.mxu0 %v793
        %1009 = vmatprep.subr.mxu0 %v802
        %1010 = vmatpush1.msra.mxu0 %v801
        %1011 = vmatprep.mubr.f32.mxu0 %v548
        %1012 = vmatmul.mubr.f32.gmra.mrb[0].mxu0 %v547
        %v1013 = vpop.f32.mrb[0].mxu0
        %v1014 = vadd.f32 0.0, %v1013
        %v1015 = vpop.f32.mrb[0].mxu0
        %v1016 = vadd.f32 0.0, %v1015
        %1017 = vdwg.mxu0
        %1018 = vmatprep.subr.mxu0 %v556
        %1019 = vmatpush1.msra.mxu0 %v555
        %1020 = vmatprep.subr.mxu0 %v564
        %1021 = vmatpush1.msra.mxu0 %v563
        %1022 = vmatprep.subr.mxu0 %v572
        %1023 = vmatpush1.msra.mxu0 %v571
        %1024 = vmatprep.subr.mxu0 %v580
        %1025 = vmatpush1.msra.mxu0 %v579
        %1026 = vmatprep.subr.mxu0 %v588
        %1027 = vmatpush1.msra.mxu0 %v587
        %1028 = vmatprep.subr.mxu0 %v596
        %1029 = vmatpush1.msra.mxu0 %v595
        %1030 = vmatprep.subr.mxu0 %v604
        %1031 = vmatpush1.msra.mxu0 %v603
        %1032 = vmatprep.subr.mxu0 %v612
        %1033 = vmatpush1.msra.mxu0 %v611
        %1034 = vmatprep.subr.mxu0 %v620
        %1035 = vmatpush1.msra.mxu0 %v619
        %1036 = vmatprep.subr.mxu0 %v628
        %1037 = vmatpush1.msra.mxu0 %v627
        %1038 = vmatprep.subr.mxu0 %v636
        %1039 = vmatpush1.msra.mxu0 %v635
        %1040 = vmatprep.subr.mxu0 %v644
        %1041 = vmatpush1.msra.mxu0 %v643
        %1042 = vmatprep.subr.mxu0 %v652
        %1043 = vmatpush1.msra.mxu0 %v651
        %1044 = vmatprep.subr.mxu0 %v660
        %1045 = vmatpush1.msra.mxu0 %v659
        %1046 = vmatprep.subr.mxu0 %v668
        %1047 = vmatpush1.msra.mxu0 %v667
        %1048 = vmatprep.subr.mxu0 %v676
        %1049 = vmatpush1.msra.mxu0 %v675
        %1050 = vmatprep.subr.mxu0 %v684
        %1051 = vmatpush1.msra.mxu0 %v683
        %1052 = vmatprep.subr.mxu0 %v692
        %1053 = vmatpush1.msra.mxu0 %v691
        %1054 = vmatprep.subr.mxu0 %v700
        %1055 = vmatpush1.msra.mxu0 %v699
        %1056 = vmatprep.subr.mxu0 %v708
        %1057 = vmatpush1.msra.mxu0 %v707
        %1058 = vmatprep.subr.mxu0 %v716
        %1059 = vmatpush1.msra.mxu0 %v715
        %1060 = vmatprep.subr.mxu0 %v724
        %1061 = vmatpush1.msra.mxu0 %v723
        %1062 = vmatprep.subr.mxu0 %v732
        %1063 = vmatpush1.msra.mxu0 %v731
        %1064 = vmatprep.subr.mxu0 %v740
        %1065 = vmatpush1.msra.mxu0 %v739
        %1066 = vmatprep.subr.mxu0 %v748
        %1067 = vmatpush1.msra.mxu0 %v747
        %1068 = vmatprep.subr.mxu0 %v756
        %1069 = vmatpush1.msra.mxu0 %v755
        %1070 = vmatprep.subr.mxu0 %v764
        %1071 = vmatpush1.msra.mxu0 %v763
        %1072 = vmatprep.subr.mxu0 %v772
        %1073 = vmatpush1.msra.mxu0 %v771
        %1074 = vmatprep.subr.mxu0 %v780
        %1075 = vmatpush1.msra.mxu0 %v779
        %1076 = vmatprep.subr.mxu0 %v788
        %1077 = vmatpush1.msra.mxu0 %v787
        %1078 = vmatprep.subr.mxu0 %v796
        %1079 = vmatpush1.msra.mxu0 %v795
        %1080 = vmatprep.subr.mxu0 %v804
        %1081 = vmatpush1.msra.mxu0 %v803
        %1082 = vmatprep.mubr.f32.mxu0 %v548
        %1083 = vmatmul.mubr.f32.gmra.mrb[0].mxu0 %v547
        %v1084 = vpop.f32.mrb[0].mxu0
        %v1085 = vadd.f32 0.0, %v1084
        %v1086 = vpop.f32.mrb[0].mxu0
        %v1087 = vadd.f32 0.0, %v1086
        %1088 = vdwg.mxu0
        %v1089 = vld [vmem:[%s3] sm:$0xff]
        %v1090 = vld [vmem:[%s3 + $0x8] sm:$0xff]
        %v1091 = vld [vmem:[%s3 + $0x10] sm:$0xff]
        %1092 = vrot.lane.b32.xlu0 %v872, 33
        %v1093 = vpop.permute.xlu0 %1092
        %1094 = vrot.lane.b32.xlu0 %v874, 33
        %v1095 = vpop.permute.xlu0 %1094
        %1096 = vrot.lane.b32.xlu0 %v943, 33
        %v1097 = vpop.permute.xlu0 %1096
        %1098 = vrot.lane.b32.xlu0 %v945, 33
        %v1099 = vpop.permute.xlu0 %1098
        %1100 = vrot.lane.b32.xlu0 %v1014, 33
        %v1101 = vpop.permute.xlu0 %1100
        %1102 = vrot.lane.b32.xlu0 %v1016, 33
        %v1103 = vpop.permute.xlu0 %1102
        %1104 = vrot.lane.b32.xlu0 %v1085, 33
        %v1105 = vpop.permute.xlu0 %1104
        %1106 = vrot.lane.b32.xlu0 %v1087, 33
        %v1107 = vpop.permute.xlu0 %1106
        %v1108 = vlaneseq
        %v1109 = vand.u32 %v1108, 127
        %vm1110 = vcmp.lt.s32.totalorder %v1109, 33
        %v1111 = vsel %vm1110, %v1105, %v1107
        %v1112 = vsel %vm1110, %v1103, %v1105
        %v1113 = vsel %vm1110, %v1101, %v1103
        %v1114 = vsel %vm1110, %v1099, %v1101
        %v1115 = vsel %vm1110, %v1097, %v1099
        %v1116 = vsel %vm1110, %v1095, %v1097
        %v1117 = vsel %vm1110, %v1093, %v1095
        %v1118 = vsel %vm1110, %v1107, %v1093
        %v1120 = vlaneseq
        %v1121 = vshrl.u32 %v1120, 7
        %v1122 = vsub.s32 0, %v1121
        %v1123 = vrot.slane %v514, %v1122
        %v1124 = vlaneseq
        %v1125 = vshrl.u32 %v1124, 7
        %v1126 = vsub.s32 1, %v1125
        %v1127 = vrot.slane %v514, %v1126
        %v1128 = vlaneseq
        %v1129 = vshrl.u32 %v1128, 7
        %v1130 = vsub.s32 2, %v1129
        %v1131 = vrot.slane %v514, %v1130
        %v1132 = vlaneseq
        %v1133 = vshrl.u32 %v1132, 7
        %v1134 = vsub.s32 3, %v1133
        %v1135 = vrot.slane %v514, %v1134
        %v1136 = vlaneseq
        %v1137 = vshrl.u32 %v1136, 7
        %v1138 = vsub.s32 4, %v1137
        %v1139 = vrot.slane %v514, %v1138
        %v1140 = vlaneseq
        %v1141 = vshrl.u32 %v1140, 7
        %v1142 = vsub.s32 5, %v1141
        %v1143 = vrot.slane %v514, %v1142
        %v1144 = vlaneseq
        %v1145 = vshrl.u32 %v1144, 7
        %v1146 = vsub.s32 6, %v1145
        %v1147 = vrot.slane %v514, %v1146
        %v1148 = vlaneseq
        %v1149 = vshrl.u32 %v1148, 7
        %v1150 = vsub.s32 7, %v1149
        %v1151 = vrot.slane %v514, %v1150
        %v1160 = vmul.f32 %v1118, %v1123
        %v1161 = vmul.f32 %v1117, %v1127
        %v1162 = vmul.f32 %v1116, %v1131
        %v1163 = vmul.f32 %v1115, %v1135
        %v1164 = vmul.f32 %v1114, %v1139
        %v1165 = vmul.f32 %v1113, %v1143
        %v1166 = vmul.f32 %v1112, %v1147
        %v1167 = vmul.f32 %v1111, %v1151
        %1168 = vrot.lane.b32.xlu0 %v872, 32
        %v1169 = vpop.permute.xlu0 %1168
        %1170 = vrot.lane.b32.xlu0 %v874, 32
        %v1171 = vpop.permute.xlu0 %1170
        %1172 = vrot.lane.b32.xlu0 %v943, 32
        %v1173 = vpop.permute.xlu0 %1172
        %1174 = vrot.lane.b32.xlu0 %v945, 32
        %v1175 = vpop.permute.xlu0 %1174
        %1176 = vrot.lane.b32.xlu0 %v1014, 32
        %v1177 = vpop.permute.xlu0 %1176
        %1178 = vrot.lane.b32.xlu0 %v1016, 32
        %v1179 = vpop.permute.xlu0 %1178
        %1180 = vrot.lane.b32.xlu0 %v1085, 32
        %v1181 = vpop.permute.xlu0 %1180
        %1182 = vrot.lane.b32.xlu0 %v1087, 32
        %v1183 = vpop.permute.xlu0 %1182
        %vm1184 = vcmp.lt.s32.totalorder %v1109, 32
        %v1185 = vsel %vm1184, %v1181, %v1183
        %v1186 = vsel %vm1184, %v1179, %v1181
        %v1187 = vsel %vm1184, %v1177, %v1179
        %v1188 = vsel %vm1184, %v1175, %v1177
        %v1189 = vsel %vm1184, %v1173, %v1175
        %v1190 = vsel %vm1184, %v1171, %v1173
        %v1191 = vsel %vm1184, %v1169, %v1171
        %v1192 = vsel %vm1184, %v1183, %v1169
        %v1194 = vlaneseq
        %v1195 = vshrl.u32 %v1194, 7
        %v1196 = vsub.s32 0, %v1195
        %v1197 = vrot.slane %v518, %v1196
        %v1198 = vlaneseq
        %v1199 = vshrl.u32 %v1198, 7
        %v1200 = vsub.s32 1, %v1199
        %v1201 = vrot.slane %v518, %v1200
        %v1202 = vlaneseq
        %v1203 = vshrl.u32 %v1202, 7
        %v1204 = vsub.s32 2, %v1203
        %v1205 = vrot.slane %v518, %v1204
        %v1206 = vlaneseq
        %v1207 = vshrl.u32 %v1206, 7
        %v1208 = vsub.s32 3, %v1207
        %v1209 = vrot.slane %v518, %v1208
        %v1210 = vlaneseq
        %v1211 = vshrl.u32 %v1210, 7
        %v1212 = vsub.s32 4, %v1211
        %v1213 = vrot.slane %v518, %v1212
        %v1214 = vlaneseq
        %v1215 = vshrl.u32 %v1214, 7
        %v1216 = vsub.s32 5, %v1215
        %v1217 = vrot.slane %v518, %v1216
        %v1218 = vlaneseq
        %v1219 = vshrl.u32 %v1218, 7
        %v1220 = vsub.s32 6, %v1219
        %v1221 = vrot.slane %v518, %v1220
        %v1222 = vlaneseq
        %v1223 = vshrl.u32 %v1222, 7
        %v1224 = vsub.s32 7, %v1223
        %v1225 = vrot.slane %v518, %v1224
        %v1234 = vmul.f32 %v1192, %v1197
        %v1235 = vmul.f32 %v1191, %v1201
        %v1236 = vmul.f32 %v1190, %v1205
        %v1237 = vmul.f32 %v1189, %v1209
        %v1238 = vmul.f32 %v1188, %v1213
        %v1239 = vmul.f32 %v1187, %v1217
        %v1240 = vmul.f32 %v1186, %v1221
        %v1241 = vmul.f32 %v1185, %v1225
        %1242 = vrot.lane.b32.xlu0 %v872, 31
        %v1243 = vpop.permute.xlu0 %1242
        %1244 = vrot.lane.b32.xlu0 %v874, 31
        %v1245 = vpop.permute.xlu0 %1244
        %1246 = vrot.lane.b32.xlu0 %v943, 31
        %v1247 = vpop.permute.xlu0 %1246
        %1248 = vrot.lane.b32.xlu0 %v945, 31
        %v1249 = vpop.permute.xlu0 %1248
        %1250 = vrot.lane.b32.xlu0 %v1014, 31
        %v1251 = vpop.permute.xlu0 %1250
        %1252 = vrot.lane.b32.xlu0 %v1016, 31
        %v1253 = vpop.permute.xlu0 %1252
        %1254 = vrot.lane.b32.xlu0 %v1085, 31
        %v1255 = vpop.permute.xlu0 %1254
        %1256 = vrot.lane.b32.xlu0 %v1087, 31
        %v1257 = vpop.permute.xlu0 %1256
        %vm1258 = vcmp.lt.s32.totalorder %v1109, 31
        %v1259 = vsel %vm1258, %v1255, %v1257
        %v1260 = vsel %vm1258, %v1253, %v1255
        %v1261 = vsel %vm1258, %v1251, %v1253
        %v1262 = vsel %vm1258, %v1249, %v1251
        %v1263 = vsel %vm1258, %v1247, %v1249
        %v1264 = vsel %vm1258, %v1245, %v1247
        %v1265 = vsel %vm1258, %v1243, %v1245
        %v1266 = vsel %vm1258, %v1257, %v1243
        %v1268 = vlaneseq
        %v1269 = vshrl.u32 %v1268, 7
        %v1270 = vsub.s32 0, %v1269
        %v1271 = vrot.slane %v522, %v1270
        %v1272 = vlaneseq
        %v1273 = vshrl.u32 %v1272, 7
        %v1274 = vsub.s32 1, %v1273
        %v1275 = vrot.slane %v522, %v1274
        %v1276 = vlaneseq
        %v1277 = vshrl.u32 %v1276, 7
        %v1278 = vsub.s32 2, %v1277
        %v1279 = vrot.slane %v522, %v1278
        %v1280 = vlaneseq
        %v1281 = vshrl.u32 %v1280, 7
        %v1282 = vsub.s32 3, %v1281
        %v1283 = vrot.slane %v522, %v1282
        %v1284 = vlaneseq
        %v1285 = vshrl.u32 %v1284, 7
        %v1286 = vsub.s32 4, %v1285
        %v1287 = vrot.slane %v522, %v1286
        %v1288 = vlaneseq
        %v1289 = vshrl.u32 %v1288, 7
        %v1290 = vsub.s32 5, %v1289
        %v1291 = vrot.slane %v522, %v1290
        %v1292 = vlaneseq
        %v1293 = vshrl.u32 %v1292, 7
        %v1294 = vsub.s32 6, %v1293
        %v1295 = vrot.slane %v522, %v1294
        %v1296 = vlaneseq
        %v1297 = vshrl.u32 %v1296, 7
        %v1298 = vsub.s32 7, %v1297
        %v1299 = vrot.slane %v522, %v1298
        %v1308 = vmul.f32 %v1266, %v1271
        %v1309 = vmul.f32 %v1265, %v1275
        %v1310 = vmul.f32 %v1264, %v1279
        %v1311 = vmul.f32 %v1263, %v1283
        %v1312 = vmul.f32 %v1262, %v1287
        %v1313 = vmul.f32 %v1261, %v1291
        %v1314 = vmul.f32 %v1260, %v1295
        %v1315 = vmul.f32 %v1259, %v1299
        %1316 = vrot.lane.b32.xlu0 %v872, 1
        %v1317 = vpop.permute.xlu0 %1316
        %1318 = vrot.lane.b32.xlu0 %v874, 1
        %v1319 = vpop.permute.xlu0 %1318
        %1320 = vrot.lane.b32.xlu0 %v943, 1
        %v1321 = vpop.permute.xlu0 %1320
        %1322 = vrot.lane.b32.xlu0 %v945, 1
        %v1323 = vpop.permute.xlu0 %1322
        %1324 = vrot.lane.b32.xlu0 %v1014, 1
        %v1325 = vpop.permute.xlu0 %1324
        %1326 = vrot.lane.b32.xlu0 %v1016, 1
        %v1327 = vpop.permute.xlu0 %1326
        %1328 = vrot.lane.b32.xlu0 %v1085, 1
        %v1329 = vpop.permute.xlu0 %1328
        %1330 = vrot.lane.b32.xlu0 %v1087, 1
        %v1331 = vpop.permute.xlu0 %1330
        %vm1332 = vcmp.lt.s32.totalorder %v1109, 1
        %v1333 = vsel %vm1332, %v1329, %v1331
        %v1334 = vsel %vm1332, %v1327, %v1329
        %v1335 = vsel %vm1332, %v1325, %v1327
        %v1336 = vsel %vm1332, %v1323, %v1325
        %v1337 = vsel %vm1332, %v1321, %v1323
        %v1338 = vsel %vm1332, %v1319, %v1321
        %v1339 = vsel %vm1332, %v1317, %v1319
        %v1340 = vsel %vm1332, %v1331, %v1317
        %v1342 = vlaneseq
        %v1343 = vshrl.u32 %v1342, 7
        %v1344 = vsub.s32 0, %v1343
        %v1345 = vrot.slane %v526, %v1344
        %v1346 = vlaneseq
        %v1347 = vshrl.u32 %v1346, 7
        %v1348 = vsub.s32 1, %v1347
        %v1349 = vrot.slane %v526, %v1348
        %v1350 = vlaneseq
        %v1351 = vshrl.u32 %v1350, 7
        %v1352 = vsub.s32 2, %v1351
        %v1353 = vrot.slane %v526, %v1352
        %v1354 = vlaneseq
        %v1355 = vshrl.u32 %v1354, 7
        %v1356 = vsub.s32 3, %v1355
        %v1357 = vrot.slane %v526, %v1356
        %v1358 = vlaneseq
        %v1359 = vshrl.u32 %v1358, 7
        %v1360 = vsub.s32 4, %v1359
        %v1361 = vrot.slane %v526, %v1360
        %v1362 = vlaneseq
        %v1363 = vshrl.u32 %v1362, 7
        %v1364 = vsub.s32 5, %v1363
        %v1365 = vrot.slane %v526, %v1364
        %v1366 = vlaneseq
        %v1367 = vshrl.u32 %v1366, 7
        %v1368 = vsub.s32 6, %v1367
        %v1369 = vrot.slane %v526, %v1368
        %v1370 = vlaneseq
        %v1371 = vshrl.u32 %v1370, 7
        %v1372 = vsub.s32 7, %v1371
        %v1373 = vrot.slane %v526, %v1372
        %v1382 = vmul.f32 %v1340, %v1345
        %v1383 = vmul.f32 %v1339, %v1349
        %v1384 = vmul.f32 %v1338, %v1353
        %v1385 = vmul.f32 %v1337, %v1357
        %v1386 = vmul.f32 %v1336, %v1361
        %v1387 = vmul.f32 %v1335, %v1365
        %v1388 = vmul.f32 %v1334, %v1369
        %v1389 = vmul.f32 %v1333, %v1373
        %v1391 = vlaneseq
        %v1392 = vshrl.u32 %v1391, 7
        %v1393 = vsub.s32 0, %v1392
        %v1394 = vrot.slane %v530, %v1393
        %v1395 = vlaneseq
        %v1396 = vshrl.u32 %v1395, 7
        %v1397 = vsub.s32 1, %v1396
        %v1398 = vrot.slane %v530, %v1397
        %v1399 = vlaneseq
        %v1400 = vshrl.u32 %v1399, 7
        %v1401 = vsub.s32 2, %v1400
        %v1402 = vrot.slane %v530, %v1401
        %v1403 = vlaneseq
        %v1404 = vshrl.u32 %v1403, 7
        %v1405 = vsub.s32 3, %v1404
        %v1406 = vrot.slane %v530, %v1405
        %v1407 = vlaneseq
        %v1408 = vshrl.u32 %v1407, 7
        %v1409 = vsub.s32 4, %v1408
        %v1410 = vrot.slane %v530, %v1409
        %v1411 = vlaneseq
        %v1412 = vshrl.u32 %v1411, 7
        %v1413 = vsub.s32 5, %v1412
        %v1414 = vrot.slane %v530, %v1413
        %v1415 = vlaneseq
        %v1416 = vshrl.u32 %v1415, 7
        %v1417 = vsub.s32 6, %v1416
        %v1418 = vrot.slane %v530, %v1417
        %v1419 = vlaneseq
        %v1420 = vshrl.u32 %v1419, 7
        %v1421 = vsub.s32 7, %v1420
        %v1422 = vrot.slane %v530, %v1421
        %v1431 = vmul.f32 %v872, %v1394
        %v1432 = vmul.f32 %v874, %v1398
        %v1433 = vmul.f32 %v943, %v1402
        %v1434 = vmul.f32 %v945, %v1406
        %v1435 = vmul.f32 %v1014, %v1410
        %v1436 = vmul.f32 %v1016, %v1414
        %v1437 = vmul.f32 %v1085, %v1418
        %v1438 = vmul.f32 %v1087, %v1422
        %1439 = vrot.lane.b32.xlu0 %v872, 127
        %v1440 = vpop.permute.xlu0 %1439
        %1441 = vrot.lane.b32.xlu0 %v874, 127
        %v1442 = vpop.permute.xlu0 %1441
        %1443 = vrot.lane.b32.xlu0 %v943, 127
        %v1444 = vpop.permute.xlu0 %1443
        %1445 = vrot.lane.b32.xlu0 %v945, 127
        %v1446 = vpop.permute.xlu0 %1445
        %1447 = vrot.lane.b32.xlu0 %v1014, 127
        %v1448 = vpop.permute.xlu0 %1447
        %1449 = vrot.lane.b32.xlu0 %v1016, 127
        %v1450 = vpop.permute.xlu0 %1449
        %1451 = vrot.lane.b32.xlu0 %v1085, 127
        %v1452 = vpop.permute.xlu0 %1451
        %1453 = vrot.lane.b32.xlu0 %v1087, 127
        %v1454 = vpop.permute.xlu0 %1453
        %vm1455 = vcmp.lt.s32.totalorder %v1109, 127
        %v1456 = vsel %vm1455, %v1452, %v1454
        %v1457 = vsel %vm1455, %v1450, %v1452
        %v1458 = vsel %vm1455, %v1448, %v1450
        %v1459 = vsel %vm1455, %v1446, %v1448
        %v1460 = vsel %vm1455, %v1444, %v1446
        %v1461 = vsel %vm1455, %v1442, %v1444
        %v1462 = vsel %vm1455, %v1440, %v1442
        %v1463 = vsel %vm1455, %v1454, %v1440
        %v1465 = vlaneseq
        %v1466 = vshrl.u32 %v1465, 7
        %v1467 = vsub.s32 0, %v1466
        %v1468 = vrot.slane %v534, %v1467
        %v1469 = vlaneseq
        %v1470 = vshrl.u32 %v1469, 7
        %v1471 = vsub.s32 1, %v1470
        %v1472 = vrot.slane %v534, %v1471
        %v1473 = vlaneseq
        %v1474 = vshrl.u32 %v1473, 7
        %v1475 = vsub.s32 2, %v1474
        %v1476 = vrot.slane %v534, %v1475
        %v1477 = vlaneseq
        %v1478 = vshrl.u32 %v1477, 7
        %v1479 = vsub.s32 3, %v1478
        %v1480 = vrot.slane %v534, %v1479
        %v1481 = vlaneseq
        %v1482 = vshrl.u32 %v1481, 7
        %v1483 = vsub.s32 4, %v1482
        %v1484 = vrot.slane %v534, %v1483
        %v1485 = vlaneseq
        %v1486 = vshrl.u32 %v1485, 7
        %v1487 = vsub.s32 5, %v1486
        %v1488 = vrot.slane %v534, %v1487
        %v1489 = vlaneseq
        %v1490 = vshrl.u32 %v1489, 7
        %v1491 = vsub.s32 6, %v1490
        %v1492 = vrot.slane %v534, %v1491
        %v1493 = vlaneseq
        %v1494 = vshrl.u32 %v1493, 7
        %v1495 = vsub.s32 7, %v1494
        %v1496 = vrot.slane %v534, %v1495
        %v1505 = vmul.f32 %v1462, %v1468
        %v1506 = vmul.f32 %v1461, %v1472
        %v1507 = vmul.f32 %v1460, %v1476
        %v1508 = vmul.f32 %v1459, %v1480
        %v1509 = vmul.f32 %v1458, %v1484
        %v1510 = vmul.f32 %v1457, %v1488
        %v1511 = vmul.f32 %v1456, %v1492
        %v1512 = vmul.f32 %v1463, %v1496
        %1513 = vrot.lane.b32.xlu0 %v872, 97
        %v1514 = vpop.permute.xlu0 %1513
        %1515 = vrot.lane.b32.xlu0 %v874, 97
        %v1516 = vpop.permute.xlu0 %1515
        %1517 = vrot.lane.b32.xlu0 %v943, 97
        %v1518 = vpop.permute.xlu0 %1517
        %1519 = vrot.lane.b32.xlu0 %v945, 97
        %v1520 = vpop.permute.xlu0 %1519
        %1521 = vrot.lane.b32.xlu0 %v1014, 97
        %v1522 = vpop.permute.xlu0 %1521
        %1523 = vrot.lane.b32.xlu0 %v1016, 97
        %v1524 = vpop.permute.xlu0 %1523
        %1525 = vrot.lane.b32.xlu0 %v1085, 97
        %v1526 = vpop.permute.xlu0 %1525
        %1527 = vrot.lane.b32.xlu0 %v1087, 97
        %v1528 = vpop.permute.xlu0 %1527
        %vm1529 = vcmp.lt.s32.totalorder %v1109, 97
        %v1530 = vsel %vm1529, %v1526, %v1528
        %v1531 = vsel %vm1529, %v1524, %v1526
        %v1532 = vsel %vm1529, %v1522, %v1524
        %v1533 = vsel %vm1529, %v1520, %v1522
        %v1534 = vsel %vm1529, %v1518, %v1520
        %v1535 = vsel %vm1529, %v1516, %v1518
        %v1536 = vsel %vm1529, %v1514, %v1516
        %v1537 = vsel %vm1529, %v1528, %v1514
        %v1539 = vlaneseq
        %v1540 = vshrl.u32 %v1539, 7
        %v1541 = vsub.s32 0, %v1540
        %v1542 = vrot.slane %v538, %v1541
        %v1543 = vlaneseq
        %v1544 = vshrl.u32 %v1543, 7
        %v1545 = vsub.s32 1, %v1544
        %v1546 = vrot.slane %v538, %v1545
        %v1547 = vlaneseq
        %v1548 = vshrl.u32 %v1547, 7
        %v1549 = vsub.s32 2, %v1548
        %v1550 = vrot.slane %v538, %v1549
        %v1551 = vlaneseq
        %v1552 = vshrl.u32 %v1551, 7
        %v1553 = vsub.s32 3, %v1552
        %v1554 = vrot.slane %v538, %v1553
        %v1555 = vlaneseq
        %v1556 = vshrl.u32 %v1555, 7
        %v1557 = vsub.s32 4, %v1556
        %v1558 = vrot.slane %v538, %v1557
        %v1559 = vlaneseq
        %v1560 = vshrl.u32 %v1559, 7
        %v1561 = vsub.s32 5, %v1560
        %v1562 = vrot.slane %v538, %v1561
        %v1563 = vlaneseq
        %v1564 = vshrl.u32 %v1563, 7
        %v1565 = vsub.s32 6, %v1564
        %v1566 = vrot.slane %v538, %v1565
        %v1567 = vlaneseq
        %v1568 = vshrl.u32 %v1567, 7
        %v1569 = vsub.s32 7, %v1568
        %v1570 = vrot.slane %v538, %v1569
        %v1579 = vmul.f32 %v1536, %v1542
        %v1580 = vmul.f32 %v1535, %v1546
        %v1581 = vmul.f32 %v1534, %v1550
        %v1582 = vmul.f32 %v1533, %v1554
        %v1583 = vmul.f32 %v1532, %v1558
        %v1584 = vmul.f32 %v1531, %v1562
        %v1585 = vmul.f32 %v1530, %v1566
        %v1586 = vmul.f32 %v1537, %v1570
        %1587 = vrot.lane.b32.xlu0 %v872, 96
        %v1588 = vpop.permute.xlu0 %1587
        %1589 = vrot.lane.b32.xlu0 %v874, 96
        %v1590 = vpop.permute.xlu0 %1589
        %1591 = vrot.lane.b32.xlu0 %v943, 96
        %v1592 = vpop.permute.xlu0 %1591
        %1593 = vrot.lane.b32.xlu0 %v945, 96
        %v1594 = vpop.permute.xlu0 %1593
        %1595 = vrot.lane.b32.xlu0 %v1014, 96
        %v1596 = vpop.permute.xlu0 %1595
        %1597 = vrot.lane.b32.xlu0 %v1016, 96
        %v1598 = vpop.permute.xlu0 %1597
        %1599 = vrot.lane.b32.xlu0 %v1085, 96
        %v1600 = vpop.permute.xlu0 %1599
        %1601 = vrot.lane.b32.xlu0 %v1087, 96
        %v1602 = vpop.permute.xlu0 %1601
        %vm1603 = vcmp.lt.s32.totalorder %v1109, 96
        %v1604 = vsel %vm1603, %v1600, %v1602
        %v1605 = vsel %vm1603, %v1598, %v1600
        %v1606 = vsel %vm1603, %v1596, %v1598
        %v1607 = vsel %vm1603, %v1594, %v1596
        %v1608 = vsel %vm1603, %v1592, %v1594
        %v1609 = vsel %vm1603, %v1590, %v1592
        %v1610 = vsel %vm1603, %v1588, %v1590
        %v1611 = vsel %vm1603, %v1602, %v1588
        %v1613 = vlaneseq
        %v1614 = vshrl.u32 %v1613, 7
        %v1615 = vsub.s32 0, %v1614
        %v1616 = vrot.slane %v542, %v1615
        %v1617 = vlaneseq
        %v1618 = vshrl.u32 %v1617, 7
        %v1619 = vsub.s32 1, %v1618
        %v1620 = vrot.slane %v542, %v1619
        %v1621 = vlaneseq
        %v1622 = vshrl.u32 %v1621, 7
        %v1623 = vsub.s32 2, %v1622
        %v1624 = vrot.slane %v542, %v1623
        %v1625 = vlaneseq
        %v1626 = vshrl.u32 %v1625, 7
        %v1627 = vsub.s32 3, %v1626
        %v1628 = vrot.slane %v542, %v1627
        %v1629 = vlaneseq
        %v1630 = vshrl.u32 %v1629, 7
        %v1631 = vsub.s32 4, %v1630
        %v1632 = vrot.slane %v542, %v1631
        %v1633 = vlaneseq
        %v1634 = vshrl.u32 %v1633, 7
        %v1635 = vsub.s32 5, %v1634
        %v1636 = vrot.slane %v542, %v1635
        %v1637 = vlaneseq
        %v1638 = vshrl.u32 %v1637, 7
        %v1639 = vsub.s32 6, %v1638
        %v1640 = vrot.slane %v542, %v1639
        %v1641 = vlaneseq
        %v1642 = vshrl.u32 %v1641, 7
        %v1643 = vsub.s32 7, %v1642
        %v1644 = vrot.slane %v542, %v1643
        %v1653 = vmul.f32 %v1610, %v1616
        %v1654 = vmul.f32 %v1609, %v1620
        %v1655 = vmul.f32 %v1608, %v1624
        %v1656 = vmul.f32 %v1607, %v1628
        %v1657 = vmul.f32 %v1606, %v1632
        %v1658 = vmul.f32 %v1605, %v1636
        %v1659 = vmul.f32 %v1604, %v1640
        %v1660 = vmul.f32 %v1611, %v1644
        %1661 = vrot.lane.b32.xlu0 %v872, 95
        %v1662 = vpop.permute.xlu0 %1661
        %1663 = vrot.lane.b32.xlu0 %v874, 95
        %v1664 = vpop.permute.xlu0 %1663
        %1665 = vrot.lane.b32.xlu0 %v943, 95
        %v1666 = vpop.permute.xlu0 %1665
        %1667 = vrot.lane.b32.xlu0 %v945, 95
        %v1668 = vpop.permute.xlu0 %1667
        %1669 = vrot.lane.b32.xlu0 %v1014, 95
        %v1670 = vpop.permute.xlu0 %1669
        %1671 = vrot.lane.b32.xlu0 %v1016, 95
        %v1672 = vpop.permute.xlu0 %1671
        %1673 = vrot.lane.b32.xlu0 %v1085, 95
        %v1674 = vpop.permute.xlu0 %1673
        %1675 = vrot.lane.b32.xlu0 %v1087, 95
        %v1676 = vpop.permute.xlu0 %1675
        %vm1677 = vcmp.lt.s32.totalorder %v1109, 95
        %v1678 = vsel %vm1677, %v1674, %v1676
        %v1679 = vsel %vm1677, %v1672, %v1674
        %v1680 = vsel %vm1677, %v1670, %v1672
        %v1681 = vsel %vm1677, %v1668, %v1670
        %v1682 = vsel %vm1677, %v1666, %v1668
        %v1683 = vsel %vm1677, %v1664, %v1666
        %v1684 = vsel %vm1677, %v1662, %v1664
        %v1685 = vsel %vm1677, %v1676, %v1662
        %v1687 = vlaneseq
        %v1688 = vshrl.u32 %v1687, 7
        %v1689 = vsub.s32 0, %v1688
        %v1690 = vrot.slane %v546, %v1689
        %v1691 = vlaneseq
        %v1692 = vshrl.u32 %v1691, 7
        %v1693 = vsub.s32 1, %v1692
        %v1694 = vrot.slane %v546, %v1693
        %v1695 = vlaneseq
        %v1696 = vshrl.u32 %v1695, 7
        %v1697 = vsub.s32 2, %v1696
        %v1698 = vrot.slane %v546, %v1697
        %v1699 = vlaneseq
        %v1700 = vshrl.u32 %v1699, 7
        %v1701 = vsub.s32 3, %v1700
        %v1702 = vrot.slane %v546, %v1701
        %v1703 = vlaneseq
        %v1704 = vshrl.u32 %v1703, 7
        %v1705 = vsub.s32 4, %v1704
        %v1706 = vrot.slane %v546, %v1705
        %v1707 = vlaneseq
        %v1708 = vshrl.u32 %v1707, 7
        %v1709 = vsub.s32 5, %v1708
        %v1710 = vrot.slane %v546, %v1709
        %v1711 = vlaneseq
        %v1712 = vshrl.u32 %v1711, 7
        %v1713 = vsub.s32 6, %v1712
        %v1714 = vrot.slane %v546, %v1713
        %v1715 = vlaneseq
        %v1716 = vshrl.u32 %v1715, 7
        %v1717 = vsub.s32 7, %v1716
        %v1718 = vrot.slane %v546, %v1717
        %v1727 = vmul.f32 %v1684, %v1690
        %v1728 = vmul.f32 %v1683, %v1694
        %v1729 = vmul.f32 %v1682, %v1698
        %v1730 = vmul.f32 %v1681, %v1702
        %v1731 = vmul.f32 %v1680, %v1706
        %v1732 = vmul.f32 %v1679, %v1710
        %v1733 = vmul.f32 %v1678, %v1714
        %v1734 = vmul.f32 %v1685, %v1718
        %vm1735 = vcmask 588800
        %v1737 = vsel %vm1735, %v1089, 0
        %v1740 = vsel %vm1735, %v1090, 0
        %v1743 = vsel %vm1735, %v1091, 0
        %1745 = vmatprep.subr.mxu0 %v1161
        %1746 = vmatpush1.msra.mxu0 %v1160
        %1747 = vmatprep.subr.mxu0 %v1235
        %1748 = vmatpush1.msra.mxu0 %v1234
        %1749 = vmatprep.subr.mxu0 %v1309
        %1750 = vmatpush1.msra.mxu0 %v1308
        %1751 = vmatprep.subr.mxu0 %v1383
        %1752 = vmatpush1.msra.mxu0 %v1382
        %1753 = vmatprep.subr.mxu0 %v1432
        %1754 = vmatpush1.msra.mxu0 %v1431
        %1755 = vmatprep.subr.mxu0 %v1506
        %1756 = vmatpush1.msra.mxu0 %v1505
        %1757 = vmatprep.subr.mxu0 %v1580
        %1758 = vmatpush1.msra.mxu0 %v1579
        %1759 = vmatprep.subr.mxu0 %v1654
        %1760 = vmatpush1.msra.mxu0 %v1653
        %1761 = vmatprep.subr.mxu0 %v1728
        %1762 = vmatpush1.msra.mxu0 %v1727
        %1763 = vmatprep.subr.mxu0 0.0
        %1764 = vmatpush1.msra.mxu0 0.0
        %1765 = vmatprep.subr.mxu0 0.0
        %1766 = vmatpush1.msra.mxu0 0.0
        %1767 = vmatprep.subr.mxu0 0.0
        %1768 = vmatpush1.msra.mxu0 0.0
        %1769 = vmatprep.subr.mxu0 0.0
        %1770 = vmatpush1.msra.mxu0 0.0
        %1771 = vmatprep.subr.mxu0 0.0
        %1772 = vmatpush1.msra.mxu0 0.0
        %1773 = vmatprep.subr.mxu0 0.0
        %1774 = vmatpush1.msra.mxu0 0.0
        %1775 = vmatprep.subr.mxu0 0.0
        %1776 = vmatpush1.msra.mxu0 0.0
        %1777 = vmatprep.subr.mxu0 0.0
        %1778 = vmatpush1.msra.mxu0 0.0
        %1779 = vmatprep.subr.mxu0 0.0
        %1780 = vmatpush1.msra.mxu0 0.0
        %1781 = vmatprep.subr.mxu0 0.0
        %1782 = vmatpush1.msra.mxu0 0.0
        %1783 = vmatprep.subr.mxu0 0.0
        %1784 = vmatpush1.msra.mxu0 0.0
        %1785 = vmatprep.subr.mxu0 0.0
        %1786 = vmatpush1.msra.mxu0 0.0
        %1787 = vmatprep.subr.mxu0 0.0
        %1788 = vmatpush1.msra.mxu0 0.0
        %1789 = vmatprep.subr.mxu0 0.0
        %1790 = vmatpush1.msra.mxu0 0.0
        %1791 = vmatprep.subr.mxu0 0.0
        %1792 = vmatpush1.msra.mxu0 0.0
        %1793 = vmatprep.subr.mxu0 0.0
        %1794 = vmatpush1.msra.mxu0 0.0
        %1795 = vmatprep.subr.mxu0 0.0
        %1796 = vmatpush1.msra.mxu0 0.0
        %1797 = vmatprep.subr.mxu0 0.0
        %1798 = vmatpush1.msra.mxu0 0.0
        %1799 = vmatprep.subr.mxu0 0.0
        %1800 = vmatpush1.msra.mxu0 0.0
        %1801 = vmatprep.subr.mxu0 0.0
        %1802 = vmatpush1.msra.mxu0 0.0
        %1803 = vmatprep.subr.mxu0 0.0
        %1804 = vmatpush1.msra.mxu0 0.0
        %1805 = vmatprep.subr.mxu0 0.0
        %1806 = vmatpush1.msra.mxu0 0.0
        %1807 = vmatprep.subr.mxu0 0.0
        %1808 = vmatpush1.msra.mxu0 0.0
        %1809 = vmatprep.mubr.f32.mxu0 0.0
        %1810 = vmatmul.mubr.f32.gmra.mrb[0].mxu0 %v1737
        %v1811 = vpop.f32.mrb[0].mxu0
        %v1812 = vadd.f32 0.0, %v1811
        %v1813 = vpop.f32.mrb[0].mxu0
        %v1814 = vadd.f32 0.0, %v1813
        %1815 = vmatprep.mubr.f32.mxu0 0.0
        %1816 = vmatmul.mubr.f32.gmra.mrb[0].mxu0 %v1740
        %v1817 = vpop.f32.mrb[0].mxu0
        %v1818 = vadd.f32 0.0, %v1817
        %v1819 = vpop.f32.mrb[0].mxu0
        %v1820 = vadd.f32 0.0, %v1819
        %1821 = vmatprep.mubr.f32.mxu0 0.0
        %1822 = vmatmul.mubr.f32.gmra.mrb[0].mxu0 %v1743
        %v1823 = vpop.f32.mrb[0].mxu0
        %v1824 = vadd.f32 0.0, %v1823
        %v1825 = vpop.f32.mrb[0].mxu0
        %v1826 = vadd.f32 0.0, %v1825
        %1827 = vdwg.mxu0
        %1828 = vmatprep.subr.mxu0 %v1163
        %1829 = vmatpush1.msra.mxu0 %v1162
        %1830 = vmatprep.subr.mxu0 %v1237
        %1831 = vmatpush1.msra.mxu0 %v1236
        %1832 = vmatprep.subr.mxu0 %v1311
        %1833 = vmatpush1.msra.mxu0 %v1310
        %1834 = vmatprep.subr.mxu0 %v1385
        %1835 = vmatpush1.msra.mxu0 %v1384
        %1836 = vmatprep.subr.mxu0 %v1434
        %1837 = vmatpush1.msra.mxu0 %v1433
        %1838 = vmatprep.subr.mxu0 %v1508
        %1839 = vmatpush1.msra.mxu0 %v1507
        %1840 = vmatprep.subr.mxu0 %v1582
        %1841 = vmatpush1.msra.mxu0 %v1581
        %1842 = vmatprep.subr.mxu0 %v1656
        %1843 = vmatpush1.msra.mxu0 %v1655
        %1844 = vmatprep.subr.mxu0 %v1730
        %1845 = vmatpush1.msra.mxu0 %v1729
        %1846 = vmatprep.subr.mxu0 0.0
        %1847 = vmatpush1.msra.mxu0 0.0
        %1848 = vmatprep.subr.mxu0 0.0
        %1849 = vmatpush1.msra.mxu0 0.0
        %1850 = vmatprep.subr.mxu0 0.0
        %1851 = vmatpush1.msra.mxu0 0.0
        %1852 = vmatprep.subr.mxu0 0.0
        %1853 = vmatpush1.msra.mxu0 0.0
        %1854 = vmatprep.subr.mxu0 0.0
        %1855 = vmatpush1.msra.mxu0 0.0
        %1856 = vmatprep.subr.mxu0 0.0
        %1857 = vmatpush1.msra.mxu0 0.0
        %1858 = vmatprep.subr.mxu0 0.0
        %1859 = vmatpush1.msra.mxu0 0.0
        %1860 = vmatprep.subr.mxu0 0.0
        %1861 = vmatpush1.msra.mxu0 0.0
        %1862 = vmatprep.subr.mxu0 0.0
        %1863 = vmatpush1.msra.mxu0 0.0
        %1864 = vmatprep.subr.mxu0 0.0
        %1865 = vmatpush1.msra.mxu0 0.0
        %1866 = vmatprep.subr.mxu0 0.0
        %1867 = vmatpush1.msra.mxu0 0.0
        %1868 = vmatprep.subr.mxu0 0.0
        %1869 = vmatpush1.msra.mxu0 0.0
        %1870 = vmatprep.subr.mxu0 0.0
        %1871 = vmatpush1.msra.mxu0 0.0
        %1872 = vmatprep.subr.mxu0 0.0
        %1873 = vmatpush1.msra.mxu0 0.0
        %1874 = vmatprep.subr.mxu0 0.0
        %1875 = vmatpush1.msra.mxu0 0.0
        %1876 = vmatprep.subr.mxu0 0.0
        %1877 = vmatpush1.msra.mxu0 0.0
        %1878 = vmatprep.subr.mxu0 0.0
        %1879 = vmatpush1.msra.mxu0 0.0
        %1880 = vmatprep.subr.mxu0 0.0
        %1881 = vmatpush1.msra.mxu0 0.0
        %1882 = vmatprep.subr.mxu0 0.0
        %1883 = vmatpush1.msra.mxu0 0.0
        %1884 = vmatprep.subr.mxu0 0.0
        %1885 = vmatpush1.msra.mxu0 0.0
        %1886 = vmatprep.subr.mxu0 0.0
        %1887 = vmatpush1.msra.mxu0 0.0
        %1888 = vmatprep.subr.mxu0 0.0
        %1889 = vmatpush1.msra.mxu0 0.0
        %1890 = vmatprep.subr.mxu0 0.0
        %1891 = vmatpush1.msra.mxu0 0.0
        %1892 = vmatprep.mubr.f32.mxu0 0.0
        %1893 = vmatmul.mubr.f32.gmra.mrb[0].mxu0 %v1737
        %v1894 = vpop.f32.mrb[0].mxu0
        %v1895 = vadd.f32 0.0, %v1894
        %v1896 = vpop.f32.mrb[0].mxu0
        %v1897 = vadd.f32 0.0, %v1896
        %1898 = vmatprep.mubr.f32.mxu0 0.0
        %1899 = vmatmul.mubr.f32.gmra.mrb[0].mxu0 %v1740
        %v1900 = vpop.f32.mrb[0].mxu0
        %v1901 = vadd.f32 0.0, %v1900
        %v1902 = vpop.f32.mrb[0].mxu0
        %v1903 = vadd.f32 0.0, %v1902
        %1904 = vmatprep.mubr.f32.mxu0 0.0
        %1905 = vmatmul.mubr.f32.gmra.mrb[0].mxu0 %v1743
        %v1906 = vpop.f32.mrb[0].mxu0
        %v1907 = vadd.f32 0.0, %v1906
        %v1908 = vpop.f32.mrb[0].mxu0
        %v1909 = vadd.f32 0.0, %v1908
        %1910 = vdwg.mxu0
        %1911 = vmatprep.subr.mxu0 %v1165
        %1912 = vmatpush1.msra.mxu0 %v1164
        %1913 = vmatprep.subr.mxu0 %v1239
        %1914 = vmatpush1.msra.mxu0 %v1238
        %1915 = vmatprep.subr.mxu0 %v1313
        %1916 = vmatpush1.msra.mxu0 %v1312
        %1917 = vmatprep.subr.mxu0 %v1387
        %1918 = vmatpush1.msra.mxu0 %v1386
        %1919 = vmatprep.subr.mxu0 %v1436
        %1920 = vmatpush1.msra.mxu0 %v1435
        %1921 = vmatprep.subr.mxu0 %v1510
        %1922 = vmatpush1.msra.mxu0 %v1509
        %1923 = vmatprep.subr.mxu0 %v1584
        %1924 = vmatpush1.msra.mxu0 %v1583
        %1925 = vmatprep.subr.mxu0 %v1658
        %1926 = vmatpush1.msra.mxu0 %v1657
        %1927 = vmatprep.subr.mxu0 %v1732
        %1928 = vmatpush1.msra.mxu0 %v1731
        %1929 = vmatprep.subr.mxu0 0.0
        %1930 = vmatpush1.msra.mxu0 0.0
        %1931 = vmatprep.subr.mxu0 0.0
        %1932 = vmatpush1.msra.mxu0 0.0
        %1933 = vmatprep.subr.mxu0 0.0
        %1934 = vmatpush1.msra.mxu0 0.0
        %1935 = vmatprep.subr.mxu0 0.0
        %1936 = vmatpush1.msra.mxu0 0.0
        %1937 = vmatprep.subr.mxu0 0.0
        %1938 = vmatpush1.msra.mxu0 0.0
        %1939 = vmatprep.subr.mxu0 0.0
        %1940 = vmatpush1.msra.mxu0 0.0
        %1941 = vmatprep.subr.mxu0 0.0
        %1942 = vmatpush1.msra.mxu0 0.0
        %1943 = vmatprep.subr.mxu0 0.0
        %1944 = vmatpush1.msra.mxu0 0.0
        %1945 = vmatprep.subr.mxu0 0.0
        %1946 = vmatpush1.msra.mxu0 0.0
        %1947 = vmatprep.subr.mxu0 0.0
        %1948 = vmatpush1.msra.mxu0 0.0
        %1949 = vmatprep.subr.mxu0 0.0
        %1950 = vmatpush1.msra.mxu0 0.0
        %1951 = vmatprep.subr.mxu0 0.0
        %1952 = vmatpush1.msra.mxu0 0.0
        %1953 = vmatprep.subr.mxu0 0.0
        %1954 = vmatpush1.msra.mxu0 0.0
        %1955 = vmatprep.subr.mxu0 0.0
        %1956 = vmatpush1.msra.mxu0 0.0
        %1957 = vmatprep.subr.mxu0 0.0
        %1958 = vmatpush1.msra.mxu0 0.0
        %1959 = vmatprep.subr.mxu0 0.0
        %1960 = vmatpush1.msra.mxu0 0.0
        %1961 = vmatprep.subr.mxu0 0.0
        %1962 = vmatpush1.msra.mxu0 0.0
        %1963 = vmatprep.subr.mxu0 0.0
        %1964 = vmatpush1.msra.mxu0 0.0
        %1965 = vmatprep.subr.mxu0 0.0
        %1966 = vmatpush1.msra.mxu0 0.0
        %1967 = vmatprep.subr.mxu0 0.0
        %1968 = vmatpush1.msra.mxu0 0.0
        %1969 = vmatprep.subr.mxu0 0.0
        %1970 = vmatpush1.msra.mxu0 0.0
        %1971 = vmatprep.subr.mxu0 0.0
        %1972 = vmatpush1.msra.mxu0 0.0
        %1973 = vmatprep.subr.mxu0 0.0
        %1974 = vmatpush1.msra.mxu0 0.0
        %1975 = vmatprep.mubr.f32.mxu0 0.0
        %1976 = vmatmul.mubr.f32.gmra.mrb[0].mxu0 %v1737
        %v1977 = vpop.f32.mrb[0].mxu0
        %v1978 = vadd.f32 0.0, %v1977
        %v1979 = vpop.f32.mrb[0].mxu0
        %v1980 = vadd.f32 0.0, %v1979
        %1981 = vmatprep.mubr.f32.mxu0 0.0
        %1982 = vmatmul.mubr.f32.gmra.mrb[0].mxu0 %v1740
        %v1983 = vpop.f32.mrb[0].mxu0
        %v1984 = vadd.f32 0.0, %v1983
        %v1985 = vpop.f32.mrb[0].mxu0
        %v1986 = vadd.f32 0.0, %v1985
        %1987 = vmatprep.mubr.f32.mxu0 0.0
        %1988 = vmatmul.mubr.f32.gmra.mrb[0].mxu0 %v1743
        %v1989 = vpop.f32.mrb[0].mxu0
        %v1990 = vadd.f32 0.0, %v1989
        %v1991 = vpop.f32.mrb[0].mxu0
        %v1992 = vadd.f32 0.0, %v1991
        %1993 = vdwg.mxu0
        %1994 = vmatprep.subr.mxu0 %v1167
        %1995 = vmatpush1.msra.mxu0 %v1166
        %1996 = vmatprep.subr.mxu0 %v1241
        %1997 = vmatpush1.msra.mxu0 %v1240
        %1998 = vmatprep.subr.mxu0 %v1315
        %1999 = vmatpush1.msra.mxu0 %v1314
        %2000 = vmatprep.subr.mxu0 %v1389
        %2001 = vmatpush1.msra.mxu0 %v1388
        %2002 = vmatprep.subr.mxu0 %v1438
        %2003 = vmatpush1.msra.mxu0 %v1437
        %2004 = vmatprep.subr.mxu0 %v1512
        %2005 = vmatpush1.msra.mxu0 %v1511
        %2006 = vmatprep.subr.mxu0 %v1586
        %2007 = vmatpush1.msra.mxu0 %v1585
        %2008 = vmatprep.subr.mxu0 %v1660
        %2009 = vmatpush1.msra.mxu0 %v1659
        %2010 = vmatprep.subr.mxu0 %v1734
        %2011 = vmatpush1.msra.mxu0 %v1733
        %2012 = vmatprep.subr.mxu0 0.0
        %2013 = vmatpush1.msra.mxu0 0.0
        %2014 = vmatprep.subr.mxu0 0.0
        %2015 = vmatpush1.msra.mxu0 0.0
        %2016 = vmatprep.subr.mxu0 0.0
        %2017 = vmatpush1.msra.mxu0 0.0
        %2018 = vmatprep.subr.mxu0 0.0
        %2019 = vmatpush1.msra.mxu0 0.0
        %2020 = vmatprep.subr.mxu0 0.0
        %2021 = vmatpush1.msra.mxu0 0.0
        %2022 = vmatprep.subr.mxu0 0.0
        %2023 = vmatpush1.msra.mxu0 0.0
        %2024 = vmatprep.subr.mxu0 0.0
        %2025 = vmatpush1.msra.mxu0 0.0
        %2026 = vmatprep.subr.mxu0 0.0
        %2027 = vmatpush1.msra.mxu0 0.0
        %2028 = vmatprep.subr.mxu0 0.0
        %2029 = vmatpush1.msra.mxu0 0.0
        %2030 = vmatprep.subr.mxu0 0.0
        %2031 = vmatpush1.msra.mxu0 0.0
        %2032 = vmatprep.subr.mxu0 0.0
        %2033 = vmatpush1.msra.mxu0 0.0
        %2034 = vmatprep.subr.mxu0 0.0
        %2035 = vmatpush1.msra.mxu0 0.0
        %2036 = vmatprep.subr.mxu0 0.0
        %2037 = vmatpush1.msra.mxu0 0.0
        %2038 = vmatprep.subr.mxu0 0.0
        %2039 = vmatpush1.msra.mxu0 0.0
        %2040 = vmatprep.subr.mxu0 0.0
        %2041 = vmatpush1.msra.mxu0 0.0
        %2042 = vmatprep.subr.mxu0 0.0
        %2043 = vmatpush1.msra.mxu0 0.0
        %2044 = vmatprep.subr.mxu0 0.0
        %2045 = vmatpush1.msra.mxu0 0.0
        %2046 = vmatprep.subr.mxu0 0.0
        %2047 = vmatpush1.msra.mxu0 0.0
        %2048 = vmatprep.subr.mxu0 0.0
        %2049 = vmatpush1.msra.mxu0 0.0
        %2050 = vmatprep.subr.mxu0 0.0
        %2051 = vmatpush1.msra.mxu0 0.0
        %2052 = vmatprep.subr.mxu0 0.0
        %2053 = vmatpush1.msra.mxu0 0.0
        %2054 = vmatprep.subr.mxu0 0.0
        %2055 = vmatpush1.msra.mxu0 0.0
        %2056 = vmatprep.subr.mxu0 0.0
        %2057 = vmatpush1.msra.mxu0 0.0
        %2058 = vmatprep.mubr.f32.mxu0 0.0
        %2059 = vmatmul.mubr.f32.gmra.mrb[0].mxu0 %v1737
        %v2060 = vpop.f32.mrb[0].mxu0
        %v2061 = vadd.f32 0.0, %v2060
        %v2062 = vpop.f32.mrb[0].mxu0
        %v2063 = vadd.f32 0.0, %v2062
        %2064 = vmatprep.mubr.f32.mxu0 0.0
        %2065 = vmatmul.mubr.f32.gmra.mrb[0].mxu0 %v1740
        %v2066 = vpop.f32.mrb[0].mxu0
        %v2067 = vadd.f32 0.0, %v2066
        %v2068 = vpop.f32.mrb[0].mxu0
        %v2069 = vadd.f32 0.0, %v2068
        %2070 = vmatprep.mubr.f32.mxu0 0.0
        %2071 = vmatmul.mubr.f32.gmra.mrb[0].mxu0 %v1743
        %v2072 = vpop.f32.mrb[0].mxu0
        %v2073 = vadd.f32 0.0, %v2072
        %v2074 = vpop.f32.mrb[0].mxu0
        %v2075 = vadd.f32 0.0, %v2074
        %2076 = vdwg.mxu0
        %v2077 = vld [vmem:[%s4] sm:$0xff]
        %v2078 = vld [vmem:[%s4 + $0x8] sm:$0xff]
        %v2079 = vld [vmem:[%s4 + $0x10] sm:$0xff]
        %2081 = vset.pattern.permute.xlu0 0
        %2082 = vperm.xlu0 %2081, %v2077
        %v2083 = vpop.permute.xlu0 %2082
        %2086 = vset.pattern.permute.xlu0 0
        %2087 = vperm.xlu0 %2086, %v2078
        %v2088 = vpop.permute.xlu0 %2087
        %2091 = vset.pattern.permute.xlu0 0
        %2092 = vperm.xlu0 %2091, %v2079
        %v2093 = vpop.permute.xlu0 %2092
        %v2095 = vmul.f32 %v1812, %v2083
        %v2096 = vmul.f32 %v1814, %v2083
        %v2097 = vmul.f32 %v1895, %v2083
        %v2098 = vmul.f32 %v1897, %v2083
        %v2099 = vmul.f32 %v1978, %v2083
        %v2100 = vmul.f32 %v1980, %v2083
        %v2101 = vmul.f32 %v2061, %v2083
        %v2102 = vmul.f32 %v2063, %v2083
        %v2103 = vmul.f32 %v1818, %v2088
        %v2104 = vmul.f32 %v1820, %v2088
        %v2105 = vmul.f32 %v1901, %v2088
        %v2106 = vmul.f32 %v1903, %v2088
        %v2107 = vmul.f32 %v1984, %v2088
        %v2108 = vmul.f32 %v1986, %v2088
        %v2109 = vmul.f32 %v2067, %v2088
        %v2110 = vmul.f32 %v2069, %v2088
        %v2111 = vmul.f32 %v1824, %v2093
        %v2112 = vmul.f32 %v1826, %v2093
        %v2113 = vmul.f32 %v1907, %v2093
        %v2114 = vmul.f32 %v1909, %v2093
        %v2115 = vmul.f32 %v1990, %v2093
        %v2116 = vmul.f32 %v1992, %v2093
        %v2117 = vmul.f32 %v2073, %v2093
        %v2118 = vmul.f32 %v2075, %v2093
        %v2119 = vld [vmem:[%s5] sm:$0xff]
        %v2120 = vld [vmem:[%s5 + $0x8] sm:$0xff]
        %v2121 = vld [vmem:[%s5 + $0x10] sm:$0xff]
        %2123 = vset.pattern.permute.xlu0 0
        %2124 = vperm.xlu0 %2123, %v2119
        %v2125 = vpop.permute.xlu0 %2124
        %2128 = vset.pattern.permute.xlu0 0
        %2129 = vperm.xlu0 %2128, %v2120
        %v2130 = vpop.permute.xlu0 %2129
        %2133 = vset.pattern.permute.xlu0 0
        %2134 = vperm.xlu0 %2133, %v2121
        %v2135 = vpop.permute.xlu0 %2134
        %v2137 = vadd.f32 %v2095, %v2125
        %v2138 = vadd.f32 %v2096, %v2125
        %v2139 = vadd.f32 %v2097, %v2125
        %v2140 = vadd.f32 %v2098, %v2125
        %v2141 = vadd.f32 %v2099, %v2125
        %v2142 = vadd.f32 %v2100, %v2125
        %v2143 = vadd.f32 %v2101, %v2125
        %v2144 = vadd.f32 %v2102, %v2125
        %v2145 = vadd.f32 %v2103, %v2130
        %v2146 = vadd.f32 %v2104, %v2130
        %v2147 = vadd.f32 %v2105, %v2130
        %v2148 = vadd.f32 %v2106, %v2130
        %v2149 = vadd.f32 %v2107, %v2130
        %v2150 = vadd.f32 %v2108, %v2130
        %v2151 = vadd.f32 %v2109, %v2130
        %v2152 = vadd.f32 %v2110, %v2130
        %v2153 = vadd.f32 %v2111, %v2135
        %v2154 = vadd.f32 %v2112, %v2135
        %v2155 = vadd.f32 %v2113, %v2135
        %v2156 = vadd.f32 %v2114, %v2135
        %v2157 = vadd.f32 %v2115, %v2135
        %v2158 = vadd.f32 %v2116, %v2135
        %v2159 = vadd.f32 %v2117, %v2135
        %v2160 = vadd.f32 %v2118, %v2135
        %v2161 = vmax.f32 %v2137, 0.0
        %v2162 = vmax.f32 %v2138, 0.0
        %v2163 = vmax.f32 %v2139, 0.0
        %v2164 = vmax.f32 %v2140, 0.0
        %v2165 = vmax.f32 %v2141, 0.0
        %v2166 = vmax.f32 %v2142, 0.0
        %v2167 = vmax.f32 %v2143, 0.0
        %v2168 = vmax.f32 %v2144, 0.0
        %v2169 = vld [vmem:[%s6] sm:$0xff]
        %v2170 = vld [vmem:[%s6 + $0x8] sm:$0xff]
        %2171 = vrot.lane.b32.xlu0 %v2161, 33
        %v2172 = vpop.permute.xlu0 %2171
        %2173 = vrot.lane.b32.xlu0 %v2162, 33
        %v2174 = vpop.permute.xlu0 %2173
        %2175 = vrot.lane.b32.xlu0 %v2163, 33
        %v2176 = vpop.permute.xlu0 %2175
        %2177 = vrot.lane.b32.xlu0 %v2164, 33
        %v2178 = vpop.permute.xlu0 %2177
        %2179 = vrot.lane.b32.xlu0 %v2165, 33
        %v2180 = vpop.permute.xlu0 %2179
        %2181 = vrot.lane.b32.xlu0 %v2166, 33
        %v2182 = vpop.permute.xlu0 %2181
        %2183 = vrot.lane.b32.xlu0 %v2167, 33
        %v2184 = vpop.permute.xlu0 %2183
        %2185 = vrot.lane.b32.xlu0 %v2168, 33
        %v2186 = vpop.permute.xlu0 %2185
        %v2187 = vsel %vm1110, %v2184, %v2186
        %v2188 = vsel %vm1110, %v2182, %v2184
        %v2189 = vsel %vm1110, %v2180, %v2182
        %v2190 = vsel %vm1110, %v2178, %v2180
        %v2191 = vsel %vm1110, %v2176, %v2178
        %v2192 = vsel %vm1110, %v2174, %v2176
        %v2193 = vsel %vm1110, %v2172, %v2174
        %v2194 = vsel %vm1110, %v2186, %v2172
        %v2195 = vmul.f32 %v2194, %v1123
        %v2196 = vmul.f32 %v2193, %v1127
        %v2197 = vmul.f32 %v2192, %v1131
        %v2198 = vmul.f32 %v2191, %v1135
        %v2199 = vmul.f32 %v2190, %v1139
        %v2200 = vmul.f32 %v2189, %v1143
        %v2201 = vmul.f32 %v2188, %v1147
        %v2202 = vmul.f32 %v2187, %v1151
        %2203 = vrot.lane.b32.xlu0 %v2161, 32
        %v2204 = vpop.permute.xlu0 %2203
        %2205 = vrot.lane.b32.xlu0 %v2162, 32
        %v2206 = vpop.permute.xlu0 %2205
        %2207 = vrot.lane.b32.xlu0 %v2163, 32
        %v2208 = vpop.permute.xlu0 %2207
        %2209 = vrot.lane.b32.xlu0 %v2164, 32
        %v2210 = vpop.permute.xlu0 %2209
        %2211 = vrot.lane.b32.xlu0 %v2165, 32
        %v2212 = vpop.permute.xlu0 %2211
        %2213 = vrot.lane.b32.xlu0 %v2166, 32
        %v2214 = vpop.permute.xlu0 %2213
        %2215 = vrot.lane.b32.xlu0 %v2167, 32
        %v2216 = vpop.permute.xlu0 %2215
        %2217 = vrot.lane.b32.xlu0 %v2168, 32
        %v2218 = vpop.permute.xlu0 %2217
        %v2219 = vsel %vm1184, %v2216, %v2218
        %v2220 = vsel %vm1184, %v2214, %v2216
        %v2221 = vsel %vm1184, %v2212, %v2214
        %v2222 = vsel %vm1184, %v2210, %v2212
        %v2223 = vsel %vm1184, %v2208, %v2210
        %v2224 = vsel %vm1184, %v2206, %v2208
        %v2225 = vsel %vm1184, %v2204, %v2206
        %v2226 = vsel %vm1184, %v2218, %v2204
        %v2227 = vmul.f32 %v2226, %v1197
        %v2228 = vmul.f32 %v2225, %v1201
        %v2229 = vmul.f32 %v2224, %v1205
        %v2230 = vmul.f32 %v2223, %v1209
        %v2231 = vmul.f32 %v2222, %v1213
        %v2232 = vmul.f32 %v2221, %v1217
        %v2233 = vmul.f32 %v2220, %v1221
        %v2234 = vmul.f32 %v2219, %v1225
        %2235 = vrot.lane.b32.xlu0 %v2161, 31
        %v2236 = vpop.permute.xlu0 %2235
        %2237 = vrot.lane.b32.xlu0 %v2162, 31
        %v2238 = vpop.permute.xlu0 %2237
        %2239 = vrot.lane.b32.xlu0 %v2163, 31
        %v2240 = vpop.permute.xlu0 %2239
        %2241 = vrot.lane.b32.xlu0 %v2164, 31
        %v2242 = vpop.permute.xlu0 %2241
        %2243 = vrot.lane.b32.xlu0 %v2165, 31
        %v2244 = vpop.permute.xlu0 %2243
        %2245 = vrot.lane.b32.xlu0 %v2166, 31
        %v2246 = vpop.permute.xlu0 %2245
        %2247 = vrot.lane.b32.xlu0 %v2167, 31
        %v2248 = vpop.permute.xlu0 %2247
        %2249 = vrot.lane.b32.xlu0 %v2168, 31
        %v2250 = vpop.permute.xlu0 %2249
        %v2251 = vsel %vm1258, %v2248, %v2250
        %v2252 = vsel %vm1258, %v2246, %v2248
        %v2253 = vsel %vm1258, %v2244, %v2246
        %v2254 = vsel %vm1258, %v2242, %v2244
        %v2255 = vsel %vm1258, %v2240, %v2242
        %v2256 = vsel %vm1258, %v2238, %v2240
        %v2257 = vsel %vm1258, %v2236, %v2238
        %v2258 = vsel %vm1258, %v2250, %v2236
        %v2259 = vmul.f32 %v2258, %v1271
        %v2260 = vmul.f32 %v2257, %v1275
        %v2261 = vmul.f32 %v2256, %v1279
        %v2262 = vmul.f32 %v2255, %v1283
        %v2263 = vmul.f32 %v2254, %v1287
        %v2264 = vmul.f32 %v2253, %v1291
        %v2265 = vmul.f32 %v2252, %v1295
        %v2266 = vmul.f32 %v2251, %v1299
        %2267 = vrot.lane.b32.xlu0 %v2161, 1
        %v2268 = vpop.permute.xlu0 %2267
        %2269 = vrot.lane.b32.xlu0 %v2162, 1
        %v2270 = vpop.permute.xlu0 %2269
        %2271 = vrot.lane.b32.xlu0 %v2163, 1
        %v2272 = vpop.permute.xlu0 %2271
        %2273 = vrot.lane.b32.xlu0 %v2164, 1
        %v2274 = vpop.permute.xlu0 %2273
        %2275 = vrot.lane.b32.xlu0 %v2165, 1
        %v2276 = vpop.permute.xlu0 %2275
        %2277 = vrot.lane.b32.xlu0 %v2166, 1
        %v2278 = vpop.permute.xlu0 %2277
        %2279 = vrot.lane.b32.xlu0 %v2167, 1
        %v2280 = vpop.permute.xlu0 %2279
        %2281 = vrot.lane.b32.xlu0 %v2168, 1
        %v2282 = vpop.permute.xlu0 %2281
        %v2283 = vsel %vm1332, %v2280, %v2282
        %v2284 = vsel %vm1332, %v2278, %v2280
        %v2285 = vsel %vm1332, %v2276, %v2278
        %v2286 = vsel %vm1332, %v2274, %v2276
        %v2287 = vsel %vm1332, %v2272, %v2274
        %v2288 = vsel %vm1332, %v2270, %v2272
        %v2289 = vsel %vm1332, %v2268, %v2270
        %v2290 = vsel %vm1332, %v2282, %v2268
        %v2291 = vmul.f32 %v2290, %v1345
        %v2292 = vmul.f32 %v2289, %v1349
        %v2293 = vmul.f32 %v2288, %v1353
        %v2294 = vmul.f32 %v2287, %v1357
        %v2295 = vmul.f32 %v2286, %v1361
        %v2296 = vmul.f32 %v2285, %v1365
        %v2297 = vmul.f32 %v2284, %v1369
        %v2298 = vmul.f32 %v2283, %v1373
        %v2299 = vmul.f32 %v2161, %v1394
        %v2300 = vmul.f32 %v2162, %v1398
        %v2301 = vmul.f32 %v2163, %v1402
        %v2302 = vmul.f32 %v2164, %v1406
        %v2303 = vmul.f32 %v2165, %v1410
        %v2304 = vmul.f32 %v2166, %v1414
        %v2305 = vmul.f32 %v2167, %v1418
        %v2306 = vmul.f32 %v2168, %v1422
        %2307 = vrot.lane.b32.xlu0 %v2161, 127
        %v2308 = vpop.permute.xlu0 %2307
        %2309 = vrot.lane.b32.xlu0 %v2162, 127
        %v2310 = vpop.permute.xlu0 %2309
        %2311 = vrot.lane.b32.xlu0 %v2163, 127
        %v2312 = vpop.permute.xlu0 %2311
        %2313 = vrot.lane.b32.xlu0 %v2164, 127
        %v2314 = vpop.permute.xlu0 %2313
        %2315 = vrot.lane.b32.xlu0 %v2165, 127
        %v2316 = vpop.permute.xlu0 %2315
        %2317 = vrot.lane.b32.xlu0 %v2166, 127
        %v2318 = vpop.permute.xlu0 %2317
        %2319 = vrot.lane.b32.xlu0 %v2167, 127
        %v2320 = vpop.permute.xlu0 %2319
        %2321 = vrot.lane.b32.xlu0 %v2168, 127
        %v2322 = vpop.permute.xlu0 %2321
        %v2323 = vsel %vm1455, %v2320, %v2322
        %v2324 = vsel %vm1455, %v2318, %v2320
        %v2325 = vsel %vm1455, %v2316, %v2318
        %v2326 = vsel %vm1455, %v2314, %v2316
        %v2327 = vsel %vm1455, %v2312, %v2314
        %v2328 = vsel %vm1455, %v2310, %v2312
        %v2329 = vsel %vm1455, %v2308, %v2310
        %v2330 = vsel %vm1455, %v2322, %v2308
        %v2331 = vmul.f32 %v2329, %v1468
        %v2332 = vmul.f32 %v2328, %v1472
        %v2333 = vmul.f32 %v2327, %v1476
        %v2334 = vmul.f32 %v2326, %v1480
        %v2335 = vmul.f32 %v2325, %v1484
        %v2336 = vmul.f32 %v2324, %v1488
        %v2337 = vmul.f32 %v2323, %v1492
        %v2338 = vmul.f32 %v2330, %v1496
        %2339 = vrot.lane.b32.xlu0 %v2161, 97
        %v2340 = vpop.permute.xlu0 %2339
        %2341 = vrot.lane.b32.xlu0 %v2162, 97
        %v2342 = vpop.permute.xlu0 %2341
        %2343 = vrot.lane.b32.xlu0 %v2163, 97
        %v2344 = vpop.permute.xlu0 %2343
        %2345 = vrot.lane.b32.xlu0 %v2164, 97
        %v2346 = vpop.permute.xlu0 %2345
        %2347 = vrot.lane.b32.xlu0 %v2165, 97
        %v2348 = vpop.permute.xlu0 %2347
        %2349 = vrot.lane.b32.xlu0 %v2166, 97
        %v2350 = vpop.permute.xlu0 %2349
        %2351 = vrot.lane.b32.xlu0 %v2167, 97
        %v2352 = vpop.permute.xlu0 %2351
        %2353 = vrot.lane.b32.xlu0 %v2168, 97
        %v2354 = vpop.permute.xlu0 %2353
        %v2355 = vsel %vm1529, %v2352, %v2354
        %v2356 = vsel %vm1529, %v2350, %v2352
        %v2357 = vsel %vm1529, %v2348, %v2350
        %v2358 = vsel %vm1529, %v2346, %v2348
        %v2359 = vsel %vm1529, %v2344, %v2346
        %v2360 = vsel %vm1529, %v2342, %v2344
        %v2361 = vsel %vm1529, %v2340, %v2342
        %v2362 = vsel %vm1529, %v2354, %v2340
        %v2363 = vmul.f32 %v2361, %v1542
        %v2364 = vmul.f32 %v2360, %v1546
        %v2365 = vmul.f32 %v2359, %v1550
        %v2366 = vmul.f32 %v2358, %v1554
        %v2367 = vmul.f32 %v2357, %v1558
        %v2368 = vmul.f32 %v2356, %v1562
        %v2369 = vmul.f32 %v2355, %v1566
        %v2370 = vmul.f32 %v2362, %v1570
        %2371 = vrot.lane.b32.xlu0 %v2161, 96
        %v2372 = vpop.permute.xlu0 %2371
        %2373 = vrot.lane.b32.xlu0 %v2162, 96
        %v2374 = vpop.permute.xlu0 %2373
        %2375 = vrot.lane.b32.xlu0 %v2163, 96
        %v2376 = vpop.permute.xlu0 %2375
        %2377 = vrot.lane.b32.xlu0 %v2164, 96
        %v2378 = vpop.permute.xlu0 %2377
        %2379 = vrot.lane.b32.xlu0 %v2165, 96
        %v2380 = vpop.permute.xlu0 %2379
        %2381 = vrot.lane.b32.xlu0 %v2166, 96
        %v2382 = vpop.permute.xlu0 %2381
        %2383 = vrot.lane.b32.xlu0 %v2167, 96
        %v2384 = vpop.permute.xlu0 %2383
        %2385 = vrot.lane.b32.xlu0 %v2168, 96
        %v2386 = vpop.permute.xlu0 %2385
        %v2387 = vsel %vm1603, %v2384, %v2386
        %v2388 = vsel %vm1603, %v2382, %v2384
        %v2389 = vsel %vm1603, %v2380, %v2382
        %v2390 = vsel %vm1603, %v2378, %v2380
        %v2391 = vsel %vm1603, %v2376, %v2378
        %v2392 = vsel %vm1603, %v2374, %v2376
        %v2393 = vsel %vm1603, %v2372, %v2374
        %v2394 = vsel %vm1603, %v2386, %v2372
        %v2395 = vmul.f32 %v2393, %v1616
        %v2396 = vmul.f32 %v2392, %v1620
        %v2397 = vmul.f32 %v2391, %v1624
        %v2398 = vmul.f32 %v2390, %v1628
        %v2399 = vmul.f32 %v2389, %v1632
        %v2400 = vmul.f32 %v2388, %v1636
        %v2401 = vmul.f32 %v2387, %v1640
        %v2402 = vmul.f32 %v2394, %v1644
        %2403 = vrot.lane.b32.xlu0 %v2161, 95
        %v2404 = vpop.permute.xlu0 %2403
        %2405 = vrot.lane.b32.xlu0 %v2162, 95
        %v2406 = vpop.permute.xlu0 %2405
        %2407 = vrot.lane.b32.xlu0 %v2163, 95
        %v2408 = vpop.permute.xlu0 %2407
        %2409 = vrot.lane.b32.xlu0 %v2164, 95
        %v2410 = vpop.permute.xlu0 %2409
        %2411 = vrot.lane.b32.xlu0 %v2165, 95
        %v2412 = vpop.permute.xlu0 %2411
        %2413 = vrot.lane.b32.xlu0 %v2166, 95
        %v2414 = vpop.permute.xlu0 %2413
        %2415 = vrot.lane.b32.xlu0 %v2167, 95
        %v2416 = vpop.permute.xlu0 %2415
        %2417 = vrot.lane.b32.xlu0 %v2168, 95
        %v2418 = vpop.permute.xlu0 %2417
        %v2419 = vsel %vm1677, %v2416, %v2418
        %v2420 = vsel %vm1677, %v2414, %v2416
        %v2421 = vsel %vm1677, %v2412, %v2414
        %v2422 = vsel %vm1677, %v2410, %v2412
        %v2423 = vsel %vm1677, %v2408, %v2410
        %v2424 = vsel %vm1677, %v2406, %v2408
        %v2425 = vsel %vm1677, %v2404, %v2406
        %v2426 = vsel %vm1677, %v2418, %v2404
        %v2427 = vmul.f32 %v2425, %v1690
        %v2428 = vmul.f32 %v2424, %v1694
        %v2429 = vmul.f32 %v2423, %v1698
        %v2430 = vmul.f32 %v2422, %v1702
        %v2431 = vmul.f32 %v2421, %v1706
        %v2432 = vmul.f32 %v2420, %v1710
        %v2433 = vmul.f32 %v2419, %v1714
        %v2434 = vmul.f32 %v2426, %v1718
        %v2436 = vsel %vm1735, %v2169, 0
        %v2439 = vsel %vm1735, %v2170, 0
        %2441 = vmatprep.subr.mxu0 %v2196
        %2442 = vmatpush1.msra.mxu0 %v2195
        %2443 = vmatprep.subr.mxu0 %v2228
        %2444 = vmatpush1.msra.mxu0 %v2227
        %2445 = vmatprep.subr.mxu0 %v2260
        %2446 = vmatpush1.msra.mxu0 %v2259
        %2447 = vmatprep.subr.mxu0 %v2292
        %2448 = vmatpush1.msra.mxu0 %v2291
        %2449 = vmatprep.subr.mxu0 %v2300
        %2450 = vmatpush1.msra.mxu0 %v2299
        %2451 = vmatprep.subr.mxu0 %v2332
        %2452 = vmatpush1.msra.mxu0 %v2331
        %2453 = vmatprep.subr.mxu0 %v2364
        %2454 = vmatpush1.msra.mxu0 %v2363
        %2455 = vmatprep.subr.mxu0 %v2396
        %2456 = vmatpush1.msra.mxu0 %v2395
        %2457 = vmatprep.subr.mxu0 %v2428
        %2458 = vmatpush1.msra.mxu0 %v2427
        %2459 = vmatprep.subr.mxu0 0.0
        %2460 = vmatpush1.msra.mxu0 0.0
        %2461 = vmatprep.subr.mxu0 0.0
        %2462 = vmatpush1.msra.mxu0 0.0
        %2463 = vmatprep.subr.mxu0 0.0
        %2464 = vmatpush1.msra.mxu0 0.0
        %2465 = vmatprep.subr.mxu0 0.0
        %2466 = vmatpush1.msra.mxu0 0.0
        %2467 = vmatprep.subr.mxu0 0.0
        %2468 = vmatpush1.msra.mxu0 0.0
        %2469 = vmatprep.subr.mxu0 0.0
        %2470 = vmatpush1.msra.mxu0 0.0
        %2471 = vmatprep.subr.mxu0 0.0
        %2472 = vmatpush1.msra.mxu0 0.0
        %2473 = vmatprep.subr.mxu0 0.0
        %2474 = vmatpush1.msra.mxu0 0.0
        %2475 = vmatprep.subr.mxu0 0.0
        %2476 = vmatpush1.msra.mxu0 0.0
        %2477 = vmatprep.subr.mxu0 0.0
        %2478 = vmatpush1.msra.mxu0 0.0
        %2479 = vmatprep.subr.mxu0 0.0
        %2480 = vmatpush1.msra.mxu0 0.0
        %2481 = vmatprep.subr.mxu0 0.0
        %2482 = vmatpush1.msra.mxu0 0.0
        %2483 = vmatprep.subr.mxu0 0.0
        %2484 = vmatpush1.msra.mxu0 0.0
        %2485 = vmatprep.subr.mxu0 0.0
        %2486 = vmatpush1.msra.mxu0 0.0
        %2487 = vmatprep.subr.mxu0 0.0
        %2488 = vmatpush1.msra.mxu0 0.0
        %2489 = vmatprep.subr.mxu0 0.0
        %2490 = vmatpush1.msra.mxu0 0.0
        %2491 = vmatprep.subr.mxu0 0.0
        %2492 = vmatpush1.msra.mxu0 0.0
        %2493 = vmatprep.subr.mxu0 0.0
        %2494 = vmatpush1.msra.mxu0 0.0
        %2495 = vmatprep.subr.mxu0 0.0
        %2496 = vmatpush1.msra.mxu0 0.0
        %2497 = vmatprep.subr.mxu0 0.0
        %2498 = vmatpush1.msra.mxu0 0.0
        %2499 = vmatprep.subr.mxu0 0.0
        %2500 = vmatpush1.msra.mxu0 0.0
        %2501 = vmatprep.subr.mxu0 0.0
        %2502 = vmatpush1.msra.mxu0 0.0
        %2503 = vmatprep.subr.mxu0 0.0
        %2504 = vmatpush1.msra.mxu0 0.0
        %2505 = vmatprep.mubr.f32.mxu0 0.0
        %2506 = vmatmul.mubr.f32.gmra.mrb[0].mxu0 %v2436
        %v2507 = vpop.f32.mrb[0].mxu0
        %v2508 = vadd.f32 0.0, %v2507
        %v2509 = vpop.f32.mrb[0].mxu0
        %v2510 = vadd.f32 0.0, %v2509
        %2511 = vmatprep.mubr.f32.mxu0 0.0
        %2512 = vmatmul.mubr.f32.gmra.mrb[0].mxu0 %v2439
        %v2513 = vpop.f32.mrb[0].mxu0
        %v2514 = vadd.f32 0.0, %v2513
        %v2515 = vpop.f32.mrb[0].mxu0
        %v2516 = vadd.f32 0.0, %v2515
        %2517 = vdwg.mxu0
        %2518 = vmatprep.subr.mxu0 %v2198
        %2519 = vmatpush1.msra.mxu0 %v2197
        %2520 = vmatprep.subr.mxu0 %v2230
        %2521 = vmatpush1.msra.mxu0 %v2229
        %2522 = vmatprep.subr.mxu0 %v2262
        %2523 = vmatpush1.msra.mxu0 %v2261
        %2524 = vmatprep.subr.mxu0 %v2294
        %2525 = vmatpush1.msra.mxu0 %v2293
        %2526 = vmatprep.subr.mxu0 %v2302
        %2527 = vmatpush1.msra.mxu0 %v2301
        %2528 = vmatprep.subr.mxu0 %v2334
        %2529 = vmatpush1.msra.mxu0 %v2333
        %2530 = vmatprep.subr.mxu0 %v2366
        %2531 = vmatpush1.msra.mxu0 %v2365
        %2532 = vmatprep.subr.mxu0 %v2398
        %2533 = vmatpush1.msra.mxu0 %v2397
        %2534 = vmatprep.subr.mxu0 %v2430
        %2535 = vmatpush1.msra.mxu0 %v2429
        %2536 = vmatprep.subr.mxu0 0.0
        %2537 = vmatpush1.msra.mxu0 0.0
        %2538 = vmatprep.subr.mxu0 0.0
        %2539 = vmatpush1.msra.mxu0 0.0
        %2540 = vmatprep.subr.mxu0 0.0
        %2541 = vmatpush1.msra.mxu0 0.0
        %2542 = vmatprep.subr.mxu0 0.0
        %2543 = vmatpush1.msra.mxu0 0.0
        %2544 = vmatprep.subr.mxu0 0.0
        %2545 = vmatpush1.msra.mxu0 0.0
        %2546 = vmatprep.subr.mxu0 0.0
        %2547 = vmatpush1.msra.mxu0 0.0
        %2548 = vmatprep.subr.mxu0 0.0
        %2549 = vmatpush1.msra.mxu0 0.0
        %2550 = vmatprep.subr.mxu0 0.0
        %2551 = vmatpush1.msra.mxu0 0.0
        %2552 = vmatprep.subr.mxu0 0.0
        %2553 = vmatpush1.msra.mxu0 0.0
        %2554 = vmatprep.subr.mxu0 0.0
        %2555 = vmatpush1.msra.mxu0 0.0
        %2556 = vmatprep.subr.mxu0 0.0
        %2557 = vmatpush1.msra.mxu0 0.0
        %2558 = vmatprep.subr.mxu0 0.0
        %2559 = vmatpush1.msra.mxu0 0.0
        %2560 = vmatprep.subr.mxu0 0.0
        %2561 = vmatpush1.msra.mxu0 0.0
        %2562 = vmatprep.subr.mxu0 0.0
        %2563 = vmatpush1.msra.mxu0 0.0
        %2564 = vmatprep.subr.mxu0 0.0
        %2565 = vmatpush1.msra.mxu0 0.0
        %2566 = vmatprep.subr.mxu0 0.0
        %2567 = vmatpush1.msra.mxu0 0.0
        %2568 = vmatprep.subr.mxu0 0.0
        %2569 = vmatpush1.msra.mxu0 0.0
        %2570 = vmatprep.subr.mxu0 0.0
        %2571 = vmatpush1.msra.mxu0 0.0
        %2572 = vmatprep.subr.mxu0 0.0
        %2573 = vmatpush1.msra.mxu0 0.0
        %2574 = vmatprep.subr.mxu0 0.0
        %2575 = vmatpush1.msra.mxu0 0.0
        %2576 = vmatprep.subr.mxu0 0.0
        %2577 = vmatpush1.msra.mxu0 0.0
        %2578 = vmatprep.subr.mxu0 0.0
        %2579 = vmatpush1.msra.mxu0 0.0
        %2580 = vmatprep.subr.mxu0 0.0
        %2581 = vmatpush1.msra.mxu0 0.0
        %2582 = vmatprep.mubr.f32.mxu0 0.0
        %2583 = vmatmul.mubr.f32.gmra.mrb[0].mxu0 %v2436
        %v2584 = vpop.f32.mrb[0].mxu0
        %v2585 = vadd.f32 0.0, %v2584
        %v2586 = vpop.f32.mrb[0].mxu0
        %v2587 = vadd.f32 0.0, %v2586
        %2588 = vmatprep.mubr.f32.mxu0 0.0
        %2589 = vmatmul.mubr.f32.gmra.mrb[0].mxu0 %v2439
        %v2590 = vpop.f32.mrb[0].mxu0
        %v2591 = vadd.f32 0.0, %v2590
        %v2592 = vpop.f32.mrb[0].mxu0
        %v2593 = vadd.f32 0.0, %v2592
        %2594 = vdwg.mxu0
        %2595 = vmatprep.subr.mxu0 %v2200
        %2596 = vmatpush1.msra.mxu0 %v2199
        %2597 = vmatprep.subr.mxu0 %v2232
        %2598 = vmatpush1.msra.mxu0 %v2231
        %2599 = vmatprep.subr.mxu0 %v2264
        %2600 = vmatpush1.msra.mxu0 %v2263
        %2601 = vmatprep.subr.mxu0 %v2296
        %2602 = vmatpush1.msra.mxu0 %v2295
        %2603 = vmatprep.subr.mxu0 %v2304
        %2604 = vmatpush1.msra.mxu0 %v2303
        %2605 = vmatprep.subr.mxu0 %v2336
        %2606 = vmatpush1.msra.mxu0 %v2335
        %2607 = vmatprep.subr.mxu0 %v2368
        %2608 = vmatpush1.msra.mxu0 %v2367
        %2609 = vmatprep.subr.mxu0 %v2400
        %2610 = vmatpush1.msra.mxu0 %v2399
        %2611 = vmatprep.subr.mxu0 %v2432
        %2612 = vmatpush1.msra.mxu0 %v2431
        %2613 = vmatprep.subr.mxu0 0.0
        %2614 = vmatpush1.msra.mxu0 0.0
        %2615 = vmatprep.subr.mxu0 0.0
        %2616 = vmatpush1.msra.mxu0 0.0
        %2617 = vmatprep.subr.mxu0 0.0
        %2618 = vmatpush1.msra.mxu0 0.0
        %2619 = vmatprep.subr.mxu0 0.0
        %2620 = vmatpush1.msra.mxu0 0.0
        %2621 = vmatprep.subr.mxu0 0.0
        %2622 = vmatpush1.msra.mxu0 0.0
        %2623 = vmatprep.subr.mxu0 0.0
        %2624 = vmatpush1.msra.mxu0 0.0
        %2625 = vmatprep.subr.mxu0 0.0
        %2626 = vmatpush1.msra.mxu0 0.0
        %2627 = vmatprep.subr.mxu0 0.0
        %2628 = vmatpush1.msra.mxu0 0.0
        %2629 = vmatprep.subr.mxu0 0.0
        %2630 = vmatpush1.msra.mxu0 0.0
        %2631 = vmatprep.subr.mxu0 0.0
        %2632 = vmatpush1.msra.mxu0 0.0
        %2633 = vmatprep.subr.mxu0 0.0
        %2634 = vmatpush1.msra.mxu0 0.0
        %2635 = vmatprep.subr.mxu0 0.0
        %2636 = vmatpush1.msra.mxu0 0.0
        %2637 = vmatprep.subr.mxu0 0.0
        %2638 = vmatpush1.msra.mxu0 0.0
        %2639 = vmatprep.subr.mxu0 0.0
        %2640 = vmatpush1.msra.mxu0 0.0
        %2641 = vmatprep.subr.mxu0 0.0
        %2642 = vmatpush1.msra.mxu0 0.0
        %2643 = vmatprep.subr.mxu0 0.0
        %2644 = vmatpush1.msra.mxu0 0.0
        %2645 = vmatprep.subr.mxu0 0.0
        %2646 = vmatpush1.msra.mxu0 0.0
        %2647 = vmatprep.subr.mxu0 0.0
        %2648 = vmatpush1.msra.mxu0 0.0
        %2649 = vmatprep.subr.mxu0 0.0
        %2650 = vmatpush1.msra.mxu0 0.0
        %2651 = vmatprep.subr.mxu0 0.0
        %2652 = vmatpush1.msra.mxu0 0.0
        %2653 = vmatprep.subr.mxu0 0.0
        %2654 = vmatpush1.msra.mxu0 0.0
        %2655 = vmatprep.subr.mxu0 0.0
        %2656 = vmatpush1.msra.mxu0 0.0
        %2657 = vmatprep.subr.mxu0 0.0
        %2658 = vmatpush1.msra.mxu0 0.0
        %2659 = vmatprep.mubr.f32.mxu0 0.0
        %2660 = vmatmul.mubr.f32.gmra.mrb[0].mxu0 %v2436
        %v2661 = vpop.f32.mrb[0].mxu0
        %v2662 = vadd.f32 0.0, %v2661
        %v2663 = vpop.f32.mrb[0].mxu0
        %v2664 = vadd.f32 0.0, %v2663
        %2665 = vmatprep.mubr.f32.mxu0 0.0
        %2666 = vmatmul.mubr.f32.gmra.mrb[0].mxu0 %v2439
        %v2667 = vpop.f32.mrb[0].mxu0
        %v2668 = vadd.f32 0.0, %v2667
        %v2669 = vpop.f32.mrb[0].mxu0
        %v2670 = vadd.f32 0.0, %v2669
        %2671 = vdwg.mxu0
        %2672 = vmatprep.subr.mxu0 %v2202
        %2673 = vmatpush1.msra.mxu0 %v2201
        %2674 = vmatprep.subr.mxu0 %v2234
        %2675 = vmatpush1.msra.mxu0 %v2233
        %2676 = vmatprep.subr.mxu0 %v2266
        %2677 = vmatpush1.msra.mxu0 %v2265
        %2678 = vmatprep.subr.mxu0 %v2298
        %2679 = vmatpush1.msra.mxu0 %v2297
        %2680 = vmatprep.subr.mxu0 %v2306
        %2681 = vmatpush1.msra.mxu0 %v2305
        %2682 = vmatprep.subr.mxu0 %v2338
        %2683 = vmatpush1.msra.mxu0 %v2337
        %2684 = vmatprep.subr.mxu0 %v2370
        %2685 = vmatpush1.msra.mxu0 %v2369
        %2686 = vmatprep.subr.mxu0 %v2402
        %2687 = vmatpush1.msra.mxu0 %v2401
        %2688 = vmatprep.subr.mxu0 %v2434
        %2689 = vmatpush1.msra.mxu0 %v2433
        %2690 = vmatprep.subr.mxu0 0.0
        %2691 = vmatpush1.msra.mxu0 0.0
        %2692 = vmatprep.subr.mxu0 0.0
        %2693 = vmatpush1.msra.mxu0 0.0
        %2694 = vmatprep.subr.mxu0 0.0
        %2695 = vmatpush1.msra.mxu0 0.0
        %2696 = vmatprep.subr.mxu0 0.0
        %2697 = vmatpush1.msra.mxu0 0.0
        %2698 = vmatprep.subr.mxu0 0.0
        %2699 = vmatpush1.msra.mxu0 0.0
        %2700 = vmatprep.subr.mxu0 0.0
        %2701 = vmatpush1.msra.mxu0 0.0
        %2702 = vmatprep.subr.mxu0 0.0
        %2703 = vmatpush1.msra.mxu0 0.0
        %2704 = vmatprep.subr.mxu0 0.0
        %2705 = vmatpush1.msra.mxu0 0.0
        %2706 = vmatprep.subr.mxu0 0.0
        %2707 = vmatpush1.msra.mxu0 0.0
        %2708 = vmatprep.subr.mxu0 0.0
        %2709 = vmatpush1.msra.mxu0 0.0
        %2710 = vmatprep.subr.mxu0 0.0
        %2711 = vmatpush1.msra.mxu0 0.0
        %2712 = vmatprep.subr.mxu0 0.0
        %2713 = vmatpush1.msra.mxu0 0.0
        %2714 = vmatprep.subr.mxu0 0.0
        %2715 = vmatpush1.msra.mxu0 0.0
        %2716 = vmatprep.subr.mxu0 0.0
        %2717 = vmatpush1.msra.mxu0 0.0
        %2718 = vmatprep.subr.mxu0 0.0
        %2719 = vmatpush1.msra.mxu0 0.0
        %2720 = vmatprep.subr.mxu0 0.0
        %2721 = vmatpush1.msra.mxu0 0.0
        %2722 = vmatprep.subr.mxu0 0.0
        %2723 = vmatpush1.msra.mxu0 0.0
        %2724 = vmatprep.subr.mxu0 0.0
        %2725 = vmatpush1.msra.mxu0 0.0
        %2726 = vmatprep.subr.mxu0 0.0
        %2727 = vmatpush1.msra.mxu0 0.0
        %2728 = vmatprep.subr.mxu0 0.0
        %2729 = vmatpush1.msra.mxu0 0.0
        %2730 = vmatprep.subr.mxu0 0.0
        %2731 = vmatpush1.msra.mxu0 0.0
        %2732 = vmatprep.subr.mxu0 0.0
        %2733 = vmatpush1.msra.mxu0 0.0
        %2734 = vmatprep.subr.mxu0 0.0
        %2735 = vmatpush1.msra.mxu0 0.0
        %2736 = vmatprep.mubr.f32.mxu0 0.0
        %2737 = vmatmul.mubr.f32.gmra.mrb[0].mxu0 %v2436
        %v2738 = vpop.f32.mrb[0].mxu0
        %v2739 = vadd.f32 0.0, %v2738
        %v2740 = vpop.f32.mrb[0].mxu0
        %v2741 = vadd.f32 0.0, %v2740
        %2742 = vmatprep.mubr.f32.mxu0 0.0
        %2743 = vmatmul.mubr.f32.gmra.mrb[0].mxu0 %v2439
        %v2744 = vpop.f32.mrb[0].mxu0
        %v2745 = vadd.f32 0.0, %v2744
        %v2746 = vpop.f32.mrb[0].mxu0
        %v2747 = vadd.f32 0.0, %v2746
        %2748 = vdwg.mxu0
        %v2749 = vld [vmem:[%s7] sm:$0xff]
        %v2750 = vld [vmem:[%s7 + $0x8] sm:$0xff]
        %2752 = vset.pattern.permute.xlu0 0
        %2753 = vperm.xlu0 %2752, %v2749
        %v2754 = vpop.permute.xlu0 %2753
        %2757 = vset.pattern.permute.xlu0 0
        %2758 = vperm.xlu0 %2757, %v2750
        %v2759 = vpop.permute.xlu0 %2758
        %v2761 = vmul.f32 %v2508, %v2754
        %v2762 = vmul.f32 %v2510, %v2754
        %v2763 = vmul.f32 %v2585, %v2754
        %v2764 = vmul.f32 %v2587, %v2754
        %v2765 = vmul.f32 %v2662, %v2754
        %v2766 = vmul.f32 %v2664, %v2754
        %v2767 = vmul.f32 %v2739, %v2754
        %v2768 = vmul.f32 %v2741, %v2754
        %v2769 = vmul.f32 %v2514, %v2759
        %v2770 = vmul.f32 %v2516, %v2759
        %v2771 = vmul.f32 %v2591, %v2759
        %v2772 = vmul.f32 %v2593, %v2759
        %v2773 = vmul.f32 %v2668, %v2759
        %v2774 = vmul.f32 %v2670, %v2759
        %v2775 = vmul.f32 %v2745, %v2759
        %v2776 = vmul.f32 %v2747, %v2759
        %v2777 = vld [vmem:[%s8] sm:$0xff]
        %v2778 = vld [vmem:[%s8 + $0x8] sm:$0xff]
        %2780 = vset.pattern.permute.xlu0 0
        %2781 = vperm.xlu0 %2780, %v2777
        %v2782 = vpop.permute.xlu0 %2781
        %2785 = vset.pattern.permute.xlu0 0
        %2786 = vperm.xlu0 %2785, %v2778
        %v2787 = vpop.permute.xlu0 %2786
        %v2789 = vadd.f32 %v2761, %v2782
        %v2790 = vadd.f32 %v2762, %v2782
        %v2791 = vadd.f32 %v2763, %v2782
        %v2792 = vadd.f32 %v2764, %v2782
        %v2793 = vadd.f32 %v2765, %v2782
        %v2794 = vadd.f32 %v2766, %v2782
        %v2795 = vadd.f32 %v2767, %v2782
        %v2796 = vadd.f32 %v2768, %v2782
        %v2797 = vadd.f32 %v2769, %v2787
        %v2798 = vadd.f32 %v2770, %v2787
        %v2799 = vadd.f32 %v2771, %v2787
        %v2800 = vadd.f32 %v2772, %v2787
        %v2801 = vadd.f32 %v2773, %v2787
        %v2802 = vadd.f32 %v2774, %v2787
        %v2803 = vadd.f32 %v2775, %v2787
        %v2804 = vadd.f32 %v2776, %v2787
        %v2805 = vmax.f32 %v2789, 0.0
        %v2806 = vmax.f32 %v2790, 0.0
        %v2807 = vmax.f32 %v2791, 0.0
        %v2808 = vmax.f32 %v2792, 0.0
        %v2809 = vmax.f32 %v2793, 0.0
        %v2810 = vmax.f32 %v2794, 0.0
        %v2811 = vmax.f32 %v2795, 0.0
        %v2812 = vmax.f32 %v2796, 0.0
        %v2813 = vmax.f32 %v2797, 0.0
        %v2814 = vmax.f32 %v2798, 0.0
        %v2815 = vmax.f32 %v2799, 0.0
        %v2816 = vmax.f32 %v2800, 0.0
        %v2817 = vmax.f32 %v2801, 0.0
        %v2818 = vmax.f32 %v2802, 0.0
        %v2819 = vmax.f32 %v2803, 0.0
        %v2820 = vmax.f32 %v2804, 0.0
        %v2821 = vadd.f32 %v2805, %v2806
        %v2822 = vadd.f32 %v2821, %v2807
        %v2823 = vadd.f32 %v2822, %v2808
        %v2824 = vadd.f32 %v2823, %v2809
        %v2825 = vadd.f32 %v2824, %v2810
        %v2826 = vadd.f32 %v2825, %v2811
        %v2827 = vadd.f32 %v2826, %v2812
        %2828 = vadd.xlane.f32.xlu0 %v2827
        %v2829 = vpop.xlane.xlu0 %2828
        %v2830 = vadd.f32 %v2813, %v2814
        %v2831 = vadd.f32 %v2830, %v2815
        %v2832 = vadd.f32 %v2831, %v2816
        %v2833 = vadd.f32 %v2832, %v2817
        %v2834 = vadd.f32 %v2833, %v2818
        %v2835 = vadd.f32 %v2834, %v2819
        %v2836 = vadd.f32 %v2835, %v2820
        %2837 = vadd.xlane.f32.xlu0 %v2836
        %v2838 = vpop.xlane.xlu0 %2837
        %v2839 = vrcp.pop 1024.0
        %v2840 = vmul.f32 %v2829, %v2839
        %v2841 = vmul.f32 %v2838, %v2839
        %v2842 = vmax.f32 %v2805, %v2807
        %v2843 = vmax.f32 %v2806, %v2808
        %v2844 = vmax.f32 %v2842, %v2809
        %v2845 = vmax.f32 %v2843, %v2810
        %v2846 = vmax.f32 %v2844, %v2811
        %v2847 = vmax.f32 %v2845, %v2812
        %v2848 = vmax.f32 %v2846, %v2847
        %2849 = vmax.xlane.f32.xlu0 %v2848
        %v2850 = vpop.xlane.xlu0 %2849
        %v2851 = vmax.f32 %v2813, %v2815
        %v2852 = vmax.f32 %v2814, %v2816
        %v2853 = vmax.f32 %v2851, %v2817
        %v2854 = vmax.f32 %v2852, %v2818
        %v2855 = vmax.f32 %v2853, %v2819
        %v2856 = vmax.f32 %v2854, %v2820
        %v2857 = vmax.f32 %v2855, %v2856
        %2858 = vmax.xlane.f32.xlu0 %v2857
        %v2859 = vpop.xlane.xlu0 %2858
        %vm2860 = vcmask 7168
        %v2861 = vsel %vm2860, %v2840, %v2850
        %v2862 = vsel %vm2860, %v2841, %v2859
        %v2863 = vld [vmem:[%s9] sm:$0xf]
        %v2864 = vld [vmem:[%s10] sm:$0xf]
        %2866 = vset.pattern.permute.xlu0 0
        %2867 = vperm.xlu0 %2866, %v2864
        %v2868 = vpop.permute.xlu0 %2867
        %vm2870 = vcmask 130048
        %v2872 = vsel %vm2870, %v2863, 0
        %2874 = vmatprep.subr.mxu0 0.0
        %2875 = vmatpush1.msra.mxu0 %v2861
        %2876 = vmatprep.subr.mxu0 0.0
        %2877 = vmatpush1.msra.mxu0 %v2862
        %2878 = vmatprep.subr.mxu0 0.0
        %2879 = vmatpush1.msra.mxu0 0.0
        %2880 = vmatprep.subr.mxu0 0.0
        %2881 = vmatpush1.msra.mxu0 0.0
        %2882 = vmatprep.subr.mxu0 0.0
        %2883 = vmatpush1.msra.mxu0 0.0
        %2884 = vmatprep.subr.mxu0 0.0
        %2885 = vmatpush1.msra.mxu0 0.0
        %2886 = vmatprep.subr.mxu0 0.0
        %2887 = vmatpush1.msra.mxu0 0.0
        %2888 = vmatprep.subr.mxu0 0.0
        %2889 = vmatpush1.msra.mxu0 0.0
        %2890 = vmatprep.subr.mxu0 0.0
        %2891 = vmatpush1.msra.mxu0 0.0
        %2892 = vmatprep.subr.mxu0 0.0
        %2893 = vmatpush1.msra.mxu0 0.0
        %2894 = vmatprep.subr.mxu0 0.0
        %2895 = vmatpush1.msra.mxu0 0.0
        %2896 = vmatprep.subr.mxu0 0.0
        %2897 = vmatpush1.msra.mxu0 0.0
        %2898 = vmatprep.subr.mxu0 0.0
        %2899 = vmatpush1.msra.mxu0 0.0
        %2900 = vmatprep.subr.mxu0 0.0
        %2901 = vmatpush1.msra.mxu0 0.0
        %2902 = vmatprep.subr.mxu0 0.0
        %2903 = vmatpush1.msra.mxu0 0.0
        %2904 = vmatprep.subr.mxu0 0.0
        %2905 = vmatpush1.msra.mxu0 0.0
        %2906 = vmatprep.subr.mxu0 0.0
        %2907 = vmatpush1.msra.mxu0 0.0
        %2908 = vmatprep.subr.mxu0 0.0
        %2909 = vmatpush1.msra.mxu0 0.0
        %2910 = vmatprep.subr.mxu0 0.0
        %2911 = vmatpush1.msra.mxu0 0.0
        %2912 = vmatprep.subr.mxu0 0.0
        %2913 = vmatpush1.msra.mxu0 0.0
        %2914 = vmatprep.subr.mxu0 0.0
        %2915 = vmatpush1.msra.mxu0 0.0
        %2916 = vmatprep.subr.mxu0 0.0
        %2917 = vmatpush1.msra.mxu0 0.0
        %2918 = vmatprep.subr.mxu0 0.0
        %2919 = vmatpush1.msra.mxu0 0.0
        %2920 = vmatprep.subr.mxu0 0.0
        %2921 = vmatpush1.msra.mxu0 0.0
        %2922 = vmatprep.subr.mxu0 0.0
        %2923 = vmatpush1.msra.mxu0 0.0
        %2924 = vmatprep.subr.mxu0 0.0
        %2925 = vmatpush1.msra.mxu0 0.0
        %2926 = vmatprep.subr.mxu0 0.0
        %2927 = vmatpush1.msra.mxu0 0.0
        %2928 = vmatprep.subr.mxu0 0.0
        %2929 = vmatpush1.msra.mxu0 0.0
        %2930 = vmatprep.subr.mxu0 0.0
        %2931 = vmatpush1.msra.mxu0 0.0
        %2932 = vmatprep.subr.mxu0 0.0
        %2933 = vmatpush1.msra.mxu0 0.0
        %2934 = vmatprep.subr.mxu0 0.0
        %2935 = vmatpush1.msra.mxu0 0.0
        %2936 = vmatprep.subr.mxu0 0.0
        %2937 = vmatpush1.msra.mxu0 0.0
        %2938 = vmatprep.mubr.f32.mxu0 0.0
        %2939 = vmatmul.mubr.f32.gmra.mrb[0].mxu0 %v2872
        %v2940 = vpop.f32.mrb[0].mxu0
        %v2941 = vadd.f32 %v2868, %v2940
        %v2942 = vpop.f32.mrb[0].mxu0
        %2943 = vdwg.mxu0
        %v2944 = vmax.f32 %v2941, 0.0
        %v2945 = vld [vmem:[%s11] sm:$0xff]
        %v2946 = vld [vmem:[%s11 + $0x8] sm:$0xff]
        %v2947 = vld [vmem:[%s12] sm:$0xff]
        %v2948 = vld [vmem:[%s12 + $0x8] sm:$0xff]
        %2950 = vset.pattern.permute.xlu0 0
        %2951 = vperm.xlu0 %2950, %v2947
        %v2952 = vpop.permute.xlu0 %2951
        %2955 = vset.pattern.permute.xlu0 0
        %2956 = vperm.xlu0 %2955, %v2948
        %v2957 = vpop.permute.xlu0 %2956
        %vm2959 = vcmask 31744
        %v2961 = vsel %vm2959, %v2945, 0
        %v2964 = vsel %vm2959, %v2946, 0
        %vm2966 = vcmask 1043456
        %v2968 = vsel %vm2966, %v2944, 0
        %2970 = vmatprep.subr.mxu0 0.0
        %2971 = vmatpush1.msra.mxu0 %v2968
        %2972 = vmatprep.subr.mxu0 0.0
        %2973 = vmatpush1.msra.mxu0 0.0
        %2974 = vmatprep.subr.mxu0 0.0
        %2975 = vmatpush1.msra.mxu0 0.0
        %2976 = vmatprep.subr.mxu0 0.0
        %2977 = vmatpush1.msra.mxu0 0.0
        %2978 = vmatprep.subr.mxu0 0.0
        %2979 = vmatpush1.msra.mxu0 0.0
        %2980 = vmatprep.subr.mxu0 0.0
        %2981 = vmatpush1.msra.mxu0 0.0
        %2982 = vmatprep.subr.mxu0 0.0
        %2983 = vmatpush1.msra.mxu0 0.0
        %2984 = vmatprep.subr.mxu0 0.0
        %2985 = vmatpush1.msra.mxu0 0.0
        %2986 = vmatprep.subr.mxu0 0.0
        %2987 = vmatpush1.msra.mxu0 0.0
        %2988 = vmatprep.subr.mxu0 0.0
        %2989 = vmatpush1.msra.mxu0 0.0
        %2990 = vmatprep.subr.mxu0 0.0
        %2991 = vmatpush1.msra.mxu0 0.0
        %2992 = vmatprep.subr.mxu0 0.0
        %2993 = vmatpush1.msra.mxu0 0.0
        %2994 = vmatprep.subr.mxu0 0.0
        %2995 = vmatpush1.msra.mxu0 0.0
        %2996 = vmatprep.subr.mxu0 0.0
        %2997 = vmatpush1.msra.mxu0 0.0
        %2998 = vmatprep.subr.mxu0 0.0
        %2999 = vmatpush1.msra.mxu0 0.0
        %3000 = vmatprep.subr.mxu0 0.0
        %3001 = vmatpush1.msra.mxu0 0.0
        %3002 = vmatprep.subr.mxu0 0.0
        %3003 = vmatpush1.msra.mxu0 0.0
        %3004 = vmatprep.subr.mxu0 0.0
        %3005 = vmatpush1.msra.mxu0 0.0
        %3006 = vmatprep.subr.mxu0 0.0
        %3007 = vmatpush1.msra.mxu0 0.0
        %3008 = vmatprep.subr.mxu0 0.0
        %3009 = vmatpush1.msra.mxu0 0.0
        %3010 = vmatprep.subr.mxu0 0.0
        %3011 = vmatpush1.msra.mxu0 0.0
        %3012 = vmatprep.subr.mxu0 0.0
        %3013 = vmatpush1.msra.mxu0 0.0
        %3014 = vmatprep.subr.mxu0 0.0
        %3015 = vmatpush1.msra.mxu0 0.0
        %3016 = vmatprep.subr.mxu0 0.0
        %3017 = vmatpush1.msra.mxu0 0.0
        %3018 = vmatprep.subr.mxu0 0.0
        %3019 = vmatpush1.msra.mxu0 0.0
        %3020 = vmatprep.subr.mxu0 0.0
        %3021 = vmatpush1.msra.mxu0 0.0
        %3022 = vmatprep.subr.mxu0 0.0
        %3023 = vmatpush1.msra.mxu0 0.0
        %3024 = vmatprep.subr.mxu0 0.0
        %3025 = vmatpush1.msra.mxu0 0.0
        %3026 = vmatprep.subr.mxu0 0.0
        %3027 = vmatpush1.msra.mxu0 0.0
        %3028 = vmatprep.subr.mxu0 0.0
        %3029 = vmatpush1.msra.mxu0 0.0
        %3030 = vmatprep.subr.mxu0 0.0
        %3031 = vmatpush1.msra.mxu0 0.0
        %3032 = vmatprep.subr.mxu0 0.0
        %3033 = vmatpush1.msra.mxu0 0.0
        %3034 = vmatprep.mubr.f32.mxu0 0.0
        %3035 = vmatmul.mubr.f32.gmra.mrb[0].mxu0 %v2961
        %v3036 = vpop.f32.mrb[0].mxu0
        %v3037 = vadd.f32 %v2952, %v3036
        %v3038 = vpop.f32.mrb[0].mxu0
        %3039 = vmatprep.mubr.f32.mxu0 0.0
        %3040 = vmatmul.mubr.f32.gmra.mrb[0].mxu0 %v2964
        %v3041 = vpop.f32.mrb[0].mxu0
        %v3042 = vadd.f32 %v2957, %v3041
        %v3043 = vpop.f32.mrb[0].mxu0
        %3044 = vdwg.mxu0
        %3047 = vrot.lane.b32.xlu0 %v3037, 127
        %v3048 = vpop.permute.xlu0 %3047
        %3049 = vrot.lane.b32.xlu0 %v3042, 127
        %v3050 = vpop.permute.xlu0 %3049
        %v3053 = vadd.f32 %v3037, %v3048
        %v3054 = vadd.f32 %v3042, %v3050
        %v3055 = vxor.u32 %v3053, 2147483648
        %v3056 = vxor.u32 %v3054, 2147483648
        %v3057 = vmul.f32 %v3055, 1.442695
        %v3058 = vpow.pop %v3057
        %v3059 = vmul.f32 %v3056, 1.442695
        %v3060 = vpow.pop %v3059
        %v3061 = vadd.f32 %v3058, 1.0
        %v3062 = vadd.f32 %v3060, 1.0
        %v3063 = vrcp.pop %v3061
        %v3064 = vmul.f32 1.0, %v3063
        %v3065 = vrcp.pop %v3062
        %v3066 = vmul.f32 1.0, %v3065
        %3068 = vset.pattern.permute.xlu0 0
        %3069 = vperm.xlu0 %3068, %v3064
        %v3070 = vpop.permute.xlu0 %3069
        %3073 = vset.pattern.permute.xlu0 0
        %3074 = vperm.xlu0 %3073, %v3066
        %v3075 = vpop.permute.xlu0 %3074
        %v3077 = vmul.f32 %v2805, %v3070
        %v3078 = vmul.f32 %v2806, %v3070
        %v3079 = vmul.f32 %v2807, %v3070
        %v3080 = vmul.f32 %v2808, %v3070
        %v3081 = vmul.f32 %v2809, %v3070
        %v3082 = vmul.f32 %v2810, %v3070
        %v3083 = vmul.f32 %v2811, %v3070
        %v3084 = vmul.f32 %v2812, %v3070
        %v3085 = vmul.f32 %v2813, %v3075
        %v3086 = vmul.f32 %v2814, %v3075
        %v3087 = vmul.f32 %v2815, %v3075
        %v3088 = vmul.f32 %v2816, %v3075
        %v3089 = vmul.f32 %v2817, %v3075
        %v3090 = vmul.f32 %v2818, %v3075
        %v3091 = vmul.f32 %v2819, %v3075
        %v3092 = vmul.f32 %v2820, %v3075
        %v3093 = vadd.f32 %v3077, %v3085
        %v3094 = vrot.slane %v3093, 4
        %v3095 = vadd.f32 %v3093, %v3094
        %v3096 = vrot.slane %v3095, 2
        %v3097 = vadd.f32 %v3095, %v3096
        %v3098 = vrot.slane %v3097, 1
        %v3099 = vadd.f32 %v3097, %v3098
        %v3100 = vadd.f32 %v3078, %v3086
        %v3101 = vrot.slane %v3100, 4
        %v3102 = vadd.f32 %v3100, %v3101
        %v3103 = vrot.slane %v3102, 2
        %v3104 = vadd.f32 %v3102, %v3103
        %v3105 = vrot.slane %v3104, 1
        %v3106 = vadd.f32 %v3104, %v3105
        %v3107 = vadd.f32 %v3079, %v3087
        %v3108 = vrot.slane %v3107, 4
        %v3109 = vadd.f32 %v3107, %v3108
        %v3110 = vrot.slane %v3109, 2
        %v3111 = vadd.f32 %v3109, %v3110
        %v3112 = vrot.slane %v3111, 1
        %v3113 = vadd.f32 %v3111, %v3112
        %v3114 = vadd.f32 %v3080, %v3088
        %v3115 = vrot.slane %v3114, 4
        %v3116 = vadd.f32 %v3114, %v3115
        %v3117 = vrot.slane %v3116, 2
        %v3118 = vadd.f32 %v3116, %v3117
        %v3119 = vrot.slane %v3118, 1
        %v3120 = vadd.f32 %v3118, %v3119
        %v3121 = vadd.f32 %v3081, %v3089
        %v3122 = vrot.slane %v3121, 4
        %v3123 = vadd.f32 %v3121, %v3122
        %v3124 = vrot.slane %v3123, 2
        %v3125 = vadd.f32 %v3123, %v3124
        %v3126 = vrot.slane %v3125, 1
        %v3127 = vadd.f32 %v3125, %v3126
        %v3128 = vadd.f32 %v3082, %v3090
        %v3129 = vrot.slane %v3128, 4
        %v3130 = vadd.f32 %v3128, %v3129
        %v3131 = vrot.slane %v3130, 2
        %v3132 = vadd.f32 %v3130, %v3131
        %v3133 = vrot.slane %v3132, 1
        %v3134 = vadd.f32 %v3132, %v3133
        %v3135 = vadd.f32 %v3083, %v3091
        %v3136 = vrot.slane %v3135, 4
        %v3137 = vadd.f32 %v3135, %v3136
        %v3138 = vrot.slane %v3137, 2
        %v3139 = vadd.f32 %v3137, %v3138
        %v3140 = vrot.slane %v3139, 1
        %v3141 = vadd.f32 %v3139, %v3140
        %v3142 = vadd.f32 %v3084, %v3092
        %v3143 = vrot.slane %v3142, 4
        %v3144 = vadd.f32 %v3142, %v3143
        %v3145 = vrot.slane %v3144, 2
        %v3146 = vadd.f32 %v3144, %v3145
        %v3147 = vrot.slane %v3146, 1
        %v3148 = vadd.f32 %v3146, %v3147
        %v3149 = vrcp.pop 16.0
        %v3150 = vmul.f32 %v3099, %v3149
        %v3151 = vmul.f32 %v3106, %v3149
        %v3152 = vmul.f32 %v3113, %v3149
        %v3153 = vmul.f32 %v3120, %v3149
        %v3154 = vmul.f32 %v3127, %v3149
        %v3155 = vmul.f32 %v3134, %v3149
        %v3156 = vmul.f32 %v3141, %v3149
        %v3157 = vmul.f32 %v3148, %v3149
        %v3158 = vmax.f32 %v3077, %v3085
        %v3159 = vrot.slane %v3158, 4
        %v3160 = vmax.f32 %v3158, %v3159
        %v3161 = vrot.slane %v3160, 2
        %v3162 = vmax.f32 %v3160, %v3161
        %v3163 = vrot.slane %v3162, 1
        %v3164 = vmax.f32 %v3162, %v3163
        %v3165 = vmax.f32 %v3078, %v3086
        %v3166 = vrot.slane %v3165, 4
        %v3167 = vmax.f32 %v3165, %v3166
        %v3168 = vrot.slane %v3167, 2
        %v3169 = vmax.f32 %v3167, %v3168
        %v3170 = vrot.slane %v3169, 1
        %v3171 = vmax.f32 %v3169, %v3170
        %v3172 = vmax.f32 %v3079, %v3087
        %v3173 = vrot.slane %v3172, 4
        %v3174 = vmax.f32 %v3172, %v3173
        %v3175 = vrot.slane %v3174, 2
        %v3176 = vmax.f32 %v3174, %v3175
        %v3177 = vrot.slane %v3176, 1
        %v3178 = vmax.f32 %v3176, %v3177
        %v3179 = vmax.f32 %v3080, %v3088
        %v3180 = vrot.slane %v3179, 4
        %v3181 = vmax.f32 %v3179, %v3180
        %v3182 = vrot.slane %v3181, 2
        %v3183 = vmax.f32 %v3181, %v3182
        %v3184 = vrot.slane %v3183, 1
        %v3185 = vmax.f32 %v3183, %v3184
        %v3186 = vmax.f32 %v3081, %v3089
        %v3187 = vrot.slane %v3186, 4
        %v3188 = vmax.f32 %v3186, %v3187
        %v3189 = vrot.slane %v3188, 2
        %v3190 = vmax.f32 %v3188, %v3189
        %v3191 = vrot.slane %v3190, 1
        %v3192 = vmax.f32 %v3190, %v3191
        %v3193 = vmax.f32 %v3082, %v3090
        %v3194 = vrot.slane %v3193, 4
        %v3195 = vmax.f32 %v3193, %v3194
        %v3196 = vrot.slane %v3195, 2
        %v3197 = vmax.f32 %v3195, %v3196
        %v3198 = vrot.slane %v3197, 1
        %v3199 = vmax.f32 %v3197, %v3198
        %v3200 = vmax.f32 %v3083, %v3091
        %v3201 = vrot.slane %v3200, 4
        %v3202 = vmax.f32 %v3200, %v3201
        %v3203 = vrot.slane %v3202, 2
        %v3204 = vmax.f32 %v3202, %v3203
        %v3205 = vrot.slane %v3204, 1
        %v3206 = vmax.f32 %v3204, %v3205
        %v3207 = vmax.f32 %v3084, %v3092
        %v3208 = vrot.slane %v3207, 4
        %v3209 = vmax.f32 %v3207, %v3208
        %v3210 = vrot.slane %v3209, 2
        %v3211 = vmax.f32 %v3209, %v3210
        %v3212 = vrot.slane %v3211, 1
        %v3213 = vmax.f32 %v3211, %v3212
        %3214 = vrot.lane.b32.xlu0 %v3150, 33
        %v3215 = vpop.permute.xlu0 %3214
        %3216 = vrot.lane.b32.xlu0 %v3151, 33
        %v3217 = vpop.permute.xlu0 %3216
        %3218 = vrot.lane.b32.xlu0 %v3152, 33
        %v3219 = vpop.permute.xlu0 %3218
        %3220 = vrot.lane.b32.xlu0 %v3153, 33
        %v3221 = vpop.permute.xlu0 %3220
        %3222 = vrot.lane.b32.xlu0 %v3154, 33
        %v3223 = vpop.permute.xlu0 %3222
        %3224 = vrot.lane.b32.xlu0 %v3155, 33
        %v3225 = vpop.permute.xlu0 %3224
        %3226 = vrot.lane.b32.xlu0 %v3156, 33
        %v3227 = vpop.permute.xlu0 %3226
        %3228 = vrot.lane.b32.xlu0 %v3157, 33
        %v3229 = vpop.permute.xlu0 %3228
        %v3230 = vsel %vm1110, %v3227, %v3229
        %v3231 = vsel %vm1110, %v3225, %v3227
        %v3232 = vsel %vm1110, %v3223, %v3225
        %v3233 = vsel %vm1110, %v3221, %v3223
        %v3234 = vsel %vm1110, %v3219, %v3221
        %v3235 = vsel %vm1110, %v3217, %v3219
        %v3236 = vsel %vm1110, %v3215, %v3217
        %v3237 = vsel %vm1110, %v3229, %v3215
        %3238 = vrot.lane.b32.xlu0 %v3164, 33
        %v3239 = vpop.permute.xlu0 %3238
        %3240 = vrot.lane.b32.xlu0 %v3171, 33
        %v3241 = vpop.permute.xlu0 %3240
        %3242 = vrot.lane.b32.xlu0 %v3178, 33
        %v3243 = vpop.permute.xlu0 %3242
        %3244 = vrot.lane.b32.xlu0 %v3185, 33
        %v3245 = vpop.permute.xlu0 %3244
        %3246 = vrot.lane.b32.xlu0 %v3192, 33
        %v3247 = vpop.permute.xlu0 %3246
        %3248 = vrot.lane.b32.xlu0 %v3199, 33
        %v3249 = vpop.permute.xlu0 %3248
        %3250 = vrot.lane.b32.xlu0 %v3206, 33
        %v3251 = vpop.permute.xlu0 %3250
        %3252 = vrot.lane.b32.xlu0 %v3213, 33
        %v3253 = vpop.permute.xlu0 %3252
        %v3254 = vsel %vm1110, %v3251, %v3253
        %v3255 = vsel %vm1110, %v3249, %v3251
        %v3256 = vsel %vm1110, %v3247, %v3249
        %v3257 = vsel %vm1110, %v3245, %v3247
        %v3258 = vsel %vm1110, %v3243, %v3245
        %v3259 = vsel %vm1110, %v3241, %v3243
        %v3260 = vsel %vm1110, %v3239, %v3241
        %v3261 = vsel %vm1110, %v3253, %v3239
        %s3262 = sld [smem:[#allocation3]]
        %v3263 = vstv %s3262
        %v3264 = vmul.f32 %v3263, %v3237
        %v3265 = vmul.f32 %v3263, %v3236
        %v3266 = vmul.f32 %v3263, %v3235
        %v3267 = vmul.f32 %v3263, %v3234
        %v3268 = vmul.f32 %v3263, %v3233
        %v3269 = vmul.f32 %v3263, %v3232
        %v3270 = vmul.f32 %v3263, %v3231
        %v3271 = vmul.f32 %v3263, %v3230
        %s3272 = sld [smem:[#allocation3 + $0x1]]
        %v3273 = vstv %s3272
        %v3274 = vmul.f32 %v3273, %v3261
        %v3275 = vmul.f32 %v3273, %v3260
        %v3276 = vmul.f32 %v3273, %v3259
        %v3277 = vmul.f32 %v3273, %v3258
        %v3278 = vmul.f32 %v3273, %v3257
        %v3279 = vmul.f32 %v3273, %v3256
        %v3280 = vmul.f32 %v3273, %v3255
        %v3281 = vmul.f32 %v3273, %v3254
        %v3282 = vadd.f32 %v3264, %v3274
        %v3283 = vadd.f32 %v3265, %v3275
        %v3284 = vadd.f32 %v3266, %v3276
        %v3285 = vadd.f32 %v3267, %v3277
        %v3286 = vadd.f32 %v3268, %v3278
        %v3287 = vadd.f32 %v3269, %v3279
        %v3288 = vadd.f32 %v3270, %v3280
        %v3289 = vadd.f32 %v3271, %v3281
        %v3298 = vcombine.low %v3282, %v3283
        %v3299 = vcombine.low %v3284, %v3285
        %v3300 = vcombine.low %v3286, %v3287
        %v3301 = vcombine.low %v3288, %v3289
        %v3303 = vunpack.c.l.s4 1966171168
        %v3304 = vunpack.c.0.s8 %v3303
        %v3305 = vlaneseq
        %v3306 = vshrl.u32 %v3305, 7
        %v3307 = vsub.s32 %v3304, %v3306
        %v3308 = vrot.slane %v3298, %v3307
        %v3310 = vunpack.c.l.s4 1966171168
        %v3311 = vunpack.c.0.s8 %v3310
        %v3312 = vlaneseq
        %v3313 = vshrl.u32 %v3312, 7
        %v3314 = vsub.s32 %v3311, %v3313
        %v3315 = vrot.slane %v3299, %v3314
        %v3317 = vunpack.c.l.s4 1966171168
        %v3318 = vunpack.c.0.s8 %v3317
        %v3319 = vlaneseq
        %v3320 = vshrl.u32 %v3319, 7
        %v3321 = vsub.s32 %v3318, %v3320
        %v3322 = vrot.slane %v3300, %v3321
        %v3324 = vunpack.c.l.s4 1966171168
        %v3325 = vunpack.c.0.s8 %v3324
        %v3326 = vlaneseq
        %v3327 = vshrl.u32 %v3326, 7
        %v3328 = vsub.s32 %v3325, %v3327
        %v3329 = vrot.slane %v3301, %v3328
        %v3330 = vcombine.low %v3308, %v3315
        %v3331 = vcombine.low %v3322, %v3329
        %v3333 = vunpack.c.l.s4 1966171168
        %v3334 = vunpack.c.0.s8 %v3333
        %v3335 = vlaneseq
        %v3336 = vshrl.u32 %v3335, 7
        %v3337 = vsub.s32 %v3334, %v3336
        %v3338 = vrot.slane %v3330, %v3337
        %v3340 = vunpack.c.l.s4 1966171168
        %v3341 = vunpack.c.0.s8 %v3340
        %v3342 = vlaneseq
        %v3343 = vshrl.u32 %v3342, 7
        %v3344 = vsub.s32 %v3341, %v3343
        %v3345 = vrot.slane %v3331, %v3344
        %v3346 = vcombine.low %v3338, %v3345
        %v3348 = vmul.f32 %v514, %v3346
        %v3349 = vadd.f32 %v3348, 0.0
        %3350 = vrot.lane.b32.xlu0 %v3150, 32
        %v3351 = vpop.permute.xlu0 %3350
        %3352 = vrot.lane.b32.xlu0 %v3151, 32
        %v3353 = vpop.permute.xlu0 %3352
        %3354 = vrot.lane.b32.xlu0 %v3152, 32
        %v3355 = vpop.permute.xlu0 %3354
        %3356 = vrot.lane.b32.xlu0 %v3153, 32
        %v3357 = vpop.permute.xlu0 %3356
        %3358 = vrot.lane.b32.xlu0 %v3154, 32
        %v3359 = vpop.permute.xlu0 %3358
        %3360 = vrot.lane.b32.xlu0 %v3155, 32
        %v3361 = vpop.permute.xlu0 %3360
        %3362 = vrot.lane.b32.xlu0 %v3156, 32
        %v3363 = vpop.permute.xlu0 %3362
        %3364 = vrot.lane.b32.xlu0 %v3157, 32
        %v3365 = vpop.permute.xlu0 %3364
        %v3366 = vsel %vm1184, %v3363, %v3365
        %v3367 = vsel %vm1184, %v3361, %v3363
        %v3368 = vsel %vm1184, %v3359, %v3361
        %v3369 = vsel %vm1184, %v3357, %v3359
        %v3370 = vsel %vm1184, %v3355, %v3357
        %v3371 = vsel %vm1184, %v3353, %v3355
        %v3372 = vsel %vm1184, %v3351, %v3353
        %v3373 = vsel %vm1184, %v3365, %v3351
        %3374 = vrot.lane.b32.xlu0 %v3164, 32
        %v3375 = vpop.permute.xlu0 %3374
        %3376 = vrot.lane.b32.xlu0 %v3171, 32
        %v3377 = vpop.permute.xlu0 %3376
        %3378 = vrot.lane.b32.xlu0 %v3178, 32
        %v3379 = vpop.permute.xlu0 %3378
        %3380 = vrot.lane.b32.xlu0 %v3185, 32
        %v3381 = vpop.permute.xlu0 %3380
        %3382 = vrot.lane.b32.xlu0 %v3192, 32
        %v3383 = vpop.permute.xlu0 %3382
        %3384 = vrot.lane.b32.xlu0 %v3199, 32
        %v3385 = vpop.permute.xlu0 %3384
        %3386 = vrot.lane.b32.xlu0 %v3206, 32
        %v3387 = vpop.permute.xlu0 %3386
        %3388 = vrot.lane.b32.xlu0 %v3213, 32
        %v3389 = vpop.permute.xlu0 %3388
        %v3390 = vsel %vm1184, %v3387, %v3389
        %v3391 = vsel %vm1184, %v3385, %v3387
        %v3392 = vsel %vm1184, %v3383, %v3385
        %v3393 = vsel %vm1184, %v3381, %v3383
        %v3394 = vsel %vm1184, %v3379, %v3381
        %v3395 = vsel %vm1184, %v3377, %v3379
        %v3396 = vsel %vm1184, %v3375, %v3377
        %v3397 = vsel %vm1184, %v3389, %v3375
        %s3398 = sld [smem:[#allocation3 + $0x80]]
        %v3399 = vstv %s3398
        %v3400 = vmul.f32 %v3399, %v3373
        %v3401 = vmul.f32 %v3399, %v3372
        %v3402 = vmul.f32 %v3399, %v3371
        %v3403 = vmul.f32 %v3399, %v3370
        %v3404 = vmul.f32 %v3399, %v3369
        %v3405 = vmul.f32 %v3399, %v3368
        %v3406 = vmul.f32 %v3399, %v3367
        %v3407 = vmul.f32 %v3399, %v3366
        %s3408 = sld [smem:[#allocation3 + $0x81]]
        %v3409 = vstv %s3408
        %v3410 = vmul.f32 %v3409, %v3397
        %v3411 = vmul.f32 %v3409, %v3396
        %v3412 = vmul.f32 %v3409, %v3395
        %v3413 = vmul.f32 %v3409, %v3394
        %v3414 = vmul.f32 %v3409, %v3393
        %v3415 = vmul.f32 %v3409, %v3392
        %v3416 = vmul.f32 %v3409, %v3391
        %v3417 = vmul.f32 %v3409, %v3390
        %v3418 = vadd.f32 %v3400, %v3410
        %v3419 = vadd.f32 %v3401, %v3411
        %v3420 = vadd.f32 %v3402, %v3412
        %v3421 = vadd.f32 %v3403, %v3413
        %v3422 = vadd.f32 %v3404, %v3414
        %v3423 = vadd.f32 %v3405, %v3415
        %v3424 = vadd.f32 %v3406, %v3416
        %v3425 = vadd.f32 %v3407, %v3417
        %v3434 = vcombine.low %v3418, %v3419
        %v3435 = vcombine.low %v3420, %v3421
        %v3436 = vcombine.low %v3422, %v3423
        %v3437 = vcombine.low %v3424, %v3425
        %v3439 = vunpack.c.l.s4 1966171168
        %v3440 = vunpack.c.0.s8 %v3439
        %v3441 = vlaneseq
        %v3442 = vshrl.u32 %v3441, 7
        %v3443 = vsub.s32 %v3440, %v3442
        %v3444 = vrot.slane %v3434, %v3443
        %v3446 = vunpack.c.l.s4 1966171168
        %v3447 = vunpack.c.0.s8 %v3446
        %v3448 = vlaneseq
        %v3449 = vshrl.u32 %v3448, 7
        %v3450 = vsub.s32 %v3447, %v3449
        %v3451 = vrot.slane %v3435, %v3450
        %v3453 = vunpack.c.l.s4 1966171168
        %v3454 = vunpack.c.0.s8 %v3453
        %v3455 = vlaneseq
        %v3456 = vshrl.u32 %v3455, 7
        %v3457 = vsub.s32 %v3454, %v3456
        %v3458 = vrot.slane %v3436, %v3457
        %v3460 = vunpack.c.l.s4 1966171168
        %v3461 = vunpack.c.0.s8 %v3460
        %v3462 = vlaneseq
        %v3463 = vshrl.u32 %v3462, 7
        %v3464 = vsub.s32 %v3461, %v3463
        %v3465 = vrot.slane %v3437, %v3464
        %v3466 = vcombine.low %v3444, %v3451
        %v3467 = vcombine.low %v3458, %v3465
        %v3469 = vunpack.c.l.s4 1966171168
        %v3470 = vunpack.c.0.s8 %v3469
        %v3471 = vlaneseq
        %v3472 = vshrl.u32 %v3471, 7
        %v3473 = vsub.s32 %v3470, %v3472
        %v3474 = vrot.slane %v3466, %v3473
        %v3476 = vunpack.c.l.s4 1966171168
        %v3477 = vunpack.c.0.s8 %v3476
        %v3478 = vlaneseq
        %v3479 = vshrl.u32 %v3478, 7
        %v3480 = vsub.s32 %v3477, %v3479
        %v3481 = vrot.slane %v3467, %v3480
        %v3482 = vcombine.low %v3474, %v3481
        %v3484 = vmul.f32 %v518, %v3482
        %v3485 = vadd.f32 %v3349, %v3484
        %3486 = vrot.lane.b32.xlu0 %v3150, 31
        %v3487 = vpop.permute.xlu0 %3486
        %3488 = vrot.lane.b32.xlu0 %v3151, 31
        %v3489 = vpop.permute.xlu0 %3488
        %3490 = vrot.lane.b32.xlu0 %v3152, 31
        %v3491 = vpop.permute.xlu0 %3490
        %3492 = vrot.lane.b32.xlu0 %v3153, 31
        %v3493 = vpop.permute.xlu0 %3492
        %3494 = vrot.lane.b32.xlu0 %v3154, 31
        %v3495 = vpop.permute.xlu0 %3494
        %3496 = vrot.lane.b32.xlu0 %v3155, 31
        %v3497 = vpop.permute.xlu0 %3496
        %3498 = vrot.lane.b32.xlu0 %v3156, 31
        %v3499 = vpop.permute.xlu0 %3498
        %3500 = vrot.lane.b32.xlu0 %v3157, 31
        %v3501 = vpop.permute.xlu0 %3500
        %v3502 = vsel %vm1258, %v3499, %v3501
        %v3503 = vsel %vm1258, %v3497, %v3499
        %v3504 = vsel %vm1258, %v3495, %v3497
        %v3505 = vsel %vm1258, %v3493, %v3495
        %v3506 = vsel %vm1258, %v3491, %v3493
        %v3507 = vsel %vm1258, %v3489, %v3491
        %v3508 = vsel %vm1258, %v3487, %v3489
        %v3509 = vsel %vm1258, %v3501, %v3487
        %3510 = vrot.lane.b32.xlu0 %v3164, 31
        %v3511 = vpop.permute.xlu0 %3510
        %3512 = vrot.lane.b32.xlu0 %v3171, 31
        %v3513 = vpop.permute.xlu0 %3512
        %3514 = vrot.lane.b32.xlu0 %v3178, 31
        %v3515 = vpop.permute.xlu0 %3514
        %3516 = vrot.lane.b32.xlu0 %v3185, 31
        %v3517 = vpop.permute.xlu0 %3516
        %3518 = vrot.lane.b32.xlu0 %v3192, 31
        %v3519 = vpop.permute.xlu0 %3518
        %3520 = vrot.lane.b32.xlu0 %v3199, 31
        %v3521 = vpop.permute.xlu0 %3520
        %3522 = vrot.lane.b32.xlu0 %v3206, 31
        %v3523 = vpop.permute.xlu0 %3522
        %3524 = vrot.lane.b32.xlu0 %v3213, 31
        %v3525 = vpop.permute.xlu0 %3524
        %v3526 = vsel %vm1258, %v3523, %v3525
        %v3527 = vsel %vm1258, %v3521, %v3523
        %v3528 = vsel %vm1258, %v3519, %v3521
        %v3529 = vsel %vm1258, %v3517, %v3519
        %v3530 = vsel %vm1258, %v3515, %v3517
        %v3531 = vsel %vm1258, %v3513, %v3515
        %v3532 = vsel %vm1258, %v3511, %v3513
        %v3533 = vsel %vm1258, %v3525, %v3511
        %s3534 = sld [smem:[#allocation3 + $0x100]]
        %v3535 = vstv %s3534
        %v3536 = vmul.f32 %v3535, %v3509
        %v3537 = vmul.f32 %v3535, %v3508
        %v3538 = vmul.f32 %v3535, %v3507
        %v3539 = vmul.f32 %v3535, %v3506
        %v3540 = vmul.f32 %v3535, %v3505
        %v3541 = vmul.f32 %v3535, %v3504
        %v3542 = vmul.f32 %v3535, %v3503
        %v3543 = vmul.f32 %v3535, %v3502
        %s3544 = sld [smem:[#allocation3 + $0x101]]
        %v3545 = vstv %s3544
        %v3546 = vmul.f32 %v3545, %v3533
        %v3547 = vmul.f32 %v3545, %v3532
        %v3548 = vmul.f32 %v3545, %v3531
        %v3549 = vmul.f32 %v3545, %v3530
        %v3550 = vmul.f32 %v3545, %v3529
        %v3551 = vmul.f32 %v3545, %v3528
        %v3552 = vmul.f32 %v3545, %v3527
        %v3553 = vmul.f32 %v3545, %v3526
        %v3554 = vadd.f32 %v3536, %v3546
        %v3555 = vadd.f32 %v3537, %v3547
        %v3556 = vadd.f32 %v3538, %v3548
        %v3557 = vadd.f32 %v3539, %v3549
        %v3558 = vadd.f32 %v3540, %v3550
        %v3559 = vadd.f32 %v3541, %v3551
        %v3560 = vadd.f32 %v3542, %v3552
        %v3561 = vadd.f32 %v3543, %v3553
        %v3570 = vcombine.low %v3554, %v3555
        %v3571 = vcombine.low %v3556, %v3557
        %v3572 = vcombine.low %v3558, %v3559
        %v3573 = vcombine.low %v3560, %v3561
        %v3575 = vunpack.c.l.s4 1966171168
        %v3576 = vunpack.c.0.s8 %v3575
        %v3577 = vlaneseq
        %v3578 = vshrl.u32 %v3577, 7
        %v3579 = vsub.s32 %v3576, %v3578
        %v3580 = vrot.slane %v3570, %v3579
        %v3582 = vunpack.c.l.s4 1966171168
        %v3583 = vunpack.c.0.s8 %v3582
        %v3584 = vlaneseq
        %v3585 = vshrl.u32 %v3584, 7
        %v3586 = vsub.s32 %v3583, %v3585
        %v3587 = vrot.slane %v3571, %v3586
        %v3589 = vunpack.c.l.s4 1966171168
        %v3590 = vunpack.c.0.s8 %v3589
        %v3591 = vlaneseq
        %v3592 = vshrl.u32 %v3591, 7
        %v3593 = vsub.s32 %v3590, %v3592
        %v3594 = vrot.slane %v3572, %v3593
        %v3596 = vunpack.c.l.s4 1966171168
        %v3597 = vunpack.c.0.s8 %v3596
        %v3598 = vlaneseq
        %v3599 = vshrl.u32 %v3598, 7
        %v3600 = vsub.s32 %v3597, %v3599
        %v3601 = vrot.slane %v3573, %v3600
        %v3602 = vcombine.low %v3580, %v3587
        %v3603 = vcombine.low %v3594, %v3601
        %v3605 = vunpack.c.l.s4 1966171168
        %v3606 = vunpack.c.0.s8 %v3605
        %v3607 = vlaneseq
        %v3608 = vshrl.u32 %v3607, 7
        %v3609 = vsub.s32 %v3606, %v3608
        %v3610 = vrot.slane %v3602, %v3609
        %v3612 = vunpack.c.l.s4 1966171168
        %v3613 = vunpack.c.0.s8 %v3612
        %v3614 = vlaneseq
        %v3615 = vshrl.u32 %v3614, 7
        %v3616 = vsub.s32 %v3613, %v3615
        %v3617 = vrot.slane %v3603, %v3616
        %v3618 = vcombine.low %v3610, %v3617
        %v3620 = vmul.f32 %v522, %v3618
        %v3621 = vadd.f32 %v3485, %v3620
        %3622 = vrot.lane.b32.xlu0 %v3150, 1
        %v3623 = vpop.permute.xlu0 %3622
        %3624 = vrot.lane.b32.xlu0 %v3151, 1
        %v3625 = vpop.permute.xlu0 %3624
        %3626 = vrot.lane.b32.xlu0 %v3152, 1
        %v3627 = vpop.permute.xlu0 %3626
        %3628 = vrot.lane.b32.xlu0 %v3153, 1
        %v3629 = vpop.permute.xlu0 %3628
        %3630 = vrot.lane.b32.xlu0 %v3154, 1
        %v3631 = vpop.permute.xlu0 %3630
        %3632 = vrot.lane.b32.xlu0 %v3155, 1
        %v3633 = vpop.permute.xlu0 %3632
        %3634 = vrot.lane.b32.xlu0 %v3156, 1
        %v3635 = vpop.permute.xlu0 %3634
        %3636 = vrot.lane.b32.xlu0 %v3157, 1
        %v3637 = vpop.permute.xlu0 %3636
        %v3638 = vsel %vm1332, %v3635, %v3637
        %v3639 = vsel %vm1332, %v3633, %v3635
        %v3640 = vsel %vm1332, %v3631, %v3633
        %v3641 = vsel %vm1332, %v3629, %v3631
        %v3642 = vsel %vm1332, %v3627, %v3629
        %v3643 = vsel %vm1332, %v3625, %v3627
        %v3644 = vsel %vm1332, %v3623, %v3625
        %v3645 = vsel %vm1332, %v3637, %v3623
        %3646 = vrot.lane.b32.xlu0 %v3164, 1
        %v3647 = vpop.permute.xlu0 %3646
        %3648 = vrot.lane.b32.xlu0 %v3171, 1
        %v3649 = vpop.permute.xlu0 %3648
        %3650 = vrot.lane.b32.xlu0 %v3178, 1
        %v3651 = vpop.permute.xlu0 %3650
        %3652 = vrot.lane.b32.xlu0 %v3185, 1
        %v3653 = vpop.permute.xlu0 %3652
        %3654 = vrot.lane.b32.xlu0 %v3192, 1
        %v3655 = vpop.permute.xlu0 %3654
        %3656 = vrot.lane.b32.xlu0 %v3199, 1
        %v3657 = vpop.permute.xlu0 %3656
        %3658 = vrot.lane.b32.xlu0 %v3206, 1
        %v3659 = vpop.permute.xlu0 %3658
        %3660 = vrot.lane.b32.xlu0 %v3213, 1
        %v3661 = vpop.permute.xlu0 %3660
        %v3662 = vsel %vm1332, %v3659, %v3661
        %v3663 = vsel %vm1332, %v3657, %v3659
        %v3664 = vsel %vm1332, %v3655, %v3657
        %v3665 = vsel %vm1332, %v3653, %v3655
        %v3666 = vsel %vm1332, %v3651, %v3653
        %v3667 = vsel %vm1332, %v3649, %v3651
        %v3668 = vsel %vm1332, %v3647, %v3649
        %v3669 = vsel %vm1332, %v3661, %v3647
        %s3670 = sld [smem:[#allocation3 + $0x180]]
        %v3671 = vstv %s3670
        %v3672 = vmul.f32 %v3671, %v3645
        %v3673 = vmul.f32 %v3671, %v3644
        %v3674 = vmul.f32 %v3671, %v3643
        %v3675 = vmul.f32 %v3671, %v3642
        %v3676 = vmul.f32 %v3671, %v3641
        %v3677 = vmul.f32 %v3671, %v3640
        %v3678 = vmul.f32 %v3671, %v3639
        %v3679 = vmul.f32 %v3671, %v3638
        %s3680 = sld [smem:[#allocation3 + $0x181]]
        %v3681 = vstv %s3680
        %v3682 = vmul.f32 %v3681, %v3669
        %v3683 = vmul.f32 %v3681, %v3668
        %v3684 = vmul.f32 %v3681, %v3667
        %v3685 = vmul.f32 %v3681, %v3666
        %v3686 = vmul.f32 %v3681, %v3665
        %v3687 = vmul.f32 %v3681, %v3664
        %v3688 = vmul.f32 %v3681, %v3663
        %v3689 = vmul.f32 %v3681, %v3662
        %v3690 = vadd.f32 %v3672, %v3682
        %v3691 = vadd.f32 %v3673, %v3683
        %v3692 = vadd.f32 %v3674, %v3684
        %v3693 = vadd.f32 %v3675, %v3685
        %v3694 = vadd.f32 %v3676, %v3686
        %v3695 = vadd.f32 %v3677, %v3687
        %v3696 = vadd.f32 %v3678, %v3688
        %v3697 = vadd.f32 %v3679, %v3689
        %v3706 = vcombine.low %v3690, %v3691
        %v3707 = vcombine.low %v3692, %v3693
        %v3708 = vcombine.low %v3694, %v3695
        %v3709 = vcombine.low %v3696, %v3697
        %v3711 = vunpack.c.l.s4 1966171168
        %v3712 = vunpack.c.0.s8 %v3711
        %v3713 = vlaneseq
        %v3714 = vshrl.u32 %v3713, 7
        %v3715 = vsub.s32 %v3712, %v3714
        %v3716 = vrot.slane %v3706, %v3715
        %v3718 = vunpack.c.l.s4 1966171168
        %v3719 = vunpack.c.0.s8 %v3718
        %v3720 = vlaneseq
        %v3721 = vshrl.u32 %v3720, 7
        %v3722 = vsub.s32 %v3719, %v3721
        %v3723 = vrot.slane %v3707, %v3722
        %v3725 = vunpack.c.l.s4 1966171168
        %v3726 = vunpack.c.0.s8 %v3725
        %v3727 = vlaneseq
        %v3728 = vshrl.u32 %v3727, 7
        %v3729 = vsub.s32 %v3726, %v3728
        %v3730 = vrot.slane %v3708, %v3729
        %v3732 = vunpack.c.l.s4 1966171168
        %v3733 = vunpack.c.0.s8 %v3732
        %v3734 = vlaneseq
        %v3735 = vshrl.u32 %v3734, 7
        %v3736 = vsub.s32 %v3733, %v3735
        %v3737 = vrot.slane %v3709, %v3736
        %v3738 = vcombine.low %v3716, %v3723
        %v3739 = vcombine.low %v3730, %v3737
        %v3741 = vunpack.c.l.s4 1966171168
        %v3742 = vunpack.c.0.s8 %v3741
        %v3743 = vlaneseq
        %v3744 = vshrl.u32 %v3743, 7
        %v3745 = vsub.s32 %v3742, %v3744
        %v3746 = vrot.slane %v3738, %v3745
        %v3748 = vunpack.c.l.s4 1966171168
        %v3749 = vunpack.c.0.s8 %v3748
        %v3750 = vlaneseq
        %v3751 = vshrl.u32 %v3750, 7
        %v3752 = vsub.s32 %v3749, %v3751
        %v3753 = vrot.slane %v3739, %v3752
        %v3754 = vcombine.low %v3746, %v3753
        %v3756 = vmul.f32 %v526, %v3754
        %v3757 = vadd.f32 %v3621, %v3756
        %s3758 = sld [smem:[#allocation3 + $0x200]]
        %v3759 = vstv %s3758
        %v3760 = vmul.f32 %v3759, %v3150
        %v3761 = vmul.f32 %v3759, %v3151
        %v3762 = vmul.f32 %v3759, %v3152
        %v3763 = vmul.f32 %v3759, %v3153
        %v3764 = vmul.f32 %v3759, %v3154
        %v3765 = vmul.f32 %v3759, %v3155
        %v3766 = vmul.f32 %v3759, %v3156
        %v3767 = vmul.f32 %v3759, %v3157
        %s3768 = sld [smem:[#allocation3 + $0x201]]
        %v3769 = vstv %s3768
        %v3770 = vmul.f32 %v3769, %v3164
        %v3771 = vmul.f32 %v3769, %v3171
        %v3772 = vmul.f32 %v3769, %v3178
        %v3773 = vmul.f32 %v3769, %v3185
        %v3774 = vmul.f32 %v3769, %v3192
        %v3775 = vmul.f32 %v3769, %v3199
        %v3776 = vmul.f32 %v3769, %v3206
        %v3777 = vmul.f32 %v3769, %v3213
        %v3778 = vadd.f32 %v3760, %v3770
        %v3779 = vadd.f32 %v3761, %v3771
        %v3780 = vadd.f32 %v3762, %v3772
        %v3781 = vadd.f32 %v3763, %v3773
        %v3782 = vadd.f32 %v3764, %v3774
        %v3783 = vadd.f32 %v3765, %v3775
        %v3784 = vadd.f32 %v3766, %v3776
        %v3785 = vadd.f32 %v3767, %v3777
        %v3794 = vcombine.low %v3778, %v3779
        %v3795 = vcombine.low %v3780, %v3781
        %v3796 = vcombine.low %v3782, %v3783
        %v3797 = vcombine.low %v3784, %v3785
        %v3799 = vunpack.c.l.s4 1966171168
        %v3800 = vunpack.c.0.s8 %v3799
        %v3801 = vlaneseq
        %v3802 = vshrl.u32 %v3801, 7
        %v3803 = vsub.s32 %v3800, %v3802
        %v3804 = vrot.slane %v3794, %v3803
        %v3806 = vunpack.c.l.s4 1966171168
        %v3807 = vunpack.c.0.s8 %v3806
        %v3808 = vlaneseq
        %v3809 = vshrl.u32 %v3808, 7
        %v3810 = vsub.s32 %v3807, %v3809
        %v3811 = vrot.slane %v3795, %v3810
        %v3813 = vunpack.c.l.s4 1966171168
        %v3814 = vunpack.c.0.s8 %v3813
        %v3815 = vlaneseq
        %v3816 = vshrl.u32 %v3815, 7
        %v3817 = vsub.s32 %v3814, %v3816
        %v3818 = vrot.slane %v3796, %v3817
        %v3820 = vunpack.c.l.s4 1966171168
        %v3821 = vunpack.c.0.s8 %v3820
        %v3822 = vlaneseq
        %v3823 = vshrl.u32 %v3822, 7
        %v3824 = vsub.s32 %v3821, %v3823
        %v3825 = vrot.slane %v3797, %v3824
        %v3826 = vcombine.low %v3804, %v3811
        %v3827 = vcombine.low %v3818, %v3825
        %v3829 = vunpack.c.l.s4 1966171168
        %v3830 = vunpack.c.0.s8 %v3829
        %v3831 = vlaneseq
        %v3832 = vshrl.u32 %v3831, 7
        %v3833 = vsub.s32 %v3830, %v3832
        %v3834 = vrot.slane %v3826, %v3833
        %v3836 = vunpack.c.l.s4 1966171168
        %v3837 = vunpack.c.0.s8 %v3836
        %v3838 = vlaneseq
        %v3839 = vshrl.u32 %v3838, 7
        %v3840 = vsub.s32 %v3837, %v3839
        %v3841 = vrot.slane %v3827, %v3840
        %v3842 = vcombine.low %v3834, %v3841
        %v3844 = vmul.f32 %v530, %v3842
        %v3845 = vadd.f32 %v3757, %v3844
        %3846 = vrot.lane.b32.xlu0 %v3150, 127
        %v3847 = vpop.permute.xlu0 %3846
        %3848 = vrot.lane.b32.xlu0 %v3151, 127
        %v3849 = vpop.permute.xlu0 %3848
        %3850 = vrot.lane.b32.xlu0 %v3152, 127
        %v3851 = vpop.permute.xlu0 %3850
        %3852 = vrot.lane.b32.xlu0 %v3153, 127
        %v3853 = vpop.permute.xlu0 %3852
        %3854 = vrot.lane.b32.xlu0 %v3154, 127
        %v3855 = vpop.permute.xlu0 %3854
        %3856 = vrot.lane.b32.xlu0 %v3155, 127
        %v3857 = vpop.permute.xlu0 %3856
        %3858 = vrot.lane.b32.xlu0 %v3156, 127
        %v3859 = vpop.permute.xlu0 %3858
        %3860 = vrot.lane.b32.xlu0 %v3157, 127
        %v3861 = vpop.permute.xlu0 %3860
        %v3862 = vsel %vm1455, %v3859, %v3861
        %v3863 = vsel %vm1455, %v3857, %v3859
        %v3864 = vsel %vm1455, %v3855, %v3857
        %v3865 = vsel %vm1455, %v3853, %v3855
        %v3866 = vsel %vm1455, %v3851, %v3853
        %v3867 = vsel %vm1455, %v3849, %v3851
        %v3868 = vsel %vm1455, %v3847, %v3849
        %v3869 = vsel %vm1455, %v3861, %v3847
        %3870 = vrot.lane.b32.xlu0 %v3164, 127
        %v3871 = vpop.permute.xlu0 %3870
        %3872 = vrot.lane.b32.xlu0 %v3171, 127
        %v3873 = vpop.permute.xlu0 %3872
        %3874 = vrot.lane.b32.xlu0 %v3178, 127
        %v3875 = vpop.permute.xlu0 %3874
        %3876 = vrot.lane.b32.xlu0 %v3185, 127
        %v3877 = vpop.permute.xlu0 %3876
        %3878 = vrot.lane.b32.xlu0 %v3192, 127
        %v3879 = vpop.permute.xlu0 %3878
        %3880 = vrot.lane.b32.xlu0 %v3199, 127
        %v3881 = vpop.permute.xlu0 %3880
        %3882 = vrot.lane.b32.xlu0 %v3206, 127
        %v3883 = vpop.permute.xlu0 %3882
        %3884 = vrot.lane.b32.xlu0 %v3213, 127
        %v3885 = vpop.permute.xlu0 %3884
        %v3886 = vsel %vm1455, %v3883, %v3885
        %v3887 = vsel %vm1455, %v3881, %v3883
        %v3888 = vsel %vm1455, %v3879, %v3881
        %v3889 = vsel %vm1455, %v3877, %v3879
        %v3890 = vsel %vm1455, %v3875, %v3877
        %v3891 = vsel %vm1455, %v3873, %v3875
        %v3892 = vsel %vm1455, %v3871, %v3873
        %v3893 = vsel %vm1455, %v3885, %v3871
        %s3894 = sld [smem:[#allocation3 + $0x280]]
        %v3895 = vstv %s3894
        %v3896 = vmul.f32 %v3895, %v3868
        %v3897 = vmul.f32 %v3895, %v3867
        %v3898 = vmul.f32 %v3895, %v3866
        %v3899 = vmul.f32 %v3895, %v3865
        %v3900 = vmul.f32 %v3895, %v3864
        %v3901 = vmul.f32 %v3895, %v3863
        %v3902 = vmul.f32 %v3895, %v3862
        %v3903 = vmul.f32 %v3895, %v3869
        %s3904 = sld [smem:[#allocation3 + $0x281]]
        %v3905 = vstv %s3904
        %v3906 = vmul.f32 %v3905, %v3892
        %v3907 = vmul.f32 %v3905, %v3891
        %v3908 = vmul.f32 %v3905, %v3890
        %v3909 = vmul.f32 %v3905, %v3889
        %v3910 = vmul.f32 %v3905, %v3888
        %v3911 = vmul.f32 %v3905, %v3887
        %v3912 = vmul.f32 %v3905, %v3886
        %v3913 = vmul.f32 %v3905, %v3893
        %v3914 = vadd.f32 %v3896, %v3906
        %v3915 = vadd.f32 %v3897, %v3907
        %v3916 = vadd.f32 %v3898, %v3908
        %v3917 = vadd.f32 %v3899, %v3909
        %v3918 = vadd.f32 %v3900, %v3910
        %v3919 = vadd.f32 %v3901, %v3911
        %v3920 = vadd.f32 %v3902, %v3912
        %v3921 = vadd.f32 %v3903, %v3913
        %v3930 = vcombine.low %v3914, %v3915
        %v3931 = vcombine.low %v3916, %v3917
        %v3932 = vcombine.low %v3918, %v3919
        %v3933 = vcombine.low %v3920, %v3921
        %v3935 = vunpack.c.l.s4 1966171168
        %v3936 = vunpack.c.0.s8 %v3935
        %v3937 = vlaneseq
        %v3938 = vshrl.u32 %v3937, 7
        %v3939 = vsub.s32 %v3936, %v3938
        %v3940 = vrot.slane %v3930, %v3939
        %v3942 = vunpack.c.l.s4 1966171168
        %v3943 = vunpack.c.0.s8 %v3942
        %v3944 = vlaneseq
        %v3945 = vshrl.u32 %v3944, 7
        %v3946 = vsub.s32 %v3943, %v3945
        %v3947 = vrot.slane %v3931, %v3946
        %v3949 = vunpack.c.l.s4 1966171168
        %v3950 = vunpack.c.0.s8 %v3949
        %v3951 = vlaneseq
        %v3952 = vshrl.u32 %v3951, 7
        %v3953 = vsub.s32 %v3950, %v3952
        %v3954 = vrot.slane %v3932, %v3953
        %v3956 = vunpack.c.l.s4 1966171168
        %v3957 = vunpack.c.0.s8 %v3956
        %v3958 = vlaneseq
        %v3959 = vshrl.u32 %v3958, 7
        %v3960 = vsub.s32 %v3957, %v3959
        %v3961 = vrot.slane %v3933, %v3960
        %v3962 = vcombine.low %v3940, %v3947
        %v3963 = vcombine.low %v3954, %v3961
        %v3965 = vunpack.c.l.s4 1966171168
        %v3966 = vunpack.c.0.s8 %v3965
        %v3967 = vlaneseq
        %v3968 = vshrl.u32 %v3967, 7
        %v3969 = vsub.s32 %v3966, %v3968
        %v3970 = vrot.slane %v3962, %v3969
        %v3972 = vunpack.c.l.s4 1966171168
        %v3973 = vunpack.c.0.s8 %v3972
        %v3974 = vlaneseq
        %v3975 = vshrl.u32 %v3974, 7
        %v3976 = vsub.s32 %v3973, %v3975
        %v3977 = vrot.slane %v3963, %v3976
        %v3978 = vcombine.low %v3970, %v3977
        %v3980 = vmul.f32 %v534, %v3978
        %v3981 = vadd.f32 %v3845, %v3980
        %3982 = vrot.lane.b32.xlu0 %v3150, 97
        %v3983 = vpop.permute.xlu0 %3982
        %3984 = vrot.lane.b32.xlu0 %v3151, 97
        %v3985 = vpop.permute.xlu0 %3984
        %3986 = vrot.lane.b32.xlu0 %v3152, 97
        %v3987 = vpop.permute.xlu0 %3986
        %3988 = vrot.lane.b32.xlu0 %v3153, 97
        %v3989 = vpop.permute.xlu0 %3988
        %3990 = vrot.lane.b32.xlu0 %v3154, 97
        %v3991 = vpop.permute.xlu0 %3990
        %3992 = vrot.lane.b32.xlu0 %v3155, 97
        %v3993 = vpop.permute.xlu0 %3992
        %3994 = vrot.lane.b32.xlu0 %v3156, 97
        %v3995 = vpop.permute.xlu0 %3994
        %3996 = vrot.lane.b32.xlu0 %v3157, 97
        %v3997 = vpop.permute.xlu0 %3996
        %v3998 = vsel %vm1529, %v3995, %v3997
        %v3999 = vsel %vm1529, %v3993, %v3995
        %v4000 = vsel %vm1529, %v3991, %v3993
        %v4001 = vsel %vm1529, %v3989, %v3991
        %v4002 = vsel %vm1529, %v3987, %v3989
        %v4003 = vsel %vm1529, %v3985, %v3987
        %v4004 = vsel %vm1529, %v3983, %v3985
        %v4005 = vsel %vm1529, %v3997, %v3983
        %4006 = vrot.lane.b32.xlu0 %v3164, 97
        %v4007 = vpop.permute.xlu0 %4006
        %4008 = vrot.lane.b32.xlu0 %v3171, 97
        %v4009 = vpop.permute.xlu0 %4008
        %4010 = vrot.lane.b32.xlu0 %v3178, 97
        %v4011 = vpop.permute.xlu0 %4010
        %4012 = vrot.lane.b32.xlu0 %v3185, 97
        %v4013 = vpop.permute.xlu0 %4012
        %4014 = vrot.lane.b32.xlu0 %v3192, 97
        %v4015 = vpop.permute.xlu0 %4014
        %4016 = vrot.lane.b32.xlu0 %v3199, 97
        %v4017 = vpop.permute.xlu0 %4016
        %4018 = vrot.lane.b32.xlu0 %v3206, 97
        %v4019 = vpop.permute.xlu0 %4018
        %4020 = vrot.lane.b32.xlu0 %v3213, 97
        %v4021 = vpop.permute.xlu0 %4020
        %v4022 = vsel %vm1529, %v4019, %v4021
        %v4023 = vsel %vm1529, %v4017, %v4019
        %v4024 = vsel %vm1529, %v4015, %v4017
        %v4025 = vsel %vm1529, %v4013, %v4015
        %v4026 = vsel %vm1529, %v4011, %v4013
        %v4027 = vsel %vm1529, %v4009, %v4011
        %v4028 = vsel %vm1529, %v4007, %v4009
        %v4029 = vsel %vm1529, %v4021, %v4007
        %s4030 = sld [smem:[#allocation3 + $0x300]]
        %v4031 = vstv %s4030
        %v4032 = vmul.f32 %v4031, %v4004
        %v4033 = vmul.f32 %v4031, %v4003
        %v4034 = vmul.f32 %v4031, %v4002
        %v4035 = vmul.f32 %v4031, %v4001
        %v4036 = vmul.f32 %v4031, %v4000
        %v4037 = vmul.f32 %v4031, %v3999
        %v4038 = vmul.f32 %v4031, %v3998
        %v4039 = vmul.f32 %v4031, %v4005
        %s4040 = sld [smem:[#allocation3 + $0x301]]
        %v4041 = vstv %s4040
        %v4042 = vmul.f32 %v4041, %v4028
        %v4043 = vmul.f32 %v4041, %v4027
        %v4044 = vmul.f32 %v4041, %v4026
        %v4045 = vmul.f32 %v4041, %v4025
        %v4046 = vmul.f32 %v4041, %v4024
        %v4047 = vmul.f32 %v4041, %v4023
        %v4048 = vmul.f32 %v4041, %v4022
        %v4049 = vmul.f32 %v4041, %v4029
        %v4050 = vadd.f32 %v4032, %v4042
        %v4051 = vadd.f32 %v4033, %v4043
        %v4052 = vadd.f32 %v4034, %v4044
        %v4053 = vadd.f32 %v4035, %v4045
        %v4054 = vadd.f32 %v4036, %v4046
        %v4055 = vadd.f32 %v4037, %v4047
        %v4056 = vadd.f32 %v4038, %v4048
        %v4057 = vadd.f32 %v4039, %v4049
        %v4066 = vcombine.low %v4050, %v4051
        %v4067 = vcombine.low %v4052, %v4053
        %v4068 = vcombine.low %v4054, %v4055
        %v4069 = vcombine.low %v4056, %v4057
        %v4071 = vunpack.c.l.s4 1966171168
        %v4072 = vunpack.c.0.s8 %v4071
        %v4073 = vlaneseq
        %v4074 = vshrl.u32 %v4073, 7
        %v4075 = vsub.s32 %v4072, %v4074
        %v4076 = vrot.slane %v4066, %v4075
        %v4078 = vunpack.c.l.s4 1966171168
        %v4079 = vunpack.c.0.s8 %v4078
        %v4080 = vlaneseq
        %v4081 = vshrl.u32 %v4080, 7
        %v4082 = vsub.s32 %v4079, %v4081
        %v4083 = vrot.slane %v4067, %v4082
        %v4085 = vunpack.c.l.s4 1966171168
        %v4086 = vunpack.c.0.s8 %v4085
        %v4087 = vlaneseq
        %v4088 = vshrl.u32 %v4087, 7
        %v4089 = vsub.s32 %v4086, %v4088
        %v4090 = vrot.slane %v4068, %v4089
        %v4092 = vunpack.c.l.s4 1966171168
        %v4093 = vunpack.c.0.s8 %v4092
        %v4094 = vlaneseq
        %v4095 = vshrl.u32 %v4094, 7
        %v4096 = vsub.s32 %v4093, %v4095
        %v4097 = vrot.slane %v4069, %v4096
        %v4098 = vcombine.low %v4076, %v4083
        %v4099 = vcombine.low %v4090, %v4097
        %v4101 = vunpack.c.l.s4 1966171168
        %v4102 = vunpack.c.0.s8 %v4101
        %v4103 = vlaneseq
        %v4104 = vshrl.u32 %v4103, 7
        %v4105 = vsub.s32 %v4102, %v4104
        %v4106 = vrot.slane %v4098, %v4105
        %v4108 = vunpack.c.l.s4 1966171168
        %v4109 = vunpack.c.0.s8 %v4108
        %v4110 = vlaneseq
        %v4111 = vshrl.u32 %v4110, 7
        %v4112 = vsub.s32 %v4109, %v4111
        %v4113 = vrot.slane %v4099, %v4112
        %v4114 = vcombine.low %v4106, %v4113
        %v4116 = vmul.f32 %v538, %v4114
        %v4117 = vadd.f32 %v3981, %v4116
        %4118 = vrot.lane.b32.xlu0 %v3150, 96
        %v4119 = vpop.permute.xlu0 %4118
        %4120 = vrot.lane.b32.xlu0 %v3151, 96
        %v4121 = vpop.permute.xlu0 %4120
        %4122 = vrot.lane.b32.xlu0 %v3152, 96
        %v4123 = vpop.permute.xlu0 %4122
        %4124 = vrot.lane.b32.xlu0 %v3153, 96
        %v4125 = vpop.permute.xlu0 %4124
        %4126 = vrot.lane.b32.xlu0 %v3154, 96
        %v4127 = vpop.permute.xlu0 %4126
        %4128 = vrot.lane.b32.xlu0 %v3155, 96
        %v4129 = vpop.permute.xlu0 %4128
        %4130 = vrot.lane.b32.xlu0 %v3156, 96
        %v4131 = vpop.permute.xlu0 %4130
        %4132 = vrot.lane.b32.xlu0 %v3157, 96
        %v4133 = vpop.permute.xlu0 %4132
        %v4134 = vsel %vm1603, %v4131, %v4133
        %v4135 = vsel %vm1603, %v4129, %v4131
        %v4136 = vsel %vm1603, %v4127, %v4129
        %v4137 = vsel %vm1603, %v4125, %v4127
        %v4138 = vsel %vm1603, %v4123, %v4125
        %v4139 = vsel %vm1603, %v4121, %v4123
        %v4140 = vsel %vm1603, %v4119, %v4121
        %v4141 = vsel %vm1603, %v4133, %v4119
        %4142 = vrot.lane.b32.xlu0 %v3164, 96
        %v4143 = vpop.permute.xlu0 %4142
        %4144 = vrot.lane.b32.xlu0 %v3171, 96
        %v4145 = vpop.permute.xlu0 %4144
        %4146 = vrot.lane.b32.xlu0 %v3178, 96
        %v4147 = vpop.permute.xlu0 %4146
        %4148 = vrot.lane.b32.xlu0 %v3185, 96
        %v4149 = vpop.permute.xlu0 %4148
        %4150 = vrot.lane.b32.xlu0 %v3192, 96
        %v4151 = vpop.permute.xlu0 %4150
        %4152 = vrot.lane.b32.xlu0 %v3199, 96
        %v4153 = vpop.permute.xlu0 %4152
        %4154 = vrot.lane.b32.xlu0 %v3206, 96
        %v4155 = vpop.permute.xlu0 %4154
        %4156 = vrot.lane.b32.xlu0 %v3213, 96
        %v4157 = vpop.permute.xlu0 %4156
        %v4158 = vsel %vm1603, %v4155, %v4157
        %v4159 = vsel %vm1603, %v4153, %v4155
        %v4160 = vsel %vm1603, %v4151, %v4153
        %v4161 = vsel %vm1603, %v4149, %v4151
        %v4162 = vsel %vm1603, %v4147, %v4149
        %v4163 = vsel %vm1603, %v4145, %v4147
        %v4164 = vsel %vm1603, %v4143, %v4145
        %v4165 = vsel %vm1603, %v4157, %v4143
        %s4166 = sld [smem:[#allocation3 + $0x380]]
        %v4167 = vstv %s4166
        %v4168 = vmul.f32 %v4167, %v4140
        %v4169 = vmul.f32 %v4167, %v4139
        %v4170 = vmul.f32 %v4167, %v4138
        %v4171 = vmul.f32 %v4167, %v4137
        %v4172 = vmul.f32 %v4167, %v4136
        %v4173 = vmul.f32 %v4167, %v4135
        %v4174 = vmul.f32 %v4167, %v4134
        %v4175 = vmul.f32 %v4167, %v4141
        %s4176 = sld [smem:[#allocation3 + $0x381]]
        %v4177 = vstv %s4176
        %v4178 = vmul.f32 %v4177, %v4164
        %v4179 = vmul.f32 %v4177, %v4163
        %v4180 = vmul.f32 %v4177, %v4162
        %v4181 = vmul.f32 %v4177, %v4161
        %v4182 = vmul.f32 %v4177, %v4160
        %v4183 = vmul.f32 %v4177, %v4159
        %v4184 = vmul.f32 %v4177, %v4158
        %v4185 = vmul.f32 %v4177, %v4165
        %v4186 = vadd.f32 %v4168, %v4178
        %v4187 = vadd.f32 %v4169, %v4179
        %v4188 = vadd.f32 %v4170, %v4180
        %v4189 = vadd.f32 %v4171, %v4181
        %v4190 = vadd.f32 %v4172, %v4182
        %v4191 = vadd.f32 %v4173, %v4183
        %v4192 = vadd.f32 %v4174, %v4184
        %v4193 = vadd.f32 %v4175, %v4185
        %v4202 = vcombine.low %v4186, %v4187
        %v4203 = vcombine.low %v4188, %v4189
        %v4204 = vcombine.low %v4190, %v4191
        %v4205 = vcombine.low %v4192, %v4193
        %v4207 = vunpack.c.l.s4 1966171168
        %v4208 = vunpack.c.0.s8 %v4207
        %v4209 = vlaneseq
        %v4210 = vshrl.u32 %v4209, 7
        %v4211 = vsub.s32 %v4208, %v4210
        %v4212 = vrot.slane %v4202, %v4211
        %v4214 = vunpack.c.l.s4 1966171168
        %v4215 = vunpack.c.0.s8 %v4214
        %v4216 = vlaneseq
        %v4217 = vshrl.u32 %v4216, 7
        %v4218 = vsub.s32 %v4215, %v4217
        %v4219 = vrot.slane %v4203, %v4218
        %v4221 = vunpack.c.l.s4 1966171168
        %v4222 = vunpack.c.0.s8 %v4221
        %v4223 = vlaneseq
        %v4224 = vshrl.u32 %v4223, 7
        %v4225 = vsub.s32 %v4222, %v4224
        %v4226 = vrot.slane %v4204, %v4225
        %v4228 = vunpack.c.l.s4 1966171168
        %v4229 = vunpack.c.0.s8 %v4228
        %v4230 = vlaneseq
        %v4231 = vshrl.u32 %v4230, 7
        %v4232 = vsub.s32 %v4229, %v4231
        %v4233 = vrot.slane %v4205, %v4232
        %v4234 = vcombine.low %v4212, %v4219
        %v4235 = vcombine.low %v4226, %v4233
        %v4237 = vunpack.c.l.s4 1966171168
        %v4238 = vunpack.c.0.s8 %v4237
        %v4239 = vlaneseq
        %v4240 = vshrl.u32 %v4239, 7
        %v4241 = vsub.s32 %v4238, %v4240
        %v4242 = vrot.slane %v4234, %v4241
        %v4244 = vunpack.c.l.s4 1966171168
        %v4245 = vunpack.c.0.s8 %v4244
        %v4246 = vlaneseq
        %v4247 = vshrl.u32 %v4246, 7
        %v4248 = vsub.s32 %v4245, %v4247
        %v4249 = vrot.slane %v4235, %v4248
        %v4250 = vcombine.low %v4242, %v4249
        %v4252 = vmul.f32 %v542, %v4250
        %v4253 = vadd.f32 %v4117, %v4252
        %4254 = vrot.lane.b32.xlu0 %v3150, 95
        %v4255 = vpop.permute.xlu0 %4254
        %4256 = vrot.lane.b32.xlu0 %v3151, 95
        %v4257 = vpop.permute.xlu0 %4256
        %4258 = vrot.lane.b32.xlu0 %v3152, 95
        %v4259 = vpop.permute.xlu0 %4258
        %4260 = vrot.lane.b32.xlu0 %v3153, 95
        %v4261 = vpop.permute.xlu0 %4260
        %4262 = vrot.lane.b32.xlu0 %v3154, 95
        %v4263 = vpop.permute.xlu0 %4262
        %4264 = vrot.lane.b32.xlu0 %v3155, 95
        %v4265 = vpop.permute.xlu0 %4264
        %4266 = vrot.lane.b32.xlu0 %v3156, 95
        %v4267 = vpop.permute.xlu0 %4266
        %4268 = vrot.lane.b32.xlu0 %v3157, 95
        %v4269 = vpop.permute.xlu0 %4268
        %v4270 = vsel %vm1677, %v4267, %v4269
        %v4271 = vsel %vm1677, %v4265, %v4267
        %v4272 = vsel %vm1677, %v4263, %v4265
        %v4273 = vsel %vm1677, %v4261, %v4263
        %v4274 = vsel %vm1677, %v4259, %v4261
        %v4275 = vsel %vm1677, %v4257, %v4259
        %v4276 = vsel %vm1677, %v4255, %v4257
        %v4277 = vsel %vm1677, %v4269, %v4255
        %4278 = vrot.lane.b32.xlu0 %v3164, 95
        %v4279 = vpop.permute.xlu0 %4278
        %4280 = vrot.lane.b32.xlu0 %v3171, 95
        %v4281 = vpop.permute.xlu0 %4280
        %4282 = vrot.lane.b32.xlu0 %v3178, 95
        %v4283 = vpop.permute.xlu0 %4282
        %4284 = vrot.lane.b32.xlu0 %v3185, 95
        %v4285 = vpop.permute.xlu0 %4284
        %4286 = vrot.lane.b32.xlu0 %v3192, 95
        %v4287 = vpop.permute.xlu0 %4286
        %4288 = vrot.lane.b32.xlu0 %v3199, 95
        %v4289 = vpop.permute.xlu0 %4288
        %4290 = vrot.lane.b32.xlu0 %v3206, 95
        %v4291 = vpop.permute.xlu0 %4290
        %4292 = vrot.lane.b32.xlu0 %v3213, 95
        %v4293 = vpop.permute.xlu0 %4292
        %v4294 = vsel %vm1677, %v4291, %v4293
        %v4295 = vsel %vm1677, %v4289, %v4291
        %v4296 = vsel %vm1677, %v4287, %v4289
        %v4297 = vsel %vm1677, %v4285, %v4287
        %v4298 = vsel %vm1677, %v4283, %v4285
        %v4299 = vsel %vm1677, %v4281, %v4283
        %v4300 = vsel %vm1677, %v4279, %v4281
        %v4301 = vsel %vm1677, %v4293, %v4279
        %s4302 = sld [smem:[#allocation3 + $0x400]]
        %v4303 = vstv %s4302
        %v4304 = vmul.f32 %v4303, %v4276
        %v4305 = vmul.f32 %v4303, %v4275
        %v4306 = vmul.f32 %v4303, %v4274
        %v4307 = vmul.f32 %v4303, %v4273
        %v4308 = vmul.f32 %v4303, %v4272
        %v4309 = vmul.f32 %v4303, %v4271
        %v4310 = vmul.f32 %v4303, %v4270
        %v4311 = vmul.f32 %v4303, %v4277
        %s4312 = sld [smem:[#allocation3 + $0x401]]
        %v4313 = vstv %s4312
        %v4314 = vmul.f32 %v4313, %v4300
        %v4315 = vmul.f32 %v4313, %v4299
        %v4316 = vmul.f32 %v4313, %v4298
        %v4317 = vmul.f32 %v4313, %v4297
        %v4318 = vmul.f32 %v4313, %v4296
        %v4319 = vmul.f32 %v4313, %v4295
        %v4320 = vmul.f32 %v4313, %v4294
        %v4321 = vmul.f32 %v4313, %v4301
        %v4322 = vadd.f32 %v4304, %v4314
        %v4323 = vadd.f32 %v4305, %v4315
        %v4324 = vadd.f32 %v4306, %v4316
        %v4325 = vadd.f32 %v4307, %v4317
        %v4326 = vadd.f32 %v4308, %v4318
        %v4327 = vadd.f32 %v4309, %v4319
        %v4328 = vadd.f32 %v4310, %v4320
        %v4329 = vadd.f32 %v4311, %v4321
        %v4338 = vcombine.low %v4322, %v4323
        %v4339 = vcombine.low %v4324, %v4325
        %v4340 = vcombine.low %v4326, %v4327
        %v4341 = vcombine.low %v4328, %v4329
        %v4343 = vunpack.c.l.s4 1966171168
        %v4344 = vunpack.c.0.s8 %v4343
        %v4345 = vlaneseq
        %v4346 = vshrl.u32 %v4345, 7
        %v4347 = vsub.s32 %v4344, %v4346
        %v4348 = vrot.slane %v4338, %v4347
        %v4350 = vunpack.c.l.s4 1966171168
        %v4351 = vunpack.c.0.s8 %v4350
        %v4352 = vlaneseq
        %v4353 = vshrl.u32 %v4352, 7
        %v4354 = vsub.s32 %v4351, %v4353
        %v4355 = vrot.slane %v4339, %v4354
        %v4357 = vunpack.c.l.s4 1966171168
        %v4358 = vunpack.c.0.s8 %v4357
        %v4359 = vlaneseq
        %v4360 = vshrl.u32 %v4359, 7
        %v4361 = vsub.s32 %v4358, %v4360
        %v4362 = vrot.slane %v4340, %v4361
        %v4364 = vunpack.c.l.s4 1966171168
        %v4365 = vunpack.c.0.s8 %v4364
        %v4366 = vlaneseq
        %v4367 = vshrl.u32 %v4366, 7
        %v4368 = vsub.s32 %v4365, %v4367
        %v4369 = vrot.slane %v4341, %v4368
        %v4370 = vcombine.low %v4348, %v4355
        %v4371 = vcombine.low %v4362, %v4369
        %v4373 = vunpack.c.l.s4 1966171168
        %v4374 = vunpack.c.0.s8 %v4373
        %v4375 = vlaneseq
        %v4376 = vshrl.u32 %v4375, 7
        %v4377 = vsub.s32 %v4374, %v4376
        %v4378 = vrot.slane %v4370, %v4377
        %v4380 = vunpack.c.l.s4 1966171168
        %v4381 = vunpack.c.0.s8 %v4380
        %v4382 = vlaneseq
        %v4383 = vshrl.u32 %v4382, 7
        %v4384 = vsub.s32 %v4381, %v4383
        %v4385 = vrot.slane %v4371, %v4384
        %v4386 = vcombine.low %v4378, %v4385
        %v4388 = vmul.f32 %v546, %v4386
        %v4389 = vadd.f32 %v4253, %v4388
        %s4390 = sld [smem:[#allocation2]]
        %v4391 = vstv %s4390
        %v4392 = vadd.f32 %v4389, %v4391
        %v4393 = vxor.u32 %v4392, 2147483648
        %v4394 = vmul.f32 %v4393, 1.442695
        %v4395 = vpow.pop %v4394
        %v4396 = vadd.f32 %v4395, 1.0
        %v4397 = vrcp.pop %v4396
        %v4398 = vmul.f32 1.0, %v4397
        %v4400 = vlaneseq
        %v4401 = vshrl.u32 %v4400, 7
        %v4402 = vsub.s32 0, %v4401
        %v4403 = vrot.slane %v4398, %v4402
        %v4404 = vlaneseq
        %v4405 = vshrl.u32 %v4404, 7
        %v4406 = vsub.s32 1, %v4405
        %v4407 = vrot.slane %v4398, %v4406
        %v4408 = vlaneseq
        %v4409 = vshrl.u32 %v4408, 7
        %v4410 = vsub.s32 2, %v4409
        %v4411 = vrot.slane %v4398, %v4410
        %v4412 = vlaneseq
        %v4413 = vshrl.u32 %v4412, 7
        %v4414 = vsub.s32 3, %v4413
        %v4415 = vrot.slane %v4398, %v4414
        %v4416 = vlaneseq
        %v4417 = vshrl.u32 %v4416, 7
        %v4418 = vsub.s32 4, %v4417
        %v4419 = vrot.slane %v4398, %v4418
        %v4420 = vlaneseq
        %v4421 = vshrl.u32 %v4420, 7
        %v4422 = vsub.s32 5, %v4421
        %v4423 = vrot.slane %v4398, %v4422
        %v4424 = vlaneseq
        %v4425 = vshrl.u32 %v4424, 7
        %v4426 = vsub.s32 6, %v4425
        %v4427 = vrot.slane %v4398, %v4426
        %v4428 = vlaneseq
        %v4429 = vshrl.u32 %v4428, 7
        %v4430 = vsub.s32 7, %v4429
        %v4431 = vrot.slane %v4398, %v4430
        %v4440 = vmul.f32 %v3077, %v4403
        %v4441 = vmul.f32 %v3078, %v4407
        %v4442 = vmul.f32 %v3079, %v4411
        %v4443 = vmul.f32 %v3080, %v4415
        %v4444 = vmul.f32 %v3081, %v4419
        %v4445 = vmul.f32 %v3082, %v4423
        %v4446 = vmul.f32 %v3083, %v4427
        %v4447 = vmul.f32 %v3084, %v4431
        %v4448 = vmul.f32 %v3085, %v4403
        %v4449 = vmul.f32 %v3086, %v4407
        %v4450 = vmul.f32 %v3087, %v4411
        %v4451 = vmul.f32 %v3088, %v4415
        %v4452 = vmul.f32 %v3089, %v4419
        %v4453 = vmul.f32 %v3090, %v4423
        %v4454 = vmul.f32 %v3091, %v4427
        %v4455 = vmul.f32 %v3092, %v4431
        %v4456 = vadd.f32 %v4440, %v2145
        %v4457 = vadd.f32 %v4441, %v2146
        %v4458 = vadd.f32 %v4442, %v2147
        %v4459 = vadd.f32 %v4443, %v2148
        %v4460 = vadd.f32 %v4444, %v2149
        %v4461 = vadd.f32 %v4445, %v2150
        %v4462 = vadd.f32 %v4446, %v2151
        %v4463 = vadd.f32 %v4447, %v2152
        %v4464 = vadd.f32 %v4448, %v2153
        %v4465 = vadd.f32 %v4449, %v2154
        %v4466 = vadd.f32 %v4450, %v2155
        %v4467 = vadd.f32 %v4451, %v2156
        %v4468 = vadd.f32 %v4452, %v2157
        %v4469 = vadd.f32 %v4453, %v2158
        %v4470 = vadd.f32 %v4454, %v2159
        %v4471 = vadd.f32 %v4455, %v2160
        %v4472 = vmax.f32 %v4456, 0.0
        %v4473 = vmax.f32 %v4457, 0.0
        %v4474 = vmax.f32 %v4458, 0.0
        %v4475 = vmax.f32 %v4459, 0.0
        %v4476 = vmax.f32 %v4460, 0.0
        %v4477 = vmax.f32 %v4461, 0.0
        %v4478 = vmax.f32 %v4462, 0.0
        %v4479 = vmax.f32 %v4463, 0.0
        %v4480 = vmax.f32 %v4464, 0.0
        %v4481 = vmax.f32 %v4465, 0.0
        %v4482 = vmax.f32 %v4466, 0.0
        %v4483 = vmax.f32 %v4467, 0.0
        %v4484 = vmax.f32 %v4468, 0.0
        %v4485 = vmax.f32 %v4469, 0.0
        %v4486 = vmax.f32 %v4470, 0.0
        %v4487 = vmax.f32 %v4471, 0.0
        %4488 = vst [vmem:[%s511] sm:$0xff] %v4472
        %4489 = vst [vmem:[%s511 + $0x8] sm:$0xff] %v4473
        %4490 = vst [vmem:[%s511 + $0x10] sm:$0xff] %v4474
        %4491 = vst [vmem:[%s511 + $0x18] sm:$0xff] %v4475
        %4492 = vst [vmem:[%s511 + $0x20] sm:$0xff] %v4476
        %4493 = vst [vmem:[%s511 + $0x28] sm:$0xff] %v4477
        %4494 = vst [vmem:[%s511 + $0x30] sm:$0xff] %v4478
        %4495 = vst [vmem:[%s511 + $0x38] sm:$0xff] %v4479
        %4496 = vst [vmem:[%s511 + $0x40] sm:$0xff] %v4480
        %4497 = vst [vmem:[%s511 + $0x48] sm:$0xff] %v4481
        %4498 = vst [vmem:[%s511 + $0x50] sm:$0xff] %v4482
        %4499 = vst [vmem:[%s511 + $0x58] sm:$0xff] %v4483
        %4500 = vst [vmem:[%s511 + $0x60] sm:$0xff] %v4484
        %4501 = vst [vmem:[%s511 + $0x68] sm:$0xff] %v4485
        %4502 = vst [vmem:[%s511 + $0x70] sm:$0xff] %v4486
        %4503 = vst [vmem:[%s511 + $0x78] sm:$0xff] %v4487
        %p4504 = scmp.lt.s32.totalorder %s28, 1
        %s4505 = scalar_select %p4504, %s28, 1
        %s4506 = smul.addr %s4505, 16
        %s4507 = smul.addr %s4506, 8
        %s4508 = scalar_lea.vmem %s15, %s4507
        // Predicated region
        $region85: #{decoder_forward.1} parent=79 // pred_check
          %p4509 = pneg %p366
        $region86: #{decoder_forward.1} parent=79 // pred_check_branch
          %4511 = sbr.rel (%p4509) target = $region88
        $region87: #{decoder_forward.1} parent=79 // pred_region
          _
        $region88: #{decoder_forward.1} parent=79 // pred_fallthru
          _
      $region80: #{decoder_forward.1} parent=5 // pred_fallthru
        _
      %p4512 = scmp.le.s32.totalorder 2, %s23
      // Predicated region
      $region89: #{decoder_forward.1} parent=5 // pred_check
        %p4513 = pneg %p4512
      $region90: #{decoder_forward.1} parent=5 // pred_check_branch
        %4515 = sbr.rel (%p4513) target = $region92
      $region91: #{decoder_forward.1} parent=5 // pred_region
        %s4516 = ssub.s32 %s23, 2
        // Predicated region
        $region93: #{decoder_forward.1} parent=91 // pred_check
          %p4517 = pneg %p372
        $region94: #{decoder_forward.1} parent=91 // pred_check_branch
          %4519 = sbr.rel (%p4517) target = $region96
        $region95: #{decoder_forward.1} parent=91 // pred_region
          %p4520 = scmp.lt.s32.totalorder %s29, 1
          %s4521 = scalar_select %p4520, %s29, 1
          %s4522 = smul.addr %s4521, 16
          %s4523 = smul.addr %s4522, 8
          %s4524 = scalar_lea.vmem %s15, %s4523
        $region96: #{decoder_forward.1} parent=91 // pred_fallthru
          _
      $region92: #{decoder_forward.1} parent=5 // pred_fallthru
        _
    $region6: #{decoder_forward.1} parent=1 // loop_footer
      %s27 = sadd.s32 1, %s23
    $region7: #{decoder_forward.1} parent=1 // loop_footer_branch
      %22 = sbr.rel target = $region3
    $region8: #{decoder_forward.1} parent=1 // loop_exit
      _
    %4525 = vsyncpa [#allocation4], 1
    %s4526 = scalar_lea.sflag [#allocation4], 1
    %4527 = vsyncpa %s4526, 1

</llo_original>
